<compile_context>
chip_gen: v7x
topology: tpu7x:2x2x1
jax: 0.10.0
libtpu: 0.0.40
codegen_flags: <defaults>
</compile_context>

<pallas_src>
import functools
import math

import jax
import jax.numpy as jnp
from jax.experimental import pallas as pl
from jax.experimental.pallas import tpu as pltpu


# ------------------------------ tiling helpers ------------------------------

def _round_up(x, m):
    return ((x + m - 1) // m) * m


def _tile(dim, target, align):
    """Largest divisor of `dim` that is <= target and a multiple of `align`;
    falls back to the full dim (full-extent blocks are always legal)."""
    if dim <= target:
        return dim
    t = (target // align) * align
    while t >= align:
        if dim % t == 0:
            return t
        t -= align
    return dim


# ----------------------------- Pallas kernels ------------------------------
# 1) fused self-attention sublayer:
#    LN( x + Wo @ MHA( x @ Wqkv + bqkv ) + bo ), gridded over batch.

def _self_attn_block_kernel(x_ref, wqkv_ref, bqkv_ref, wo_ref, bo_ref,
                            g_ref, beta_ref, o_ref, *, num_heads, causal,
                            scale, eps):
    S, D = x_ref.shape[1], x_ref.shape[2]
    Dh = D // num_heads

    x = x_ref[0]                                           # (S, D) f32 residual
    x16 = x.astype(jnp.bfloat16)

    qkv = jnp.dot(x16, wqkv_ref[...],
                  preferred_element_type=jnp.float32) + bqkv_ref[...]
    q = qkv[:, :D] * scale                                 # fold 1/sqrt(Dh) into Q
    k = qkv[:, D:2 * D]
    v = qkv[:, 2 * D:]

    if causal:
        row = jax.lax.broadcasted_iota(jnp.int32, (S, S), 0)
        col = jax.lax.broadcasted_iota(jnp.int32, (S, S), 1)
        neg = jnp.where(col > row, -1e9, 0.0).astype(jnp.float32)

    heads = []
    for h in range(num_heads):
        lo = h * Dh
        qh = q[:, lo:lo + Dh].astype(jnp.bfloat16)
        kh = k[:, lo:lo + Dh].astype(jnp.bfloat16)
        vh = v[:, lo:lo + Dh].astype(jnp.bfloat16)
        # contract feature dims directly (no transpose materialized)
        s = jax.lax.dot_general(qh, kh, (((1,), (1,)), ((), ())),
                                preferred_element_type=jnp.float32)
        if causal:
            s = s + neg
        s = s - jnp.max(s, axis=-1, keepdims=True)
        p = jnp.exp(s)
        p = p * pl.reciprocal(jnp.sum(p, axis=-1, keepdims=True), approx=True)
        heads.append(jnp.dot(p.astype(jnp.bfloat16), vh,
                             preferred_element_type=jnp.float32))
    attn = jnp.concatenate(heads, axis=-1)                 # (S, D) f32

    proj = jnp.dot(attn.astype(jnp.bfloat16), wo_ref[...],
                   preferred_element_type=jnp.float32) + bo_ref[...]
    h2 = proj + x
    mean = jnp.mean(h2, axis=-1, keepdims=True)
    c = h2 - mean
    var = jnp.mean(c * c, axis=-1, keepdims=True)
    o_ref[0] = (c * jax.lax.rsqrt(var + eps) * g_ref[...]
                + beta_ref[...]).astype(o_ref.dtype)


def self_attn_block(x3d, p, ln_p, *, num_heads, causal, eps=1e-5):
    """x3d: (B, S, D) f32 residual stream -> (B, S, D) f32."""
    # TODO(synk): for long sequences switch the attention core to a flash-style
    # K-block loop with VMEM m/l/acc scratch; unnecessary at seqLen=8.
    # TODO(synk): for large dModel, K-tile the projections instead of keeping
    # Wqkv / Wo fully VMEM-resident per batch step.
    B, S, D = x3d.shape
    kern = functools.partial(_self_attn_block_kernel, num_heads=num_heads,
                             causal=causal,
                             scale=1.0 / math.sqrt(D // num_heads), eps=eps)
    return pl.pallas_call(
        kern,
        out_shape=jax.ShapeDtypeStruct((B, S, D), jnp.float32),
        grid=(B,),
        in_specs=[
            pl.BlockSpec((1, S, D), lambda b: (b, 0, 0)),
            pl.BlockSpec((D, 3 * D), lambda b: (0, 0)),
            pl.BlockSpec((1, 3 * D), lambda b: (0, 0)),
            pl.BlockSpec((D, D), lambda b: (0, 0)),
            pl.BlockSpec((1, D), lambda b: (0, 0)),
            pl.BlockSpec((1, D), lambda b: (0, 0)),
            pl.BlockSpec((1, D), lambda b: (0, 0)),
        ],
        out_specs=pl.BlockSpec((1, S, D), lambda b: (b, 0, 0)),
        compiler_params=pltpu.CompilerParams(dimension_semantics=("parallel",)),
    )(x3d, p["wqkv"], p["bqkv"].reshape(1, 3 * D), p["wo"],
      p["bo"].reshape(1, D), ln_p["g"].reshape(1, D), ln_p["b"].reshape(1, D))


# 2) fused cross-attention sublayer:
#    LN( y + Wo @ MHA( y@Wq + bq , mem@Wkv + bkv ) + bo ), gridded over batch.

def _cross_attn_block_kernel(y_ref, m_ref, wq_ref, bq_ref, wkv_ref, bkv_ref,
                             wo_ref, bo_ref, g_ref, beta_ref, o_ref, *,
                             num_heads, scale, eps):
    Sq, D = y_ref.shape[1], y_ref.shape[2]
    Dh = D // num_heads

    y = y_ref[0]                                           # (Sq, D) f32 residual
    m = m_ref[0]                                           # (Sk, D) f32 memory

    q = (jnp.dot(y.astype(jnp.bfloat16), wq_ref[...],
                 preferred_element_type=jnp.float32) + bq_ref[...]) * scale
    kv = jnp.dot(m.astype(jnp.bfloat16), wkv_ref[...],
                 preferred_element_type=jnp.float32) + bkv_ref[...]
    k = kv[:, :D]
    v = kv[:, D:]

    heads = []
    for h in range(num_heads):
        lo = h * Dh
        qh = q[:, lo:lo + Dh].astype(jnp.bfloat16)
        kh = k[:, lo:lo + Dh].astype(jnp.bfloat16)
        vh = v[:, lo:lo + Dh].astype(jnp.bfloat16)
        s = jax.lax.dot_general(qh, kh, (((1,), (1,)), ((), ())),
                                preferred_element_type=jnp.float32)
        s = s - jnp.max(s, axis=-1, keepdims=True)
        p = jnp.exp(s)
        p = p * pl.reciprocal(jnp.sum(p, axis=-1, keepdims=True), approx=True)
        heads.append(jnp.dot(p.astype(jnp.bfloat16), vh,
                             preferred_element_type=jnp.float32))
    attn = jnp.concatenate(heads, axis=-1)

    proj = jnp.dot(attn.astype(jnp.bfloat16), wo_ref[...],
                   preferred_element_type=jnp.float32) + bo_ref[...]
    h2 = proj + y
    mean = jnp.mean(h2, axis=-1, keepdims=True)
    c = h2 - mean
    var = jnp.mean(c * c, axis=-1, keepdims=True)
    o_ref[0] = (c * jax.lax.rsqrt(var + eps) * g_ref[...]
                + beta_ref[...]).astype(o_ref.dtype)


def cross_attn_block(y3d, mem3d, p, ln_p, *, num_heads, eps=1e-5):
    B, Sq, D = y3d.shape
    Sk = mem3d.shape[1]
    kern = functools.partial(_cross_attn_block_kernel, num_heads=num_heads,
                             scale=1.0 / math.sqrt(D // num_heads), eps=eps)
    return pl.pallas_call(
        kern,
        out_shape=jax.ShapeDtypeStruct((B, Sq, D), jnp.float32),
        grid=(B,),
        in_specs=[
            pl.BlockSpec((1, Sq, D), lambda b: (b, 0, 0)),
            pl.BlockSpec((1, Sk, D), lambda b: (b, 0, 0)),
            pl.BlockSpec((D, D), lambda b: (0, 0)),
            pl.BlockSpec((1, D), lambda b: (0, 0)),
            pl.BlockSpec((D, 2 * D), lambda b: (0, 0)),
            pl.BlockSpec((1, 2 * D), lambda b: (0, 0)),
            pl.BlockSpec((D, D), lambda b: (0, 0)),
            pl.BlockSpec((1, D), lambda b: (0, 0)),
            pl.BlockSpec((1, D), lambda b: (0, 0)),
            pl.BlockSpec((1, D), lambda b: (0, 0)),
        ],
        out_specs=pl.BlockSpec((1, Sq, D), lambda b: (b, 0, 0)),
        compiler_params=pltpu.CompilerParams(dimension_semantics=("parallel",)),
    )(y3d, mem3d, p["wq"], p["bq"].reshape(1, D), p["wkv"],
      p["bkv"].reshape(1, 2 * D), p["wo"], p["bo"].reshape(1, D),
      ln_p["g"].reshape(1, D), ln_p["b"].reshape(1, D))


# 3) fused FFN sublayer: LN(x + (relu(x@w1 + b1) @ w2 + b2)), row-tiled.

def _ffn_add_ln_kernel(x_ref, w1_ref, b1_ref, w2_ref, b2_ref, g_ref, beta_ref,
                       o_ref, *, eps):
    x = x_ref[...]
    h = jnp.dot(x.astype(jnp.bfloat16), w1_ref[...],
                preferred_element_type=jnp.float32)
    h = jnp.maximum(h + b1_ref[...], 0.0)
    y = jnp.dot(h.astype(jnp.bfloat16), w2_ref[...],
                preferred_element_type=jnp.float32)
    h2 = y + b2_ref[...] + x
    mean = jnp.mean(h2, axis=-1, keepdims=True)
    c = h2 - mean
    var = jnp.mean(c * c, axis=-1, keepdims=True)
    o_ref[...] = (c * jax.lax.rsqrt(var + eps) * g_ref[...]
                  + beta_ref[...]).astype(o_ref.dtype)


def ffn_add_ln(x2d, ffn_p, ln_p, *, eps=1e-5, tm_target=256):
    # TODO(synk): for very large dFF, add a K-grid over the FF dim instead of
    # keeping both weight slabs fully VMEM-resident per row tile.
    M, D = x2d.shape
    FF = ffn_p["w1"].shape[1]
    tm = _tile(M, tm_target, 8)
    kern = functools.partial(_ffn_add_ln_kernel, eps=eps)
    return pl.pallas_call(
        kern,
        out_shape=jax.ShapeDtypeStruct((M, D), jnp.float32),
        grid=(M // tm,),
        in_specs=[
            pl.BlockSpec((tm, D), lambda i: (i, 0)),
            pl.BlockSpec((D, FF), lambda i: (0, 0)),
            pl.BlockSpec((1, FF), lambda i: (0, 0)),
            pl.BlockSpec((FF, D), lambda i: (0, 0)),
            pl.BlockSpec((1, D), lambda i: (0, 0)),
            pl.BlockSpec((1, D), lambda i: (0, 0)),
            pl.BlockSpec((1, D), lambda i: (0, 0)),
        ],
        out_specs=pl.BlockSpec((tm, D), lambda i: (i, 0)),
        compiler_params=pltpu.CompilerParams(dimension_semantics=("parallel",)),
    )(x2d, ffn_p["w1"], ffn_p["b1"].reshape(1, FF), ffn_p["w2"],
      ffn_p["b2"].reshape(1, D), ln_p["g"].reshape(1, D), ln_p["b"].reshape(1, D))


# 4) output head: K-tiled matmul + bias + log_softmax (vocab padded to 128 lanes).

def _matmul_logsoftmax_kernel(x_ref, w_ref, b_ref, o_ref, acc_ref):
    kk = pl.program_id(1)

    @pl.when(kk == 0)
    def _():
        acc_ref[...] = jnp.zeros_like(acc_ref)

    acc_ref[...] += jnp.dot(x_ref[...].astype(jnp.bfloat16), w_ref[...],
                            preferred_element_type=jnp.float32)

    @pl.when(kk == pl.num_programs(1) - 1)
    def _():
        z = acc_ref[...] + b_ref[...]
        z = z - jnp.max(z, axis=-1, keepdims=True)
        lse = jnp.log(jnp.sum(jnp.exp(z), axis=-1, keepdims=True))
        o_ref[...] = (z - lse).astype(o_ref.dtype)


def matmul_logsoftmax(x2d, w_pad, b_pad, *, tm_target=256, tk_target=512):
    M, K = x2d.shape
    Vp = w_pad.shape[1]
    tm = _tile(M, tm_target, 8)
    tk = _tile(K, tk_target, 128)
    return pl.pallas_call(
        _matmul_logsoftmax_kernel,
        out_shape=jax.ShapeDtypeStruct((M, Vp), jnp.float32),
        grid=(M // tm, K // tk),
        in_specs=[
            pl.BlockSpec((tm, tk), lambda i, k: (i, k)),
            pl.BlockSpec((tk, Vp), lambda i, k: (k, 0)),
            pl.BlockSpec((1, Vp), lambda i, k: (0, 0)),
        ],
        out_specs=pl.BlockSpec((tm, Vp), lambda i, k: (i, 0)),
        scratch_shapes=[pltpu.VMEM((tm, Vp), jnp.float32)],
        compiler_params=pltpu.CompilerParams(
            dimension_semantics=("parallel", "arbitrary")),
    )(x2d, w_pad, b_pad.reshape(1, Vp))


# ------------------------------- model glue --------------------------------

def positional_encoding(seq_len, d_model):
    pos = jnp.arange(seq_len, dtype=jnp.float32)[:, None]
    i = jnp.arange(0, d_model, 2, dtype=jnp.float32)
    div = jnp.exp(-math.log(10000.0) * i / d_model)
    pe = jnp.zeros((seq_len, d_model), jnp.float32)
    pe = pe.at[:, 0::2].set(jnp.sin(pos * div))
    pe = pe.at[:, 1::2].set(jnp.cos(pos * div))
    return pe


def transformer_forward(params, enc_ids, dec_ids, *, cfg):
    D, H, S = cfg["dModel"], cfg["nHeads"], cfg["seqLen"]
    V = cfg["tgtVocabSize"]
    B = enc_ids.shape[0]
    pe = positional_encoding(S, D)
    scale_emb = math.sqrt(D)

    # TODO(synk): embedding gather + positional-encoding add stay in plain JAX
    # (a DMA-gather Pallas kernel is not worthwhile at this scale).
    x = (jnp.take(params["src_emb"], enc_ids, axis=0) * scale_emb
         + pe[None]).astype(jnp.float32)

    # encoder stack (post-LN)
    for layer in params["enc"]:
        x = self_attn_block(x, layer["attn"], layer["ln1"],
                            num_heads=H, causal=False)
        x = ffn_add_ln(x.reshape(B * S, D), layer["ffn"],
                       layer["ln2"]).reshape(B, S, D)

    mem = x  # encoder memory, (B, S, D)

    y = (jnp.take(params["tgt_emb"], dec_ids, axis=0) * scale_emb
         + pe[None]).astype(jnp.float32)

    # decoder stack (post-LN, causal self-attn + cross-attn)
    for layer in params["dec"]:
        y = self_attn_block(y, layer["self_attn"], layer["ln1"],
                            num_heads=H, causal=True)
        y = cross_attn_block(y, mem, layer["cross_attn"], layer["ln2"],
                             num_heads=H)
        y = ffn_add_ln(y.reshape(B * S, D), layer["ffn"],
                       layer["ln3"]).reshape(B, S, D)

    # output projection fused with log_softmax over the (128-padded) vocab;
    # padded columns carry a -1e9 bias so they contribute ~0 to the normalizer.
    logp = matmul_logsoftmax(y.reshape(B * S, D),
                             params["out_w_pad"], params["out_b_pad"])
    return logp[:, :V].reshape(B, S, V)


# ------------------------------- params init -------------------------------

def init_params(key, cfg):
    D, FF, L = cfg["dModel"], cfg["dFF"], cfg["nLayers"]
    V = cfg["tgtVocabSize"]
    Vp = _round_up(V, 128)
    keys = iter(jax.random.split(key, 512))

    def nrm(shape, scale=0.02, dtype=jnp.bfloat16):
        return (scale * jax.random.normal(next(keys), shape)).astype(dtype)

    def zeros(shape):
        return jnp.zeros(shape, jnp.float32)

    def ones(shape):
        return jnp.ones(shape, jnp.float32)

    def self_mha():
        return dict(wqkv=nrm((D, 3 * D)), bqkv=zeros((3 * D,)),
                    wo=nrm((D, D)), bo=zeros((D,)))

    def cross_mha():
        return dict(wq=nrm((D, D)), bq=zeros((D,)),
                    wkv=nrm((D, 2 * D)), bkv=zeros((2 * D,)),
                    wo=nrm((D, D)), bo=zeros((D,)))

    def ffn():
        return dict(w1=nrm((D, FF)), b1=zeros((FF,)),
                    w2=nrm((FF, D)), b2=zeros((D,)))

    def ln():
        return dict(g=ones((D,)), b=zeros((D,)))

    out_w = 0.02 * jax.random.normal(next(keys), (D, V))
    out_w_pad = jnp.zeros((D, Vp), jnp.float32).at[:, :V].set(out_w)
    out_w_pad = out_w_pad.astype(jnp.bfloat16)
    out_b_pad = jnp.full((Vp,), -1e9, jnp.float32).at[:V].set(0.0)

    return dict(
        src_emb=nrm((cfg["srcVocabSize"], D), 1.0, jnp.float32),
        tgt_emb=nrm((cfg["tgtVocabSize"], D), 1.0, jnp.float32),
        enc=[dict(attn=self_mha(), ffn=ffn(), ln1=ln(), ln2=ln())
             for _ in range(L)],
        dec=[dict(self_attn=self_mha(), cross_attn=cross_mha(), ffn=ffn(),
                  ln1=ln(), ln2=ln(), ln3=ln()) for _ in range(L)],
        out_w_pad=out_w_pad,
        out_b_pad=out_b_pad,
    )


# ----------------------------------- main -----------------------------------

if __name__ == "__main__":
    cfg = dict(dModel=32, seqLen=8, dropout=0.1, srcVocabSize=50, tgtVocabSize=60,
               nHeads=4, dFF=64, nLayers=2)

    key = jax.random.PRNGKey(0)
    pkey, k_src, k_tgt = jax.random.split(key, 3)
    params = init_params(pkey, cfg)

    batch = 2
    enc_ids = jax.random.randint(k_src, (batch, cfg["seqLen"]), 0,
                                 cfg["srcVocabSize"], dtype=jnp.int32)
    dec_ids = jax.random.randint(k_tgt, (batch, cfg["seqLen"]), 0,
                                 cfg["tgtVocabSize"], dtype=jnp.int32)

    fwd = jax.jit(functools.partial(transformer_forward, cfg=cfg))
    out = fwd(params, enc_ids, dec_ids)
    out = jax.block_until_ready(out)

    assert out.shape == (batch, cfg["seqLen"], cfg["tgtVocabSize"])
    # rows of log_softmax must exponentiate-sum to 1
    assert bool(jnp.allclose(jnp.sum(jnp.exp(out), axis=-1), 1.0, atol=1e-3))
    print("KERNEL_OK")
</pallas_src>

<mosaic_0001>
module attributes {stable_mosaic.version = 11 : i64} {
  func.func @_self_attn_block_kernel(%arg0: i32, %arg1: memref<1x8x32xf32, #tpu.memory_space<vmem>>, %arg2: memref<32x96xbf16, #tpu.memory_space<vmem>>, %arg3: memref<1x96xf32, #tpu.memory_space<vmem>>, %arg4: memref<32x32xbf16, #tpu.memory_space<vmem>>, %arg5: memref<1x32xf32, #tpu.memory_space<vmem>>, %arg6: memref<1x32xf32, #tpu.memory_space<vmem>>, %arg7: memref<1x32xf32, #tpu.memory_space<vmem>>, %arg8: memref<1x8x32xf32, #tpu.memory_space<vmem>>) attributes {dimension_semantics = [#tpu.dimension_semantics<parallel>], iteration_bounds = array<i64: 2>, scalar_prefetch = 0 : i64, scratch_operands = 0 : i64, tpu.core_type = #tpu.core_type<tc>, window_params = [{transform_indices = @transform_0, window_bounds = array<i64: 1, 8, 32>}, {pipeline_mode = #tpu.pipeline_mode<synchronous>, transform_indices = @transform_1, window_bounds = array<i64: 32, 96>}, {pipeline_mode = #tpu.pipeline_mode<synchronous>, transform_indices = @transform_2, window_bounds = array<i64: 1, 96>}, {pipeline_mode = #tpu.pipeline_mode<synchronous>, transform_indices = @transform_3, window_bounds = array<i64: 32, 32>}, {pipeline_mode = #tpu.pipeline_mode<synchronous>, transform_indices = @transform_4, window_bounds = array<i64: 1, 32>}, {pipeline_mode = #tpu.pipeline_mode<synchronous>, transform_indices = @transform_5, window_bounds = array<i64: 1, 32>}, {pipeline_mode = #tpu.pipeline_mode<synchronous>, transform_indices = @transform_6, window_bounds = array<i64: 1, 32>}, {transform_indices = @transform_7, window_bounds = array<i64: 1, 8, 32>}]} {
    %c0 = arith.constant 0 : index
    %c0_0 = arith.constant 0 : index
    %c0_1 = arith.constant 0 : index
    %0 = vector.load %arg1[%c0, %c0_0, %c0_1] : memref<1x8x32xf32, #tpu.memory_space<vmem>>, vector<1x8x32xf32>
    %1 = vector.shape_cast %0 : vector<1x8x32xf32> to vector<8x32xf32>
    %2 = arith.truncf %1 : vector<8x32xf32> to vector<8x32xbf16>
    %c0_2 = arith.constant 0 : index
    %c0_3 = arith.constant 0 : index
    %3 = vector.load %arg2[%c0_2, %c0_3] : memref<32x96xbf16, #tpu.memory_space<vmem>>, vector<32x96xbf16>
    %cst = arith.constant dense<0.000000e+00> : vector<8x96xf32>
    %4 = tpu.matmul %2, %3, %cst {dimension_numbers = #tpu.dot_dimension_numbers<[1], [0], [0], [1], [0, 0, 1, 1], [], []>} : vector<8x32xbf16>, vector<32x96xbf16>, vector<8x96xf32> -> vector<8x96xf32>
    %c0_4 = arith.constant 0 : index
    %c0_5 = arith.constant 0 : index
    %5 = vector.load %arg3[%c0_4, %c0_5] : memref<1x96xf32, #tpu.memory_space<vmem>>, vector<1x96xf32>
    %6 = vector.broadcast %5 : vector<1x96xf32> to vector<8x96xf32>
    %7 = arith.addf %4, %6 : vector<8x96xf32>
    %8 = vector.extract_strided_slice %7 {offsets = [0, 0], sizes = [8, 32], strides = [1, 1]} : vector<8x96xf32> to vector<8x32xf32>
    %cst_6 = arith.constant 0.353553385 : f32
    %9 = vector.broadcast %cst_6 : f32 to vector<8x32xf32>
    %10 = arith.mulf %8, %9 : vector<8x32xf32>
    %11 = vector.extract_strided_slice %7 {offsets = [0, 32], sizes = [8, 32], strides = [1, 1]} : vector<8x96xf32> to vector<8x32xf32>
    %12 = vector.extract_strided_slice %7 {offsets = [0, 64], sizes = [8, 32], strides = [1, 1]} : vector<8x96xf32> to vector<8x32xf32>
    %13 = vector.extract_strided_slice %10 {offsets = [0, 0], sizes = [8, 8], strides = [1, 1]} : vector<8x32xf32> to vector<8x8xf32>
    %14 = arith.truncf %13 : vector<8x8xf32> to vector<8x8xbf16>
    %15 = vector.extract_strided_slice %11 {offsets = [0, 0], sizes = [8, 8], strides = [1, 1]} : vector<8x32xf32> to vector<8x8xf32>
    %16 = arith.truncf %15 : vector<8x8xf32> to vector<8x8xbf16>
    %17 = vector.extract_strided_slice %12 {offsets = [0, 0], sizes = [8, 8], strides = [1, 1]} : vector<8x32xf32> to vector<8x8xf32>
    %18 = arith.truncf %17 : vector<8x8xf32> to vector<8x8xbf16>
    %cst_7 = arith.constant dense<0.000000e+00> : vector<8x8xf32>
    %19 = tpu.matmul %14, %16, %cst_7 {dimension_numbers = #tpu.dot_dimension_numbers<[1], [1], [0], [0], [0, 0, 1, 0], [], []>} : vector<8x8xbf16>, vector<8x8xbf16>, vector<8x8xf32> -> vector<8x8xf32>
    %cst_8 = arith.constant dense<0xFF800000> : vector<8xf32>
    %20 = vector.multi_reduction <maximumf>, %19, %cst_8 [1] : vector<8x8xf32> to vector<8xf32>
    %21 = vector.shape_cast %20 : vector<8xf32> to vector<8x1xf32>
    %22 = vector.broadcast %21 : vector<8x1xf32> to vector<8x8xf32>
    %23 = arith.subf %19, %22 : vector<8x8xf32>
    %24 = math.exp %23 : vector<8x8xf32>
    %cst_9 = arith.constant dense<0.000000e+00> : vector<8xf32>
    %25 = vector.multi_reduction <add>, %24, %cst_9 [1] : vector<8x8xf32> to vector<8xf32>
    %26 = vector.shape_cast %25 : vector<8xf32> to vector<8x1xf32>
    %27 = tpu.reciprocal %26 {approx = true} : vector<8x1xf32> -> vector<8x1xf32>
    %28 = vector.broadcast %27 : vector<8x1xf32> to vector<8x8xf32>
    %29 = arith.mulf %24, %28 : vector<8x8xf32>
    %30 = arith.truncf %29 : vector<8x8xf32> to vector<8x8xbf16>
    %cst_10 = arith.constant dense<0.000000e+00> : vector<8x8xf32>
    %31 = tpu.matmul %30, %18, %cst_10 {dimension_numbers = #tpu.dot_dimension_numbers<[1], [0], [0], [1], [0, 0, 1, 1], [], []>} : vector<8x8xbf16>, vector<8x8xbf16>, vector<8x8xf32> -> vector<8x8xf32>
    %32 = vector.extract_strided_slice %10 {offsets = [0, 8], sizes = [8, 8], strides = [1, 1]} : vector<8x32xf32> to vector<8x8xf32>
    %33 = arith.truncf %32 : vector<8x8xf32> to vector<8x8xbf16>
    %34 = vector.extract_strided_slice %11 {offsets = [0, 8], sizes = [8, 8], strides = [1, 1]} : vector<8x32xf32> to vector<8x8xf32>
    %35 = arith.truncf %34 : vector<8x8xf32> to vector<8x8xbf16>
    %36 = vector.extract_strided_slice %12 {offsets = [0, 8], sizes = [8, 8], strides = [1, 1]} : vector<8x32xf32> to vector<8x8xf32>
    %37 = arith.truncf %36 : vector<8x8xf32> to vector<8x8xbf16>
    %cst_11 = arith.constant dense<0.000000e+00> : vector<8x8xf32>
    %38 = tpu.matmul %33, %35, %cst_11 {dimension_numbers = #tpu.dot_dimension_numbers<[1], [1], [0], [0], [0, 0, 1, 0], [], []>} : vector<8x8xbf16>, vector<8x8xbf16>, vector<8x8xf32> -> vector<8x8xf32>
    %cst_12 = arith.constant dense<0xFF800000> : vector<8xf32>
    %39 = vector.multi_reduction <maximumf>, %38, %cst_12 [1] : vector<8x8xf32> to vector<8xf32>
    %40 = vector.shape_cast %39 : vector<8xf32> to vector<8x1xf32>
    %41 = vector.broadcast %40 : vector<8x1xf32> to vector<8x8xf32>
    %42 = arith.subf %38, %41 : vector<8x8xf32>
    %43 = math.exp %42 : vector<8x8xf32>
    %cst_13 = arith.constant dense<0.000000e+00> : vector<8xf32>
    %44 = vector.multi_reduction <add>, %43, %cst_13 [1] : vector<8x8xf32> to vector<8xf32>
    %45 = vector.shape_cast %44 : vector<8xf32> to vector<8x1xf32>
    %46 = tpu.reciprocal %45 {approx = true} : vector<8x1xf32> -> vector<8x1xf32>
    %47 = vector.broadcast %46 : vector<8x1xf32> to vector<8x8xf32>
    %48 = arith.mulf %43, %47 : vector<8x8xf32>
    %49 = arith.truncf %48 : vector<8x8xf32> to vector<8x8xbf16>
    %cst_14 = arith.constant dense<0.000000e+00> : vector<8x8xf32>
    %50 = tpu.matmul %49, %37, %cst_14 {dimension_numbers = #tpu.dot_dimension_numbers<[1], [0], [0], [1], [0, 0, 1, 1], [], []>} : vector<8x8xbf16>, vector<8x8xbf16>, vector<8x8xf32> -> vector<8x8xf32>
    %51 = vector.extract_strided_slice %10 {offsets = [0, 16], sizes = [8, 8], strides = [1, 1]} : vector<8x32xf32> to vector<8x8xf32>
    %52 = arith.truncf %51 : vector<8x8xf32> to vector<8x8xbf16>
    %53 = vector.extract_strided_slice %11 {offsets = [0, 16], sizes = [8, 8], strides = [1, 1]} : vector<8x32xf32> to vector<8x8xf32>
    %54 = arith.truncf %53 : vector<8x8xf32> to vector<8x8xbf16>
    %55 = vector.extract_strided_slice %12 {offsets = [0, 16], sizes = [8, 8], strides = [1, 1]} : vector<8x32xf32> to vector<8x8xf32>
    %56 = arith.truncf %55 : vector<8x8xf32> to vector<8x8xbf16>
    %cst_15 = arith.constant dense<0.000000e+00> : vector<8x8xf32>
    %57 = tpu.matmul %52, %54, %cst_15 {dimension_numbers = #tpu.dot_dimension_numbers<[1], [1], [0], [0], [0, 0, 1, 0], [], []>} : vector<8x8xbf16>, vector<8x8xbf16>, vector<8x8xf32> -> vector<8x8xf32>
    %cst_16 = arith.constant dense<0xFF800000> : vector<8xf32>
    %58 = vector.multi_reduction <maximumf>, %57, %cst_16 [1] : vector<8x8xf32> to vector<8xf32>
    %59 = vector.shape_cast %58 : vector<8xf32> to vector<8x1xf32>
    %60 = vector.broadcast %59 : vector<8x1xf32> to vector<8x8xf32>
    %61 = arith.subf %57, %60 : vector<8x8xf32>
    %62 = math.exp %61 : vector<8x8xf32>
    %cst_17 = arith.constant dense<0.000000e+00> : vector<8xf32>
    %63 = vector.multi_reduction <add>, %62, %cst_17 [1] : vector<8x8xf32> to vector<8xf32>
    %64 = vector.shape_cast %63 : vector<8xf32> to vector<8x1xf32>
    %65 = tpu.reciprocal %64 {approx = true} : vector<8x1xf32> -> vector<8x1xf32>
    %66 = vector.broadcast %65 : vector<8x1xf32> to vector<8x8xf32>
    %67 = arith.mulf %62, %66 : vector<8x8xf32>
    %68 = arith.truncf %67 : vector<8x8xf32> to vector<8x8xbf16>
    %cst_18 = arith.constant dense<0.000000e+00> : vector<8x8xf32>
    %69 = tpu.matmul %68, %56, %cst_18 {dimension_numbers = #tpu.dot_dimension_numbers<[1], [0], [0], [1], [0, 0, 1, 1], [], []>} : vector<8x8xbf16>, vector<8x8xbf16>, vector<8x8xf32> -> vector<8x8xf32>
    %70 = vector.extract_strided_slice %10 {offsets = [0, 24], sizes = [8, 8], strides = [1, 1]} : vector<8x32xf32> to vector<8x8xf32>
    %71 = arith.truncf %70 : vector<8x8xf32> to vector<8x8xbf16>
    %72 = vector.extract_strided_slice %11 {offsets = [0, 24], sizes = [8, 8], strides = [1, 1]} : vector<8x32xf32> to vector<8x8xf32>
    %73 = arith.truncf %72 : vector<8x8xf32> to vector<8x8xbf16>
    %74 = vector.extract_strided_slice %12 {offsets = [0, 24], sizes = [8, 8], strides = [1, 1]} : vector<8x32xf32> to vector<8x8xf32>
    %75 = arith.truncf %74 : vector<8x8xf32> to vector<8x8xbf16>
    %cst_19 = arith.constant dense<0.000000e+00> : vector<8x8xf32>
    %76 = tpu.matmul %71, %73, %cst_19 {dimension_numbers = #tpu.dot_dimension_numbers<[1], [1], [0], [0], [0, 0, 1, 0], [], []>} : vector<8x8xbf16>, vector<8x8xbf16>, vector<8x8xf32> -> vector<8x8xf32>
    %cst_20 = arith.constant dense<0xFF800000> : vector<8xf32>
    %77 = vector.multi_reduction <maximumf>, %76, %cst_20 [1] : vector<8x8xf32> to vector<8xf32>
    %78 = vector.shape_cast %77 : vector<8xf32> to vector<8x1xf32>
    %79 = vector.broadcast %78 : vector<8x1xf32> to vector<8x8xf32>
    %80 = arith.subf %76, %79 : vector<8x8xf32>
    %81 = math.exp %80 : vector<8x8xf32>
    %cst_21 = arith.constant dense<0.000000e+00> : vector<8xf32>
    %82 = vector.multi_reduction <add>, %81, %cst_21 [1] : vector<8x8xf32> to vector<8xf32>
    %83 = vector.shape_cast %82 : vector<8xf32> to vector<8x1xf32>
    %84 = tpu.reciprocal %83 {approx = true} : vector<8x1xf32> -> vector<8x1xf32>
    %85 = vector.broadcast %84 : vector<8x1xf32> to vector<8x8xf32>
    %86 = arith.mulf %81, %85 : vector<8x8xf32>
    %87 = arith.truncf %86 : vector<8x8xf32> to vector<8x8xbf16>
    %cst_22 = arith.constant dense<0.000000e+00> : vector<8x8xf32>
    %88 = tpu.matmul %87, %75, %cst_22 {dimension_numbers = #tpu.dot_dimension_numbers<[1], [0], [0], [1], [0, 0, 1, 1], [], []>} : vector<8x8xbf16>, vector<8x8xbf16>, vector<8x8xf32> -> vector<8x8xf32>
    %89 = tpu.concatenate %31, %50, %69, %88 in 1 : vector<8x8xf32>, vector<8x8xf32>, vector<8x8xf32>, vector<8x8xf32> -> vector<8x32xf32>
    %90 = arith.truncf %89 : vector<8x32xf32> to vector<8x32xbf16>
    %c0_23 = arith.constant 0 : index
    %c0_24 = arith.constant 0 : index
    %91 = vector.load %arg4[%c0_23, %c0_24] : memref<32x32xbf16, #tpu.memory_space<vmem>>, vector<32x32xbf16>
    %cst_25 = arith.constant dense<0.000000e+00> : vector<8x32xf32>
    %92 = tpu.matmul %90, %91, %cst_25 {dimension_numbers = #tpu.dot_dimension_numbers<[1], [0], [0], [1], [0, 0, 1, 1], [], []>} : vector<8x32xbf16>, vector<32x32xbf16>, vector<8x32xf32> -> vector<8x32xf32>
    %c0_26 = arith.constant 0 : index
    %c0_27 = arith.constant 0 : index
    %93 = vector.load %arg5[%c0_26, %c0_27] : memref<1x32xf32, #tpu.memory_space<vmem>>, vector<1x32xf32>
    %94 = vector.broadcast %93 : vector<1x32xf32> to vector<8x32xf32>
    %95 = arith.addf %92, %94 : vector<8x32xf32>
    %96 = arith.addf %95, %1 : vector<8x32xf32>
    %cst_28 = arith.constant dense<0.000000e+00> : vector<8xf32>
    %97 = vector.multi_reduction <add>, %96, %cst_28 [1] : vector<8x32xf32> to vector<8xf32>
    %98 = vector.shape_cast %97 : vector<8xf32> to vector<8x1xf32>
    %cst_29 = arith.constant 3.200000e+01 : f32
    %99 = vector.broadcast %cst_29 : f32 to vector<8x1xf32>
    %100 = arith.divf %98, %99 : vector<8x1xf32>
    %101 = vector.broadcast %100 : vector<8x1xf32> to vector<8x32xf32>
    %102 = arith.subf %96, %101 : vector<8x32xf32>
    %103 = arith.mulf %102, %102 : vector<8x32xf32>
    %cst_30 = arith.constant dense<0.000000e+00> : vector<8xf32>
    %104 = vector.multi_reduction <add>, %103, %cst_30 [1] : vector<8x32xf32> to vector<8xf32>
    %105 = vector.shape_cast %104 : vector<8xf32> to vector<8x1xf32>
    %cst_31 = arith.constant 3.200000e+01 : f32
    %106 = vector.broadcast %cst_31 : f32 to vector<8x1xf32>
    %107 = arith.divf %105, %106 : vector<8x1xf32>
    %cst_32 = arith.constant 9.99999974E-6 : f32
    %108 = vector.broadcast %cst_32 : f32 to vector<8x1xf32>
    %109 = arith.addf %107, %108 : vector<8x1xf32>
    %110 = math.rsqrt %109 : vector<8x1xf32>
    %111 = vector.broadcast %110 : vector<8x1xf32> to vector<8x32xf32>
    %112 = arith.mulf %102, %111 : vector<8x32xf32>
    %c0_33 = arith.constant 0 : index
    %c0_34 = arith.constant 0 : index
    %113 = vector.load %arg6[%c0_33, %c0_34] : memref<1x32xf32, #tpu.memory_space<vmem>>, vector<1x32xf32>
    %114 = vector.broadcast %113 : vector<1x32xf32> to vector<8x32xf32>
    %115 = arith.mulf %112, %114 : vector<8x32xf32>
    %c0_35 = arith.constant 0 : index
    %c0_36 = arith.constant 0 : index
    %116 = vector.load %arg7[%c0_35, %c0_36] : memref<1x32xf32, #tpu.memory_space<vmem>>, vector<1x32xf32>
    %117 = vector.broadcast %116 : vector<1x32xf32> to vector<8x32xf32>
    %118 = arith.addf %115, %117 : vector<8x32xf32>
    %c0_37 = arith.constant 0 : index
    %c0_38 = arith.constant 0 : index
    %c0_39 = arith.constant 0 : index
    %119 = vector.load %arg8[%c0_37, %c0_38, %c0_39] : memref<1x8x32xf32, #tpu.memory_space<vmem>>, vector<1x8x32xf32>
    %120 = vector.shape_cast %119 : vector<1x8x32xf32> to vector<8x32xf32>
    %121 = vector.shape_cast %118 : vector<8x32xf32> to vector<1x8x32xf32>
    tpu.vector_store %arg8[%c0_37, %c0_38, %c0_39], %121 {strides = array<i32>} : memref<1x8x32xf32, #tpu.memory_space<vmem>>, vector<1x8x32xf32>,
    return
  }
  func.func @transform_0(%arg0: i32) -> (i32, i32, i32) {
    %c0_i32 = arith.constant 0 : i32
    %c0_i32_0 = arith.constant 0 : i32
    %c0_i32_1 = arith.constant 0 : i32
    return %arg0, %c0_i32, %c0_i32_0 : i32, i32, i32
  }
  func.func @transform_1(%arg0: i32) -> (i32, i32) {
    %c0_i32 = arith.constant 0 : i32
    %c0_i32_0 = arith.constant 0 : i32
    %c0_i32_1 = arith.constant 0 : i32
    return %c0_i32, %c0_i32_0 : i32, i32
  }
  func.func @transform_2(%arg0: i32) -> (i32, i32) {
    %c0_i32 = arith.constant 0 : i32
    %c0_i32_0 = arith.constant 0 : i32
    %c0_i32_1 = arith.constant 0 : i32
    return %c0_i32, %c0_i32_0 : i32, i32
  }
  func.func @transform_3(%arg0: i32) -> (i32, i32) {
    %c0_i32 = arith.constant 0 : i32
    %c0_i32_0 = arith.constant 0 : i32
    %c0_i32_1 = arith.constant 0 : i32
    return %c0_i32, %c0_i32_0 : i32, i32
  }
  func.func @transform_4(%arg0: i32) -> (i32, i32) {
    %c0_i32 = arith.constant 0 : i32
    %c0_i32_0 = arith.constant 0 : i32
    %c0_i32_1 = arith.constant 0 : i32
    return %c0_i32, %c0_i32_0 : i32, i32
  }
  func.func @transform_5(%arg0: i32) -> (i32, i32) {
    %c0_i32 = arith.constant 0 : i32
    %c0_i32_0 = arith.constant 0 : i32
    %c0_i32_1 = arith.constant 0 : i32
    return %c0_i32, %c0_i32_0 : i32, i32
  }
  func.func @transform_6(%arg0: i32) -> (i32, i32) {
    %c0_i32 = arith.constant 0 : i32
    %c0_i32_0 = arith.constant 0 : i32
    %c0_i32_1 = arith.constant 0 : i32
    return %c0_i32, %c0_i32_0 : i32, i32
  }
  func.func @transform_7(%arg0: i32) -> (i32, i32, i32) {
    %c0_i32 = arith.constant 0 : i32
    %c0_i32_0 = arith.constant 0 : i32
    %c0_i32_1 = arith.constant 0 : i32
    return %arg0, %c0_i32, %c0_i32_0 : i32, i32, i32
  }
}

module attributes {stable_mosaic.version = 11 : i64} {
  func.func @_ffn_add_ln_kernel(%arg0: i32, %arg1: memref<16x32xf32, #tpu.memory_space<vmem>>, %arg2: memref<32x64xbf16, #tpu.memory_space<vmem>>, %arg3: memref<1x64xf32, #tpu.memory_space<vmem>>, %arg4: memref<64x32xbf16, #tpu.memory_space<vmem>>, %arg5: memref<1x32xf32, #tpu.memory_space<vmem>>, %arg6: memref<1x32xf32, #tpu.memory_space<vmem>>, %arg7: memref<1x32xf32, #tpu.memory_space<vmem>>, %arg8: memref<16x32xf32, #tpu.memory_space<vmem>>) attributes {dimension_semantics = [#tpu.dimension_semantics<parallel>], iteration_bounds = array<i64: 1>, scalar_prefetch = 0 : i64, scratch_operands = 0 : i64, tpu.core_type = #tpu.core_type<tc>, window_params = [{transform_indices = @transform_0, window_bounds = array<i64: 16, 32>}, {pipeline_mode = #tpu.pipeline_mode<synchronous>, transform_indices = @transform_1, window_bounds = array<i64: 32, 64>}, {pipeline_mode = #tpu.pipeline_mode<synchronous>, transform_indices = @transform_2, window_bounds = array<i64: 1, 64>}, {pipeline_mode = #tpu.pipeline_mode<synchronous>, transform_indices = @transform_3, window_bounds = array<i64: 64, 32>}, {pipeline_mode = #tpu.pipeline_mode<synchronous>, transform_indices = @transform_4, window_bounds = array<i64: 1, 32>}, {pipeline_mode = #tpu.pipeline_mode<synchronous>, transform_indices = @transform_5, window_bounds = array<i64: 1, 32>}, {pipeline_mode = #tpu.pipeline_mode<synchronous>, transform_indices = @transform_6, window_bounds = array<i64: 1, 32>}, {transform_indices = @transform_7, window_bounds = array<i64: 16, 32>}]} {
    %c0 = arith.constant 0 : index
    %c0_0 = arith.constant 0 : index
    %0 = vector.load %arg1[%c0, %c0_0] : memref<16x32xf32, #tpu.memory_space<vmem>>, vector<16x32xf32>
    %1 = arith.truncf %0 : vector<16x32xf32> to vector<16x32xbf16>
    %c0_1 = arith.constant 0 : index
    %c0_2 = arith.constant 0 : index
    %2 = vector.load %arg2[%c0_1, %c0_2] : memref<32x64xbf16, #tpu.memory_space<vmem>>, vector<32x64xbf16>
    %cst = arith.constant dense<0.000000e+00> : vector<16x64xf32>
    %3 = tpu.matmul %1, %2, %cst {dimension_numbers = #tpu.dot_dimension_numbers<[1], [0], [0], [1], [0, 0, 1, 1], [], []>} : vector<16x32xbf16>, vector<32x64xbf16>, vector<16x64xf32> -> vector<16x64xf32>
    %c0_3 = arith.constant 0 : index
    %c0_4 = arith.constant 0 : index
    %4 = vector.load %arg3[%c0_3, %c0_4] : memref<1x64xf32, #tpu.memory_space<vmem>>, vector<1x64xf32>
    %5 = vector.broadcast %4 : vector<1x64xf32> to vector<16x64xf32>
    %6 = arith.addf %3, %5 : vector<16x64xf32>
    %cst_5 = arith.constant 0.000000e+00 : f32
    %7 = vector.broadcast %cst_5 : f32 to vector<16x64xf32>
    %8 = arith.maximumf %6, %7 : vector<16x64xf32>
    %9 = arith.truncf %8 : vector<16x64xf32> to vector<16x64xbf16>
    %c0_6 = arith.constant 0 : index
    %c0_7 = arith.constant 0 : index
    %10 = vector.load %arg4[%c0_6, %c0_7] : memref<64x32xbf16, #tpu.memory_space<vmem>>, vector<64x32xbf16>
    %cst_8 = arith.constant dense<0.000000e+00> : vector<16x32xf32>
    %11 = tpu.matmul %9, %10, %cst_8 {dimension_numbers = #tpu.dot_dimension_numbers<[1], [0], [0], [1], [0, 0, 1, 1], [], []>} : vector<16x64xbf16>, vector<64x32xbf16>, vector<16x32xf32> -> vector<16x32xf32>
    %c0_9 = arith.constant 0 : index
    %c0_10 = arith.constant 0 : index
    %12 = vector.load %arg5[%c0_9, %c0_10] : memref<1x32xf32, #tpu.memory_space<vmem>>, vector<1x32xf32>
    %13 = vector.broadcast %12 : vector<1x32xf32> to vector<16x32xf32>
    %14 = arith.addf %11, %13 : vector<16x32xf32>
    %15 = arith.addf %14, %0 : vector<16x32xf32>
    %cst_11 = arith.constant dense<0.000000e+00> : vector<16xf32>
    %16 = vector.multi_reduction <add>, %15, %cst_11 [1] : vector<16x32xf32> to vector<16xf32>
    %17 = vector.shape_cast %16 : vector<16xf32> to vector<16x1xf32>
    %cst_12 = arith.constant 3.200000e+01 : f32
    %18 = vector.broadcast %cst_12 : f32 to vector<16x1xf32>
    %19 = arith.divf %17, %18 : vector<16x1xf32>
    %20 = vector.broadcast %19 : vector<16x1xf32> to vector<16x32xf32>
    %21 = arith.subf %15, %20 : vector<16x32xf32>
    %22 = arith.mulf %21, %21 : vector<16x32xf32>
    %cst_13 = arith.constant dense<0.000000e+00> : vector<16xf32>
    %23 = vector.multi_reduction <add>, %22, %cst_13 [1] : vector<16x32xf32> to vector<16xf32>
    %24 = vector.shape_cast %23 : vector<16xf32> to vector<16x1xf32>
    %cst_14 = arith.constant 3.200000e+01 : f32
    %25 = vector.broadcast %cst_14 : f32 to vector<16x1xf32>
    %26 = arith.divf %24, %25 : vector<16x1xf32>
    %cst_15 = arith.constant 9.99999974E-6 : f32
    %27 = vector.broadcast %cst_15 : f32 to vector<16x1xf32>
    %28 = arith.addf %26, %27 : vector<16x1xf32>
    %29 = math.rsqrt %28 : vector<16x1xf32>
    %30 = vector.broadcast %29 : vector<16x1xf32> to vector<16x32xf32>
    %31 = arith.mulf %21, %30 : vector<16x32xf32>
    %c0_16 = arith.constant 0 : index
    %c0_17 = arith.constant 0 : index
    %32 = vector.load %arg6[%c0_16, %c0_17] : memref<1x32xf32, #tpu.memory_space<vmem>>, vector<1x32xf32>
    %33 = vector.broadcast %32 : vector<1x32xf32> to vector<16x32xf32>
    %34 = arith.mulf %31, %33 : vector<16x32xf32>
    %c0_18 = arith.constant 0 : index
    %c0_19 = arith.constant 0 : index
    %35 = vector.load %arg7[%c0_18, %c0_19] : memref<1x32xf32, #tpu.memory_space<vmem>>, vector<1x32xf32>
    %36 = vector.broadcast %35 : vector<1x32xf32> to vector<16x32xf32>
    %37 = arith.addf %34, %36 : vector<16x32xf32>
    %c0_20 = arith.constant 0 : index
    %c0_21 = arith.constant 0 : index
    %38 = vector.load %arg8[%c0_20, %c0_21] : memref<16x32xf32, #tpu.memory_space<vmem>>, vector<16x32xf32>
    tpu.vector_store %arg8[%c0_20, %c0_21], %37 {strides = array<i32>} : memref<16x32xf32, #tpu.memory_space<vmem>>, vector<16x32xf32>,
    return
  }
  func.func @transform_0(%arg0: i32) -> (i32, i32) {
    %c0_i32 = arith.constant 0 : i32
    %c0_i32_0 = arith.constant 0 : i32
    return %arg0, %c0_i32 : i32, i32
  }
  func.func @transform_1(%arg0: i32) -> (i32, i32) {
    %c0_i32 = arith.constant 0 : i32
    %c0_i32_0 = arith.constant 0 : i32
    %c0_i32_1 = arith.constant 0 : i32
    return %c0_i32, %c0_i32_0 : i32, i32
  }
  func.func @transform_2(%arg0: i32) -> (i32, i32) {
    %c0_i32 = arith.constant 0 : i32
    %c0_i32_0 = arith.constant 0 : i32
    %c0_i32_1 = arith.constant 0 : i32
    return %c0_i32, %c0_i32_0 : i32, i32
  }
  func.func @transform_3(%arg0: i32) -> (i32, i32) {
    %c0_i32 = arith.constant 0 : i32
    %c0_i32_0 = arith.constant 0 : i32
    %c0_i32_1 = arith.constant 0 : i32
    return %c0_i32, %c0_i32_0 : i32, i32
  }
  func.func @transform_4(%arg0: i32) -> (i32, i32) {
    %c0_i32 = arith.constant 0 : i32
    %c0_i32_0 = arith.constant 0 : i32
    %c0_i32_1 = arith.constant 0 : i32
    return %c0_i32, %c0_i32_0 : i32, i32
  }
  func.func @transform_5(%arg0: i32) -> (i32, i32) {
    %c0_i32 = arith.constant 0 : i32
    %c0_i32_0 = arith.constant 0 : i32
    %c0_i32_1 = arith.constant 0 : i32
    return %c0_i32, %c0_i32_0 : i32, i32
  }
  func.func @transform_6(%arg0: i32) -> (i32, i32) {
    %c0_i32 = arith.constant 0 : i32
    %c0_i32_0 = arith.constant 0 : i32
    %c0_i32_1 = arith.constant 0 : i32
    return %c0_i32, %c0_i32_0 : i32, i32
  }
  func.func @transform_7(%arg0: i32) -> (i32, i32) {
    %c0_i32 = arith.constant 0 : i32
    %c0_i32_0 = arith.constant 0 : i32
    return %arg0, %c0_i32 : i32, i32
  }
}

module attributes {stable_mosaic.version = 11 : i64} {
  func.func @_cross_attn_block_kernel(%arg0: i32, %arg1: memref<1x8x32xf32, #tpu.memory_space<vmem>>, %arg2: memref<1x8x32xf32, #tpu.memory_space<vmem>>, %arg3: memref<32x32xbf16, #tpu.memory_space<vmem>>, %arg4: memref<1x32xf32, #tpu.memory_space<vmem>>, %arg5: memref<32x64xbf16, #tpu.memory_space<vmem>>, %arg6: memref<1x64xf32, #tpu.memory_space<vmem>>, %arg7: memref<32x32xbf16, #tpu.memory_space<vmem>>, %arg8: memref<1x32xf32, #tpu.memory_space<vmem>>, %arg9: memref<1x32xf32, #tpu.memory_space<vmem>>, %arg10: memref<1x32xf32, #tpu.memory_space<vmem>>, %arg11: memref<1x8x32xf32, #tpu.memory_space<vmem>>) attributes {dimension_semantics = [#tpu.dimension_semantics<parallel>], iteration_bounds = array<i64: 2>, scalar_prefetch = 0 : i64, scratch_operands = 0 : i64, tpu.core_type = #tpu.core_type<tc>, window_params = [{transform_indices = @transform_0, window_bounds = array<i64: 1, 8, 32>}, {transform_indices = @transform_1, window_bounds = array<i64: 1, 8, 32>}, {pipeline_mode = #tpu.pipeline_mode<synchronous>, transform_indices = @transform_2, window_bounds = array<i64: 32, 32>}, {pipeline_mode = #tpu.pipeline_mode<synchronous>, transform_indices = @transform_3, window_bounds = array<i64: 1, 32>}, {pipeline_mode = #tpu.pipeline_mode<synchronous>, transform_indices = @transform_4, window_bounds = array<i64: 32, 64>}, {pipeline_mode = #tpu.pipeline_mode<synchronous>, transform_indices = @transform_5, window_bounds = array<i64: 1, 64>}, {pipeline_mode = #tpu.pipeline_mode<synchronous>, transform_indices = @transform_6, window_bounds = array<i64: 32, 32>}, {pipeline_mode = #tpu.pipeline_mode<synchronous>, transform_indices = @transform_7, window_bounds = array<i64: 1, 32>}, {pipeline_mode = #tpu.pipeline_mode<synchronous>, transform_indices = @transform_8, window_bounds = array<i64: 1, 32>}, {pipeline_mode = #tpu.pipeline_mode<synchronous>, transform_indices = @transform_9, window_bounds = array<i64: 1, 32>}, {transform_indices = @transform_10, window_bounds = array<i64: 1, 8, 32>}]} {
    %c0 = arith.constant 0 : index
    %c0_0 = arith.constant 0 : index
    %c0_1 = arith.constant 0 : index
    %0 = vector.load %arg1[%c0, %c0_0, %c0_1] : memref<1x8x32xf32, #tpu.memory_space<vmem>>, vector<1x8x32xf32>
    %1 = vector.shape_cast %0 : vector<1x8x32xf32> to vector<8x32xf32>
    %c0_2 = arith.constant 0 : index
    %c0_3 = arith.constant 0 : index
    %c0_4 = arith.constant 0 : index
    %2 = vector.load %arg2[%c0_2, %c0_3, %c0_4] : memref<1x8x32xf32, #tpu.memory_space<vmem>>, vector<1x8x32xf32>
    %3 = vector.shape_cast %2 : vector<1x8x32xf32> to vector<8x32xf32>
    %4 = arith.truncf %1 : vector<8x32xf32> to vector<8x32xbf16>
    %c0_5 = arith.constant 0 : index
    %c0_6 = arith.constant 0 : index
    %5 = vector.load %arg3[%c0_5, %c0_6] : memref<32x32xbf16, #tpu.memory_space<vmem>>, vector<32x32xbf16>
    %cst = arith.constant dense<0.000000e+00> : vector<8x32xf32>
    %6 = tpu.matmul %4, %5, %cst {dimension_numbers = #tpu.dot_dimension_numbers<[1], [0], [0], [1], [0, 0, 1, 1], [], []>} : vector<8x32xbf16>, vector<32x32xbf16>, vector<8x32xf32> -> vector<8x32xf32>
    %c0_7 = arith.constant 0 : index
    %c0_8 = arith.constant 0 : index
    %7 = vector.load %arg4[%c0_7, %c0_8] : memref<1x32xf32, #tpu.memory_space<vmem>>, vector<1x32xf32>
    %8 = vector.broadcast %7 : vector<1x32xf32> to vector<8x32xf32>
    %9 = arith.addf %6, %8 : vector<8x32xf32>
    %cst_9 = arith.constant 0.353553385 : f32
    %10 = vector.broadcast %cst_9 : f32 to vector<8x32xf32>
    %11 = arith.mulf %9, %10 : vector<8x32xf32>
    %12 = arith.truncf %3 : vector<8x32xf32> to vector<8x32xbf16>
    %c0_10 = arith.constant 0 : index
    %c0_11 = arith.constant 0 : index
    %13 = vector.load %arg5[%c0_10, %c0_11] : memref<32x64xbf16, #tpu.memory_space<vmem>>, vector<32x64xbf16>
    %cst_12 = arith.constant dense<0.000000e+00> : vector<8x64xf32>
    %14 = tpu.matmul %12, %13, %cst_12 {dimension_numbers = #tpu.dot_dimension_numbers<[1], [0], [0], [1], [0, 0, 1, 1], [], []>} : vector<8x32xbf16>, vector<32x64xbf16>, vector<8x64xf32> -> vector<8x64xf32>
    %c0_13 = arith.constant 0 : index
    %c0_14 = arith.constant 0 : index
    %15 = vector.load %arg6[%c0_13, %c0_14] : memref<1x64xf32, #tpu.memory_space<vmem>>, vector<1x64xf32>
    %16 = vector.broadcast %15 : vector<1x64xf32> to vector<8x64xf32>
    %17 = arith.addf %14, %16 : vector<8x64xf32>
    %18 = vector.extract_strided_slice %17 {offsets = [0, 0], sizes = [8, 32], strides = [1, 1]} : vector<8x64xf32> to vector<8x32xf32>
    %19 = vector.extract_strided_slice %17 {offsets = [0, 32], sizes = [8, 32], strides = [1, 1]} : vector<8x64xf32> to vector<8x32xf32>
    %20 = vector.extract_strided_slice %11 {offsets = [0, 0], sizes = [8, 8], strides = [1, 1]} : vector<8x32xf32> to vector<8x8xf32>
    %21 = arith.truncf %20 : vector<8x8xf32> to vector<8x8xbf16>
    %22 = vector.extract_strided_slice %18 {offsets = [0, 0], sizes = [8, 8], strides = [1, 1]} : vector<8x32xf32> to vector<8x8xf32>
    %23 = arith.truncf %22 : vector<8x8xf32> to vector<8x8xbf16>
    %24 = vector.extract_strided_slice %19 {offsets = [0, 0], sizes = [8, 8], strides = [1, 1]} : vector<8x32xf32> to vector<8x8xf32>
    %25 = arith.truncf %24 : vector<8x8xf32> to vector<8x8xbf16>
    %cst_15 = arith.constant dense<0.000000e+00> : vector<8x8xf32>
    %26 = tpu.matmul %21, %23, %cst_15 {dimension_numbers = #tpu.dot_dimension_numbers<[1], [1], [0], [0], [0, 0, 1, 0], [], []>} : vector<8x8xbf16>, vector<8x8xbf16>, vector<8x8xf32> -> vector<8x8xf32>
    %cst_16 = arith.constant dense<0xFF800000> : vector<8xf32>
    %27 = vector.multi_reduction <maximumf>, %26, %cst_16 [1] : vector<8x8xf32> to vector<8xf32>
    %28 = vector.shape_cast %27 : vector<8xf32> to vector<8x1xf32>
    %29 = vector.broadcast %28 : vector<8x1xf32> to vector<8x8xf32>
    %30 = arith.subf %26, %29 : vector<8x8xf32>
    %31 = math.exp %30 : vector<8x8xf32>
    %cst_17 = arith.constant dense<0.000000e+00> : vector<8xf32>
    %32 = vector.multi_reduction <add>, %31, %cst_17 [1] : vector<8x8xf32> to vector<8xf32>
    %33 = vector.shape_cast %32 : vector<8xf32> to vector<8x1xf32>
    %34 = tpu.reciprocal %33 {approx = true} : vector<8x1xf32> -> vector<8x1xf32>
    %35 = vector.broadcast %34 : vector<8x1xf32> to vector<8x8xf32>
    %36 = arith.mulf %31, %35 : vector<8x8xf32>
    %37 = arith.truncf %36 : vector<8x8xf32> to vector<8x8xbf16>
    %cst_18 = arith.constant dense<0.000000e+00> : vector<8x8xf32>
    %38 = tpu.matmul %37, %25, %cst_18 {dimension_numbers = #tpu.dot_dimension_numbers<[1], [0], [0], [1], [0, 0, 1, 1], [], []>} : vector<8x8xbf16>, vector<8x8xbf16>, vector<8x8xf32> -> vector<8x8xf32>
    %39 = vector.extract_strided_slice %11 {offsets = [0, 8], sizes = [8, 8], strides = [1, 1]} : vector<8x32xf32> to vector<8x8xf32>
    %40 = arith.truncf %39 : vector<8x8xf32> to vector<8x8xbf16>
    %41 = vector.extract_strided_slice %18 {offsets = [0, 8], sizes = [8, 8], strides = [1, 1]} : vector<8x32xf32> to vector<8x8xf32>
    %42 = arith.truncf %41 : vector<8x8xf32> to vector<8x8xbf16>
    %43 = vector.extract_strided_slice %19 {offsets = [0, 8], sizes = [8, 8], strides = [1, 1]} : vector<8x32xf32> to vector<8x8xf32>
    %44 = arith.truncf %43 : vector<8x8xf32> to vector<8x8xbf16>
    %cst_19 = arith.constant dense<0.000000e+00> : vector<8x8xf32>
    %45 = tpu.matmul %40, %42, %cst_19 {dimension_numbers = #tpu.dot_dimension_numbers<[1], [1], [0], [0], [0, 0, 1, 0], [], []>} : vector<8x8xbf16>, vector<8x8xbf16>, vector<8x8xf32> -> vector<8x8xf32>
    %cst_20 = arith.constant dense<0xFF800000> : vector<8xf32>
    %46 = vector.multi_reduction <maximumf>, %45, %cst_20 [1] : vector<8x8xf32> to vector<8xf32>
    %47 = vector.shape_cast %46 : vector<8xf32> to vector<8x1xf32>
    %48 = vector.broadcast %47 : vector<8x1xf32> to vector<8x8xf32>
    %49 = arith.subf %45, %48 : vector<8x8xf32>
    %50 = math.exp %49 : vector<8x8xf32>
    %cst_21 = arith.constant dense<0.000000e+00> : vector<8xf32>
    %51 = vector.multi_reduction <add>, %50, %cst_21 [1] : vector<8x8xf32> to vector<8xf32>
    %52 = vector.shape_cast %51 : vector<8xf32> to vector<8x1xf32>
    %53 = tpu.reciprocal %52 {approx = true} : vector<8x1xf32> -> vector<8x1xf32>
    %54 = vector.broadcast %53 : vector<8x1xf32> to vector<8x8xf32>
    %55 = arith.mulf %50, %54 : vector<8x8xf32>
    %56 = arith.truncf %55 : vector<8x8xf32> to vector<8x8xbf16>
    %cst_22 = arith.constant dense<0.000000e+00> : vector<8x8xf32>
    %57 = tpu.matmul %56, %44, %cst_22 {dimension_numbers = #tpu.dot_dimension_numbers<[1], [0], [0], [1], [0, 0, 1, 1], [], []>} : vector<8x8xbf16>, vector<8x8xbf16>, vector<8x8xf32> -> vector<8x8xf32>
    %58 = vector.extract_strided_slice %11 {offsets = [0, 16], sizes = [8, 8], strides = [1, 1]} : vector<8x32xf32> to vector<8x8xf32>
    %59 = arith.truncf %58 : vector<8x8xf32> to vector<8x8xbf16>
    %60 = vector.extract_strided_slice %18 {offsets = [0, 16], sizes = [8, 8], strides = [1, 1]} : vector<8x32xf32> to vector<8x8xf32>
    %61 = arith.truncf %60 : vector<8x8xf32> to vector<8x8xbf16>
    %62 = vector.extract_strided_slice %19 {offsets = [0, 16], sizes = [8, 8], strides = [1, 1]} : vector<8x32xf32> to vector<8x8xf32>
    %63 = arith.truncf %62 : vector<8x8xf32> to vector<8x8xbf16>
    %cst_23 = arith.constant dense<0.000000e+00> : vector<8x8xf32>
    %64 = tpu.matmul %59, %61, %cst_23 {dimension_numbers = #tpu.dot_dimension_numbers<[1], [1], [0], [0], [0, 0, 1, 0], [], []>} : vector<8x8xbf16>, vector<8x8xbf16>, vector<8x8xf32> -> vector<8x8xf32>
    %cst_24 = arith.constant dense<0xFF800000> : vector<8xf32>
    %65 = vector.multi_reduction <maximumf>, %64, %cst_24 [1] : vector<8x8xf32> to vector<8xf32>
    %66 = vector.shape_cast %65 : vector<8xf32> to vector<8x1xf32>
    %67 = vector.broadcast %66 : vector<8x1xf32> to vector<8x8xf32>
    %68 = arith.subf %64, %67 : vector<8x8xf32>
    %69 = math.exp %68 : vector<8x8xf32>
    %cst_25 = arith.constant dense<0.000000e+00> : vector<8xf32>
    %70 = vector.multi_reduction <add>, %69, %cst_25 [1] : vector<8x8xf32> to vector<8xf32>
    %71 = vector.shape_cast %70 : vector<8xf32> to vector<8x1xf32>
    %72 = tpu.reciprocal %71 {approx = true} : vector<8x1xf32> -> vector<8x1xf32>
    %73 = vector.broadcast %72 : vector<8x1xf32> to vector<8x8xf32>
    %74 = arith.mulf %69, %73 : vector<8x8xf32>
    %75 = arith.truncf %74 : vector<8x8xf32> to vector<8x8xbf16>
    %cst_26 = arith.constant dense<0.000000e+00> : vector<8x8xf32>
    %76 = tpu.matmul %75, %63, %cst_26 {dimension_numbers = #tpu.dot_dimension_numbers<[1], [0], [0], [1], [0, 0, 1, 1], [], []>} : vector<8x8xbf16>, vector<8x8xbf16>, vector<8x8xf32> -> vector<8x8xf32>
    %77 = vector.extract_strided_slice %11 {offsets = [0, 24], sizes = [8, 8], strides = [1, 1]} : vector<8x32xf32> to vector<8x8xf32>
    %78 = arith.truncf %77 : vector<8x8xf32> to vector<8x8xbf16>
    %79 = vector.extract_strided_slice %18 {offsets = [0, 24], sizes = [8, 8], strides = [1, 1]} : vector<8x32xf32> to vector<8x8xf32>
    %80 = arith.truncf %79 : vector<8x8xf32> to vector<8x8xbf16>
    %81 = vector.extract_strided_slice %19 {offsets = [0, 24], sizes = [8, 8], strides = [1, 1]} : vector<8x32xf32> to vector<8x8xf32>
    %82 = arith.truncf %81 : vector<8x8xf32> to vector<8x8xbf16>
    %cst_27 = arith.constant dense<0.000000e+00> : vector<8x8xf32>
    %83 = tpu.matmul %78, %80, %cst_27 {dimension_numbers = #tpu.dot_dimension_numbers<[1], [1], [0], [0], [0, 0, 1, 0], [], []>} : vector<8x8xbf16>, vector<8x8xbf16>, vector<8x8xf32> -> vector<8x8xf32>
    %cst_28 = arith.constant dense<0xFF800000> : vector<8xf32>
    %84 = vector.multi_reduction <maximumf>, %83, %cst_28 [1] : vector<8x8xf32> to vector<8xf32>
    %85 = vector.shape_cast %84 : vector<8xf32> to vector<8x1xf32>
    %86 = vector.broadcast %85 : vector<8x1xf32> to vector<8x8xf32>
    %87 = arith.subf %83, %86 : vector<8x8xf32>
    %88 = math.exp %87 : vector<8x8xf32>
    %cst_29 = arith.constant dense<0.000000e+00> : vector<8xf32>
    %89 = vector.multi_reduction <add>, %88, %cst_29 [1] : vector<8x8xf32> to vector<8xf32>
    %90 = vector.shape_cast %89 : vector<8xf32> to vector<8x1xf32>
    %91 = tpu.reciprocal %90 {approx = true} : vector<8x1xf32> -> vector<8x1xf32>
    %92 = vector.broadcast %91 : vector<8x1xf32> to vector<8x8xf32>
    %93 = arith.mulf %88, %92 : vector<8x8xf32>
    %94 = arith.truncf %93 : vector<8x8xf32> to vector<8x8xbf16>
    %cst_30 = arith.constant dense<0.000000e+00> : vector<8x8xf32>
    %95 = tpu.matmul %94, %82, %cst_30 {dimension_numbers = #tpu.dot_dimension_numbers<[1], [0], [0], [1], [0, 0, 1, 1], [], []>} : vector<8x8xbf16>, vector<8x8xbf16>, vector<8x8xf32> -> vector<8x8xf32>
    %96 = tpu.concatenate %38, %57, %76, %95 in 1 : vector<8x8xf32>, vector<8x8xf32>, vector<8x8xf32>, vector<8x8xf32> -> vector<8x32xf32>
    %97 = arith.truncf %96 : vector<8x32xf32> to vector<8x32xbf16>
    %c0_31 = arith.constant 0 : index
    %c0_32 = arith.constant 0 : index
    %98 = vector.load %arg7[%c0_31, %c0_32] : memref<32x32xbf16, #tpu.memory_space<vmem>>, vector<32x32xbf16>
    %cst_33 = arith.constant dense<0.000000e+00> : vector<8x32xf32>
    %99 = tpu.matmul %97, %98, %cst_33 {dimension_numbers = #tpu.dot_dimension_numbers<[1], [0], [0], [1], [0, 0, 1, 1], [], []>} : vector<8x32xbf16>, vector<32x32xbf16>, vector<8x32xf32> -> vector<8x32xf32>
    %c0_34 = arith.constant 0 : index
    %c0_35 = arith.constant 0 : index
    %100 = vector.load %arg8[%c0_34, %c0_35] : memref<1x32xf32, #tpu.memory_space<vmem>>, vector<1x32xf32>
    %101 = vector.broadcast %100 : vector<1x32xf32> to vector<8x32xf32>
    %102 = arith.addf %99, %101 : vector<8x32xf32>
    %103 = arith.addf %102, %1 : vector<8x32xf32>
    %cst_36 = arith.constant dense<0.000000e+00> : vector<8xf32>
    %104 = vector.multi_reduction <add>, %103, %cst_36 [1] : vector<8x32xf32> to vector<8xf32>
    %105 = vector.shape_cast %104 : vector<8xf32> to vector<8x1xf32>
    %cst_37 = arith.constant 3.200000e+01 : f32
    %106 = vector.broadcast %cst_37 : f32 to vector<8x1xf32>
    %107 = arith.divf %105, %106 : vector<8x1xf32>
    %108 = vector.broadcast %107 : vector<8x1xf32> to vector<8x32xf32>
    %109 = arith.subf %103, %108 : vector<8x32xf32>
    %110 = arith.mulf %109, %109 : vector<8x32xf32>
    %cst_38 = arith.constant dense<0.000000e+00> : vector<8xf32>
    %111 = vector.multi_reduction <add>, %110, %cst_38 [1] : vector<8x32xf32> to vector<8xf32>
    %112 = vector.shape_cast %111 : vector<8xf32> to vector<8x1xf32>
    %cst_39 = arith.constant 3.200000e+01 : f32
    %113 = vector.broadcast %cst_39 : f32 to vector<8x1xf32>
    %114 = arith.divf %112, %113 : vector<8x1xf32>
    %cst_40 = arith.constant 9.99999974E-6 : f32
    %115 = vector.broadcast %cst_40 : f32 to vector<8x1xf32>
    %116 = arith.addf %114, %115 : vector<8x1xf32>
    %117 = math.rsqrt %116 : vector<8x1xf32>
    %118 = vector.broadcast %117 : vector<8x1xf32> to vector<8x32xf32>
    %119 = arith.mulf %109, %118 : vector<8x32xf32>
    %c0_41 = arith.constant 0 : index
    %c0_42 = arith.constant 0 : index
    %120 = vector.load %arg9[%c0_41, %c0_42] : memref<1x32xf32, #tpu.memory_space<vmem>>, vector<1x32xf32>
    %121 = vector.broadcast %120 : vector<1x32xf32> to vector<8x32xf32>
    %122 = arith.mulf %119, %121 : vector<8x32xf32>
    %c0_43 = arith.constant 0 : index
    %c0_44 = arith.constant 0 : index
    %123 = vector.load %arg10[%c0_43, %c0_44] : memref<1x32xf32, #tpu.memory_space<vmem>>, vector<1x32xf32>
    %124 = vector.broadcast %123 : vector<1x32xf32> to vector<8x32xf32>
    %125 = arith.addf %122, %124 : vector<8x32xf32>
    %c0_45 = arith.constant 0 : index
    %c0_46 = arith.constant 0 : index
    %c0_47 = arith.constant 0 : index
    %126 = vector.load %arg11[%c0_45, %c0_46, %c0_47] : memref<1x8x32xf32, #tpu.memory_space<vmem>>, vector<1x8x32xf32>
    %127 = vector.shape_cast %126 : vector<1x8x32xf32> to vector<8x32xf32>
    %128 = vector.shape_cast %125 : vector<8x32xf32> to vector<1x8x32xf32>
    tpu.vector_store %arg11[%c0_45, %c0_46, %c0_47], %128 {strides = array<i32>} : memref<1x8x32xf32, #tpu.memory_space<vmem>>, vector<1x8x32xf32>,
    return
  }
  func.func @transform_0(%arg0: i32) -> (i32, i32, i32) {
    %c0_i32 = arith.constant 0 : i32
    %c0_i32_0 = arith.constant 0 : i32
    %c0_i32_1 = arith.constant 0 : i32
    return %arg0, %c0_i32, %c0_i32_0 : i32, i32, i32
  }
  func.func @transform_1(%arg0: i32) -> (i32, i32, i32) {
    %c0_i32 = arith.constant 0 : i32
    %c0_i32_0 = arith.constant 0 : i32
    %c0_i32_1 = arith.constant 0 : i32
    return %arg0, %c0_i32, %c0_i32_0 : i32, i32, i32
  }
  func.func @transform_2(%arg0: i32) -> (i32, i32) {
    %c0_i32 = arith.constant 0 : i32
    %c0_i32_0 = arith.constant 0 : i32
    %c0_i32_1 = arith.constant 0 : i32
    return %c0_i32, %c0_i32_0 : i32, i32
  }
  func.func @transform_3(%arg0: i32) -> (i32, i32) {
    %c0_i32 = arith.constant 0 : i32
    %c0_i32_0 = arith.constant 0 : i32
    %c0_i32_1 = arith.constant 0 : i32
    return %c0_i32, %c0_i32_0 : i32, i32
  }
  func.func @transform_4(%arg0: i32) -> (i32, i32) {
    %c0_i32 = arith.constant 0 : i32
    %c0_i32_0 = arith.constant 0 : i32
    %c0_i32_1 = arith.constant 0 : i32
    return %c0_i32, %c0_i32_0 : i32, i32
  }
  func.func @transform_5(%arg0: i32) -> (i32, i32) {
    %c0_i32 = arith.constant 0 : i32
    %c0_i32_0 = arith.constant 0 : i32
    %c0_i32_1 = arith.constant 0 : i32
    return %c0_i32, %c0_i32_0 : i32, i32
  }
  func.func @transform_6(%arg0: i32) -> (i32, i32) {
    %c0_i32 = arith.constant 0 : i32
    %c0_i32_0 = arith.constant 0 : i32
    %c0_i32_1 = arith.constant 0 : i32
    return %c0_i32, %c0_i32_0 : i32, i32
  }
  func.func @transform_7(%arg0: i32) -> (i32, i32) {
    %c0_i32 = arith.constant 0 : i32
    %c0_i32_0 = arith.constant 0 : i32
    %c0_i32_1 = arith.constant 0 : i32
    return %c0_i32, %c0_i32_0 : i32, i32
  }
  func.func @transform_8(%arg0: i32) -> (i32, i32) {
    %c0_i32 = arith.constant 0 : i32
    %c0_i32_0 = arith.constant 0 : i32
    %c0_i32_1 = arith.constant 0 : i32
    return %c0_i32, %c0_i32_0 : i32, i32
  }
  func.func @transform_9(%arg0: i32) -> (i32, i32) {
    %c0_i32 = arith.constant 0 : i32
    %c0_i32_0 = arith.constant 0 : i32
    %c0_i32_1 = arith.constant 0 : i32
    return %c0_i32, %c0_i32_0 : i32, i32
  }
  func.func @transform_10(%arg0: i32) -> (i32, i32, i32) {
    %c0_i32 = arith.constant 0 : i32
    %c0_i32_0 = arith.constant 0 : i32
    %c0_i32_1 = arith.constant 0 : i32
    return %arg0, %c0_i32, %c0_i32_0 : i32, i32, i32
  }
}

module attributes {stable_mosaic.version = 11 : i64} {
  func.func @_self_attn_block_kernel(%arg0: i32, %arg1: memref<1x8x32xf32, #tpu.memory_space<vmem>>, %arg2: memref<32x96xbf16, #tpu.memory_space<vmem>>, %arg3: memref<1x96xf32, #tpu.memory_space<vmem>>, %arg4: memref<32x32xbf16, #tpu.memory_space<vmem>>, %arg5: memref<1x32xf32, #tpu.memory_space<vmem>>, %arg6: memref<1x32xf32, #tpu.memory_space<vmem>>, %arg7: memref<1x32xf32, #tpu.memory_space<vmem>>, %arg8: memref<1x8x32xf32, #tpu.memory_space<vmem>>) attributes {dimension_semantics = [#tpu.dimension_semantics<parallel>], iteration_bounds = array<i64: 2>, scalar_prefetch = 0 : i64, scratch_operands = 0 : i64, tpu.core_type = #tpu.core_type<tc>, window_params = [{transform_indices = @transform_0, window_bounds = array<i64: 1, 8, 32>}, {pipeline_mode = #tpu.pipeline_mode<synchronous>, transform_indices = @transform_1, window_bounds = array<i64: 32, 96>}, {pipeline_mode = #tpu.pipeline_mode<synchronous>, transform_indices = @transform_2, window_bounds = array<i64: 1, 96>}, {pipeline_mode = #tpu.pipeline_mode<synchronous>, transform_indices = @transform_3, window_bounds = array<i64: 32, 32>}, {pipeline_mode = #tpu.pipeline_mode<synchronous>, transform_indices = @transform_4, window_bounds = array<i64: 1, 32>}, {pipeline_mode = #tpu.pipeline_mode<synchronous>, transform_indices = @transform_5, window_bounds = array<i64: 1, 32>}, {pipeline_mode = #tpu.pipeline_mode<synchronous>, transform_indices = @transform_6, window_bounds = array<i64: 1, 32>}, {transform_indices = @transform_7, window_bounds = array<i64: 1, 8, 32>}]} {
    %c0 = arith.constant 0 : index
    %c0_0 = arith.constant 0 : index
    %c0_1 = arith.constant 0 : index
    %0 = vector.load %arg1[%c0, %c0_0, %c0_1] : memref<1x8x32xf32, #tpu.memory_space<vmem>>, vector<1x8x32xf32>
    %1 = vector.shape_cast %0 : vector<1x8x32xf32> to vector<8x32xf32>
    %2 = arith.truncf %1 : vector<8x32xf32> to vector<8x32xbf16>
    %c0_2 = arith.constant 0 : index
    %c0_3 = arith.constant 0 : index
    %3 = vector.load %arg2[%c0_2, %c0_3] : memref<32x96xbf16, #tpu.memory_space<vmem>>, vector<32x96xbf16>
    %cst = arith.constant dense<0.000000e+00> : vector<8x96xf32>
    %4 = tpu.matmul %2, %3, %cst {dimension_numbers = #tpu.dot_dimension_numbers<[1], [0], [0], [1], [0, 0, 1, 1], [], []>} : vector<8x32xbf16>, vector<32x96xbf16>, vector<8x96xf32> -> vector<8x96xf32>
    %c0_4 = arith.constant 0 : index
    %c0_5 = arith.constant 0 : index
    %5 = vector.load %arg3[%c0_4, %c0_5] : memref<1x96xf32, #tpu.memory_space<vmem>>, vector<1x96xf32>
    %6 = vector.broadcast %5 : vector<1x96xf32> to vector<8x96xf32>
    %7 = arith.addf %4, %6 : vector<8x96xf32>
    %8 = vector.extract_strided_slice %7 {offsets = [0, 0], sizes = [8, 32], strides = [1, 1]} : vector<8x96xf32> to vector<8x32xf32>
    %cst_6 = arith.constant 0.353553385 : f32
    %9 = vector.broadcast %cst_6 : f32 to vector<8x32xf32>
    %10 = arith.mulf %8, %9 : vector<8x32xf32>
    %11 = vector.extract_strided_slice %7 {offsets = [0, 32], sizes = [8, 32], strides = [1, 1]} : vector<8x96xf32> to vector<8x32xf32>
    %12 = vector.extract_strided_slice %7 {offsets = [0, 64], sizes = [8, 32], strides = [1, 1]} : vector<8x96xf32> to vector<8x32xf32>
    %13 = tpu.iota {dimensions = array<i32: 0>} : vector<8x8xi32>
    %14 = tpu.iota {dimensions = array<i32: 1>} : vector<8x8xi32>
    %15 = arith.cmpi sgt, %14, %13 : vector<8x8xi32>
    %cst_7 = arith.constant -1.000000e+09 : f32
    %cst_8 = arith.constant 0.000000e+00 : f32
    %16 = vector.broadcast %cst_7 : f32 to vector<8x8xf32>
    %17 = vector.broadcast %cst_8 : f32 to vector<8x8xf32>
    %18 = arith.select %15, %16, %17 : vector<8x8xi1>, vector<8x8xf32>
    %19 = vector.extract_strided_slice %10 {offsets = [0, 0], sizes = [8, 8], strides = [1, 1]} : vector<8x32xf32> to vector<8x8xf32>
    %20 = arith.truncf %19 : vector<8x8xf32> to vector<8x8xbf16>
    %21 = vector.extract_strided_slice %11 {offsets = [0, 0], sizes = [8, 8], strides = [1, 1]} : vector<8x32xf32> to vector<8x8xf32>
    %22 = arith.truncf %21 : vector<8x8xf32> to vector<8x8xbf16>
    %23 = vector.extract_strided_slice %12 {offsets = [0, 0], sizes = [8, 8], strides = [1, 1]} : vector<8x32xf32> to vector<8x8xf32>
    %24 = arith.truncf %23 : vector<8x8xf32> to vector<8x8xbf16>
    %cst_9 = arith.constant dense<0.000000e+00> : vector<8x8xf32>
    %25 = tpu.matmul %20, %22, %cst_9 {dimension_numbers = #tpu.dot_dimension_numbers<[1], [1], [0], [0], [0, 0, 1, 0], [], []>} : vector<8x8xbf16>, vector<8x8xbf16>, vector<8x8xf32> -> vector<8x8xf32>
    %26 = arith.addf %25, %18 : vector<8x8xf32>
    %cst_10 = arith.constant dense<0xFF800000> : vector<8xf32>
    %27 = vector.multi_reduction <maximumf>, %26, %cst_10 [1] : vector<8x8xf32> to vector<8xf32>
    %28 = vector.shape_cast %27 : vector<8xf32> to vector<8x1xf32>
    %29 = vector.broadcast %28 : vector<8x1xf32> to vector<8x8xf32>
    %30 = arith.subf %26, %29 : vector<8x8xf32>
    %31 = math.exp %30 : vector<8x8xf32>
    %cst_11 = arith.constant dense<0.000000e+00> : vector<8xf32>
    %32 = vector.multi_reduction <add>, %31, %cst_11 [1] : vector<8x8xf32> to vector<8xf32>
    %33 = vector.shape_cast %32 : vector<8xf32> to vector<8x1xf32>
    %34 = tpu.reciprocal %33 {approx = true} : vector<8x1xf32> -> vector<8x1xf32>
    %35 = vector.broadcast %34 : vector<8x1xf32> to vector<8x8xf32>
    %36 = arith.mulf %31, %35 : vector<8x8xf32>
    %37 = arith.truncf %36 : vector<8x8xf32> to vector<8x8xbf16>
    %cst_12 = arith.constant dense<0.000000e+00> : vector<8x8xf32>
    %38 = tpu.matmul %37, %24, %cst_12 {dimension_numbers = #tpu.dot_dimension_numbers<[1], [0], [0], [1], [0, 0, 1, 1], [], []>} : vector<8x8xbf16>, vector<8x8xbf16>, vector<8x8xf32> -> vector<8x8xf32>
    %39 = vector.extract_strided_slice %10 {offsets = [0, 8], sizes = [8, 8], strides = [1, 1]} : vector<8x32xf32> to vector<8x8xf32>
    %40 = arith.truncf %39 : vector<8x8xf32> to vector<8x8xbf16>
    %41 = vector.extract_strided_slice %11 {offsets = [0, 8], sizes = [8, 8], strides = [1, 1]} : vector<8x32xf32> to vector<8x8xf32>
    %42 = arith.truncf %41 : vector<8x8xf32> to vector<8x8xbf16>
    %43 = vector.extract_strided_slice %12 {offsets = [0, 8], sizes = [8, 8], strides = [1, 1]} : vector<8x32xf32> to vector<8x8xf32>
    %44 = arith.truncf %43 : vector<8x8xf32> to vector<8x8xbf16>
    %cst_13 = arith.constant dense<0.000000e+00> : vector<8x8xf32>
    %45 = tpu.matmul %40, %42, %cst_13 {dimension_numbers = #tpu.dot_dimension_numbers<[1], [1], [0], [0], [0, 0, 1, 0], [], []>} : vector<8x8xbf16>, vector<8x8xbf16>, vector<8x8xf32> -> vector<8x8xf32>
    %46 = arith.addf %45, %18 : vector<8x8xf32>
    %cst_14 = arith.constant dense<0xFF800000> : vector<8xf32>
    %47 = vector.multi_reduction <maximumf>, %46, %cst_14 [1] : vector<8x8xf32> to vector<8xf32>
    %48 = vector.shape_cast %47 : vector<8xf32> to vector<8x1xf32>
    %49 = vector.broadcast %48 : vector<8x1xf32> to vector<8x8xf32>
    %50 = arith.subf %46, %49 : vector<8x8xf32>
    %51 = math.exp %50 : vector<8x8xf32>
    %cst_15 = arith.constant dense<0.000000e+00> : vector<8xf32>
    %52 = vector.multi_reduction <add>, %51, %cst_15 [1] : vector<8x8xf32> to vector<8xf32>
    %53 = vector.shape_cast %52 : vector<8xf32> to vector<8x1xf32>
    %54 = tpu.reciprocal %53 {approx = true} : vector<8x1xf32> -> vector<8x1xf32>
    %55 = vector.broadcast %54 : vector<8x1xf32> to vector<8x8xf32>
    %56 = arith.mulf %51, %55 : vector<8x8xf32>
    %57 = arith.truncf %56 : vector<8x8xf32> to vector<8x8xbf16>
    %cst_16 = arith.constant dense<0.000000e+00> : vector<8x8xf32>
    %58 = tpu.matmul %57, %44, %cst_16 {dimension_numbers = #tpu.dot_dimension_numbers<[1], [0], [0], [1], [0, 0, 1, 1], [], []>} : vector<8x8xbf16>, vector<8x8xbf16>, vector<8x8xf32> -> vector<8x8xf32>
    %59 = vector.extract_strided_slice %10 {offsets = [0, 16], sizes = [8, 8], strides = [1, 1]} : vector<8x32xf32> to vector<8x8xf32>
    %60 = arith.truncf %59 : vector<8x8xf32> to vector<8x8xbf16>
    %61 = vector.extract_strided_slice %11 {offsets = [0, 16], sizes = [8, 8], strides = [1, 1]} : vector<8x32xf32> to vector<8x8xf32>
    %62 = arith.truncf %61 : vector<8x8xf32> to vector<8x8xbf16>
    %63 = vector.extract_strided_slice %12 {offsets = [0, 16], sizes = [8, 8], strides = [1, 1]} : vector<8x32xf32> to vector<8x8xf32>
    %64 = arith.truncf %63 : vector<8x8xf32> to vector<8x8xbf16>
    %cst_17 = arith.constant dense<0.000000e+00> : vector<8x8xf32>
    %65 = tpu.matmul %60, %62, %cst_17 {dimension_numbers = #tpu.dot_dimension_numbers<[1], [1], [0], [0], [0, 0, 1, 0], [], []>} : vector<8x8xbf16>, vector<8x8xbf16>, vector<8x8xf32> -> vector<8x8xf32>
    %66 = arith.addf %65, %18 : vector<8x8xf32>
    %cst_18 = arith.constant dense<0xFF800000> : vector<8xf32>
    %67 = vector.multi_reduction <maximumf>, %66, %cst_18 [1] : vector<8x8xf32> to vector<8xf32>
    %68 = vector.shape_cast %67 : vector<8xf32> to vector<8x1xf32>
    %69 = vector.broadcast %68 : vector<8x1xf32> to vector<8x8xf32>
    %70 = arith.subf %66, %69 : vector<8x8xf32>
    %71 = math.exp %70 : vector<8x8xf32>
    %cst_19 = arith.constant dense<0.000000e+00> : vector<8xf32>
    %72 = vector.multi_reduction <add>, %71, %cst_19 [1] : vector<8x8xf32> to vector<8xf32>
    %73 = vector.shape_cast %72 : vector<8xf32> to vector<8x1xf32>
    %74 = tpu.reciprocal %73 {approx = true} : vector<8x1xf32> -> vector<8x1xf32>
    %75 = vector.broadcast %74 : vector<8x1xf32> to vector<8x8xf32>
    %76 = arith.mulf %71, %75 : vector<8x8xf32>
    %77 = arith.truncf %76 : vector<8x8xf32> to vector<8x8xbf16>
    %cst_20 = arith.constant dense<0.000000e+00> : vector<8x8xf32>
    %78 = tpu.matmul %77, %64, %cst_20 {dimension_numbers = #tpu.dot_dimension_numbers<[1], [0], [0], [1], [0, 0, 1, 1], [], []>} : vector<8x8xbf16>, vector<8x8xbf16>, vector<8x8xf32> -> vector<8x8xf32>
    %79 = vector.extract_strided_slice %10 {offsets = [0, 24], sizes = [8, 8], strides = [1, 1]} : vector<8x32xf32> to vector<8x8xf32>
    %80 = arith.truncf %79 : vector<8x8xf32> to vector<8x8xbf16>
    %81 = vector.extract_strided_slice %11 {offsets = [0, 24], sizes = [8, 8], strides = [1, 1]} : vector<8x32xf32> to vector<8x8xf32>
    %82 = arith.truncf %81 : vector<8x8xf32> to vector<8x8xbf16>
    %83 = vector.extract_strided_slice %12 {offsets = [0, 24], sizes = [8, 8], strides = [1, 1]} : vector<8x32xf32> to vector<8x8xf32>
    %84 = arith.truncf %83 : vector<8x8xf32> to vector<8x8xbf16>
    %cst_21 = arith.constant dense<0.000000e+00> : vector<8x8xf32>
    %85 = tpu.matmul %80, %82, %cst_21 {dimension_numbers = #tpu.dot_dimension_numbers<[1], [1], [0], [0], [0, 0, 1, 0], [], []>} : vector<8x8xbf16>, vector<8x8xbf16>, vector<8x8xf32> -> vector<8x8xf32>
    %86 = arith.addf %85, %18 : vector<8x8xf32>
    %cst_22 = arith.constant dense<0xFF800000> : vector<8xf32>
    %87 = vector.multi_reduction <maximumf>, %86, %cst_22 [1] : vector<8x8xf32> to vector<8xf32>
    %88 = vector.shape_cast %87 : vector<8xf32> to vector<8x1xf32>
    %89 = vector.broadcast %88 : vector<8x1xf32> to vector<8x8xf32>
    %90 = arith.subf %86, %89 : vector<8x8xf32>
    %91 = math.exp %90 : vector<8x8xf32>
    %cst_23 = arith.constant dense<0.000000e+00> : vector<8xf32>
    %92 = vector.multi_reduction <add>, %91, %cst_23 [1] : vector<8x8xf32> to vector<8xf32>
    %93 = vector.shape_cast %92 : vector<8xf32> to vector<8x1xf32>
    %94 = tpu.reciprocal %93 {approx = true} : vector<8x1xf32> -> vector<8x1xf32>
    %95 = vector.broadcast %94 : vector<8x1xf32> to vector<8x8xf32>
    %96 = arith.mulf %91, %95 : vector<8x8xf32>
    %97 = arith.truncf %96 : vector<8x8xf32> to vector<8x8xbf16>
    %cst_24 = arith.constant dense<0.000000e+00> : vector<8x8xf32>
    %98 = tpu.matmul %97, %84, %cst_24 {dimension_numbers = #tpu.dot_dimension_numbers<[1], [0], [0], [1], [0, 0, 1, 1], [], []>} : vector<8x8xbf16>, vector<8x8xbf16>, vector<8x8xf32> -> vector<8x8xf32>
    %99 = tpu.concatenate %38, %58, %78, %98 in 1 : vector<8x8xf32>, vector<8x8xf32>, vector<8x8xf32>, vector<8x8xf32> -> vector<8x32xf32>
    %100 = arith.truncf %99 : vector<8x32xf32> to vector<8x32xbf16>
    %c0_25 = arith.constant 0 : index
    %c0_26 = arith.constant 0 : index
    %101 = vector.load %arg4[%c0_25, %c0_26] : memref<32x32xbf16, #tpu.memory_space<vmem>>, vector<32x32xbf16>
    %cst_27 = arith.constant dense<0.000000e+00> : vector<8x32xf32>
    %102 = tpu.matmul %100, %101, %cst_27 {dimension_numbers = #tpu.dot_dimension_numbers<[1], [0], [0], [1], [0, 0, 1, 1], [], []>} : vector<8x32xbf16>, vector<32x32xbf16>, vector<8x32xf32> -> vector<8x32xf32>
    %c0_28 = arith.constant 0 : index
    %c0_29 = arith.constant 0 : index
    %103 = vector.load %arg5[%c0_28, %c0_29] : memref<1x32xf32, #tpu.memory_space<vmem>>, vector<1x32xf32>
    %104 = vector.broadcast %103 : vector<1x32xf32> to vector<8x32xf32>
    %105 = arith.addf %102, %104 : vector<8x32xf32>
    %106 = arith.addf %105, %1 : vector<8x32xf32>
    %cst_30 = arith.constant dense<0.000000e+00> : vector<8xf32>
    %107 = vector.multi_reduction <add>, %106, %cst_30 [1] : vector<8x32xf32> to vector<8xf32>
    %108 = vector.shape_cast %107 : vector<8xf32> to vector<8x1xf32>
    %cst_31 = arith.constant 3.200000e+01 : f32
    %109 = vector.broadcast %cst_31 : f32 to vector<8x1xf32>
    %110 = arith.divf %108, %109 : vector<8x1xf32>
    %111 = vector.broadcast %110 : vector<8x1xf32> to vector<8x32xf32>
    %112 = arith.subf %106, %111 : vector<8x32xf32>
    %113 = arith.mulf %112, %112 : vector<8x32xf32>
    %cst_32 = arith.constant dense<0.000000e+00> : vector<8xf32>
    %114 = vector.multi_reduction <add>, %113, %cst_32 [1] : vector<8x32xf32> to vector<8xf32>
    %115 = vector.shape_cast %114 : vector<8xf32> to vector<8x1xf32>
    %cst_33 = arith.constant 3.200000e+01 : f32
    %116 = vector.broadcast %cst_33 : f32 to vector<8x1xf32>
    %117 = arith.divf %115, %116 : vector<8x1xf32>
    %cst_34 = arith.constant 9.99999974E-6 : f32
    %118 = vector.broadcast %cst_34 : f32 to vector<8x1xf32>
    %119 = arith.addf %117, %118 : vector<8x1xf32>
    %120 = math.rsqrt %119 : vector<8x1xf32>
    %121 = vector.broadcast %120 : vector<8x1xf32> to vector<8x32xf32>
    %122 = arith.mulf %112, %121 : vector<8x32xf32>
    %c0_35 = arith.constant 0 : index
    %c0_36 = arith.constant 0 : index
    %123 = vector.load %arg6[%c0_35, %c0_36] : memref<1x32xf32, #tpu.memory_space<vmem>>, vector<1x32xf32>
    %124 = vector.broadcast %123 : vector<1x32xf32> to vector<8x32xf32>
    %125 = arith.mulf %122, %124 : vector<8x32xf32>
    %c0_37 = arith.constant 0 : index
    %c0_38 = arith.constant 0 : index
    %126 = vector.load %arg7[%c0_37, %c0_38] : memref<1x32xf32, #tpu.memory_space<vmem>>, vector<1x32xf32>
    %127 = vector.broadcast %126 : vector<1x32xf32> to vector<8x32xf32>
    %128 = arith.addf %125, %127 : vector<8x32xf32>
    %c0_39 = arith.constant 0 : index
    %c0_40 = arith.constant 0 : index
    %c0_41 = arith.constant 0 : index
    %129 = vector.load %arg8[%c0_39, %c0_40, %c0_41] : memref<1x8x32xf32, #tpu.memory_space<vmem>>, vector<1x8x32xf32>
    %130 = vector.shape_cast %129 : vector<1x8x32xf32> to vector<8x32xf32>
    %131 = vector.shape_cast %128 : vector<8x32xf32> to vector<1x8x32xf32>
    tpu.vector_store %arg8[%c0_39, %c0_40, %c0_41], %131 {strides = array<i32>} : memref<1x8x32xf32, #tpu.memory_space<vmem>>, vector<1x8x32xf32>,
    return
  }
  func.func @transform_0(%arg0: i32) -> (i32, i32, i32) {
    %c0_i32 = arith.constant 0 : i32
    %c0_i32_0 = arith.constant 0 : i32
    %c0_i32_1 = arith.constant 0 : i32
    return %arg0, %c0_i32, %c0_i32_0 : i32, i32, i32
  }
  func.func @transform_1(%arg0: i32) -> (i32, i32) {
    %c0_i32 = arith.constant 0 : i32
    %c0_i32_0 = arith.constant 0 : i32
    %c0_i32_1 = arith.constant 0 : i32
    return %c0_i32, %c0_i32_0 : i32, i32
  }
  func.func @transform_2(%arg0: i32) -> (i32, i32) {
    %c0_i32 = arith.constant 0 : i32
    %c0_i32_0 = arith.constant 0 : i32
    %c0_i32_1 = arith.constant 0 : i32
    return %c0_i32, %c0_i32_0 : i32, i32
  }
  func.func @transform_3(%arg0: i32) -> (i32, i32) {
    %c0_i32 = arith.constant 0 : i32
    %c0_i32_0 = arith.constant 0 : i32
    %c0_i32_1 = arith.constant 0 : i32
    return %c0_i32, %c0_i32_0 : i32, i32
  }
  func.func @transform_4(%arg0: i32) -> (i32, i32) {
    %c0_i32 = arith.constant 0 : i32
    %c0_i32_0 = arith.constant 0 : i32
    %c0_i32_1 = arith.constant 0 : i32
    return %c0_i32, %c0_i32_0 : i32, i32
  }
  func.func @transform_5(%arg0: i32) -> (i32, i32) {
    %c0_i32 = arith.constant 0 : i32
    %c0_i32_0 = arith.constant 0 : i32
    %c0_i32_1 = arith.constant 0 : i32
    return %c0_i32, %c0_i32_0 : i32, i32
  }
  func.func @transform_6(%arg0: i32) -> (i32, i32) {
    %c0_i32 = arith.constant 0 : i32
    %c0_i32_0 = arith.constant 0 : i32
    %c0_i32_1 = arith.constant 0 : i32
    return %c0_i32, %c0_i32_0 : i32, i32
  }
  func.func @transform_7(%arg0: i32) -> (i32, i32, i32) {
    %c0_i32 = arith.constant 0 : i32
    %c0_i32_0 = arith.constant 0 : i32
    %c0_i32_1 = arith.constant 0 : i32
    return %arg0, %c0_i32, %c0_i32_0 : i32, i32, i32
  }
}

module attributes {stable_mosaic.version = 11 : i64} {
  func.func @_matmul_logsoftmax_kernel(%arg0: i32, %arg1: i32, %arg2: memref<16x32xf32, #tpu.memory_space<vmem>>, %arg3: memref<32x128xbf16, #tpu.memory_space<vmem>>, %arg4: memref<1x128xf32, #tpu.memory_space<vmem>>, %arg5: memref<16x128xf32, #tpu.memory_space<vmem>>, %arg6: memref<16x128xf32, #tpu.memory_space<vmem>>) attributes {dimension_semantics = [#tpu.dimension_semantics<parallel>, #tpu.dimension_semantics<arbitrary>], iteration_bounds = array<i64: 1, 1>, scalar_prefetch = 0 : i64, scratch_operands = 1 : i64, tpu.core_type = #tpu.core_type<tc>, window_params = [{transform_indices = @transform_0, window_bounds = array<i64: 16, 32>}, {transform_indices = @transform_1, window_bounds = array<i64: 32, 128>}, {pipeline_mode = #tpu.pipeline_mode<synchronous>, transform_indices = @transform_2, window_bounds = array<i64: 1, 128>}, {transform_indices = @transform_3, window_bounds = array<i64: 16, 128>}]} {
    %c0_i32 = arith.constant 0 : i32
    %0 = arith.cmpi eq, %arg1, %c0_i32 : i32
    %1 = arith.extui %0 : i1 to i32
    %c0_i32_0 = arith.constant 0 : i32
    %2 = arith.cmpi ne, %1, %c0_i32_0 : i32
    scf.if %2 {
      %cst_10 = arith.constant 0.000000e+00 : f32
      %13 = vector.broadcast %cst_10 : f32 to vector<16x128xf32>
      %c0_11 = arith.constant 0 : index
      %c0_12 = arith.constant 0 : index
      %14 = vector.load %arg6[%c0_11, %c0_12] : memref<16x128xf32, #tpu.memory_space<vmem>>, vector<16x128xf32>
      tpu.vector_store %arg6[%c0_11, %c0_12], %13 {strides = array<i32>} : memref<16x128xf32, #tpu.memory_space<vmem>>, vector<16x128xf32>,
    } else {
    }
    %c0 = arith.constant 0 : index
    %c0_1 = arith.constant 0 : index
    %3 = vector.load %arg6[%c0, %c0_1] : memref<16x128xf32, #tpu.memory_space<vmem>>, vector<16x128xf32>
    %c0_2 = arith.constant 0 : index
    %c0_3 = arith.constant 0 : index
    %4 = vector.load %arg2[%c0_2, %c0_3] : memref<16x32xf32, #tpu.memory_space<vmem>>, vector<16x32xf32>
    %5 = arith.truncf %4 : vector<16x32xf32> to vector<16x32xbf16>
    %c0_4 = arith.constant 0 : index
    %c0_5 = arith.constant 0 : index
    %6 = vector.load %arg3[%c0_4, %c0_5] : memref<32x128xbf16, #tpu.memory_space<vmem>>, vector<32x128xbf16>
    %cst = arith.constant dense<0.000000e+00> : vector<16x128xf32>
    %7 = tpu.matmul %5, %6, %cst {dimension_numbers = #tpu.dot_dimension_numbers<[1], [0], [0], [1], [0, 0, 1, 1], [], []>} : vector<16x32xbf16>, vector<32x128xbf16>, vector<16x128xf32> -> vector<16x128xf32>
    %8 = arith.addf %3, %7 : vector<16x128xf32>
    %c0_6 = arith.constant 0 : index
    %c0_7 = arith.constant 0 : index
    %9 = vector.load %arg6[%c0_6, %c0_7] : memref<16x128xf32, #tpu.memory_space<vmem>>, vector<16x128xf32>
    tpu.vector_store %arg6[%c0_6, %c0_7], %8 {strides = array<i32>} : memref<16x128xf32, #tpu.memory_space<vmem>>, vector<16x128xf32>,
    %c0_i32_8 = arith.constant 0 : i32
    %10 = arith.cmpi eq, %arg1, %c0_i32_8 : i32
    %11 = arith.extui %10 : i1 to i32
    %c0_i32_9 = arith.constant 0 : i32
    %12 = arith.cmpi ne, %11, %c0_i32_9 : i32
    scf.if %12 {
      %c0_10 = arith.constant 0 : index
      %c0_11 = arith.constant 0 : index
      %13 = vector.load %arg6[%c0_10, %c0_11] : memref<16x128xf32, #tpu.memory_space<vmem>>, vector<16x128xf32>
      %c0_12 = arith.constant 0 : index
      %c0_13 = arith.constant 0 : index
      %14 = vector.load %arg4[%c0_12, %c0_13] : memref<1x128xf32, #tpu.memory_space<vmem>>, vector<1x128xf32>
      %15 = vector.broadcast %14 : vector<1x128xf32> to vector<16x128xf32>
      %16 = arith.addf %13, %15 : vector<16x128xf32>
      %cst_14 = arith.constant dense<0xFF800000> : vector<16xf32>
      %17 = vector.multi_reduction <maximumf>, %16, %cst_14 [1] : vector<16x128xf32> to vector<16xf32>
      %18 = vector.shape_cast %17 : vector<16xf32> to vector<16x1xf32>
      %19 = vector.broadcast %18 : vector<16x1xf32> to vector<16x128xf32>
      %20 = arith.subf %16, %19 : vector<16x128xf32>
      %21 = math.exp %20 : vector<16x128xf32>
      %cst_15 = arith.constant dense<0.000000e+00> : vector<16xf32>
      %22 = vector.multi_reduction <add>, %21, %cst_15 [1] : vector<16x128xf32> to vector<16xf32>
      %23 = vector.shape_cast %22 : vector<16xf32> to vector<16x1xf32>
      %24 = math.log %23 : vector<16x1xf32>
      %25 = vector.broadcast %24 : vector<16x1xf32> to vector<16x128xf32>
      %26 = arith.subf %20, %25 : vector<16x128xf32>
      %c0_16 = arith.constant 0 : index
      %c0_17 = arith.constant 0 : index
      %27 = vector.load %arg5[%c0_16, %c0_17] : memref<16x128xf32, #tpu.memory_space<vmem>>, vector<16x128xf32>
      tpu.vector_store %arg5[%c0_16, %c0_17], %26 {strides = array<i32>} : memref<16x128xf32, #tpu.memory_space<vmem>>, vector<16x128xf32>,
    } else {
    }
    return
  }
  func.func @transform_0(%arg0: i32, %arg1: i32) -> (i32, i32) {
    %c0_i32 = arith.constant 0 : i32
    return %arg0, %arg1 : i32, i32
  }
  func.func @transform_1(%arg0: i32, %arg1: i32) -> (i32, i32) {
    %c0_i32 = arith.constant 0 : i32
    %c0_i32_0 = arith.constant 0 : i32
    return %arg1, %c0_i32 : i32, i32
  }
  func.func @transform_2(%arg0: i32, %arg1: i32) -> (i32, i32) {
    %c0_i32 = arith.constant 0 : i32
    %c0_i32_0 = arith.constant 0 : i32
    %c0_i32_1 = arith.constant 0 : i32
    return %c0_i32, %c0_i32_0 : i32, i32
  }
  func.func @transform_3(%arg0: i32, %arg1: i32) -> (i32, i32) {
    %c0_i32 = arith.constant 0 : i32
    %c0_i32_0 = arith.constant 0 : i32
    return %arg0, %c0_i32 : i32, i32
  }
}

</mosaic_0001>

<llo_original>
// kernel: transformer_forward.12
$region0: #{transformer_forward.12}
  #allocation0 [shape = 'u32[]', space=smem, size = 0x4, offset = 0x4, fixed_abs, tag = 'smem constant byte address 0x4 - core index']
  #allocation1 [shape = 'u32[144,128]{1,0:T(1,128)}', space=vmem, size = 0x12000, scoped, tag = 'internal scratch']
  %s0 = inlined_call_operand.vmem [shape: f32[16,32], index: 0, kind: input, shape index: {}]
  %s1 = inlined_call_operand.vmem [shape: bf16[32,64], index: 1, kind: input, shape index: {}]
  %s2 = inlined_call_operand.vmem [shape: f32[1,64], index: 2, kind: input, shape index: {}]
  %s3 = inlined_call_operand.vmem [shape: bf16[64,32], index: 3, kind: input, shape index: {}]
  %s4 = inlined_call_operand.vmem [shape: f32[1,32], index: 4, kind: input, shape index: {}]
  %s5 = inlined_call_operand.vmem [shape: f32[1,32], index: 5, kind: input, shape index: {}]
  %s6 = inlined_call_operand.vmem [shape: f32[1,32], index: 6, kind: input, shape index: {}]
  %s7 = inlined_call_operand.vmem [shape: f32[16,32], index: 7, kind: output, shape index: {}]
  %s8 = sld [smem:[#allocation0]]
  $region38: #{transformer_forward.12} parent=0
    _
  %s10 = ssub.s32 1, %s8
  %s11 = scalar_select 0, %s10, %s8
  // Predicated region
  $region2: #{transformer_forward.12} parent=0 // pred_check
    _
  $region3: #{transformer_forward.12} parent=0 // pred_check_branch
    %13 = sbr.rel (0) target = $region5
  $region4: #{transformer_forward.12} parent=0 // pred_region
    _
  $region5: #{transformer_forward.12} parent=0 // pred_fallthru
    _
  // Predicated region
  $region6: #{transformer_forward.12} parent=0 // pred_check
    _
  $region7: #{transformer_forward.12} parent=0 // pred_check_branch
    %15 = sbr.rel (0) target = $region9
  $region8: #{transformer_forward.12} parent=0 // pred_region
    _
  $region9: #{transformer_forward.12} parent=0 // pred_fallthru
    _
  // Predicated region
  $region10: #{transformer_forward.12} parent=0 // pred_check
    _
  $region11: #{transformer_forward.12} parent=0 // pred_check_branch
    %17 = sbr.rel (0) target = $region13
  $region12: #{transformer_forward.12} parent=0 // pred_region
    _
  $region13: #{transformer_forward.12} parent=0 // pred_fallthru
    _
  // Predicated region
  $region14: #{transformer_forward.12} parent=0 // pred_check
    _
  $region15: #{transformer_forward.12} parent=0 // pred_check_branch
    %19 = sbr.rel (0) target = $region17
  $region16: #{transformer_forward.12} parent=0 // pred_region
    _
  $region17: #{transformer_forward.12} parent=0 // pred_fallthru
    _
  // Predicated region
  $region18: #{transformer_forward.12} parent=0 // pred_check
    _
  $region19: #{transformer_forward.12} parent=0 // pred_check_branch
    %21 = sbr.rel (0) target = $region21
  $region20: #{transformer_forward.12} parent=0 // pred_region
    _
  $region21: #{transformer_forward.12} parent=0 // pred_fallthru
    _
  // Predicated region
  $region22: #{transformer_forward.12} parent=0 // pred_check
    _
  $region23: #{transformer_forward.12} parent=0 // pred_check_branch
    %23 = sbr.rel (0) target = $region25
  $region24: #{transformer_forward.12} parent=0 // pred_region
    _
  $region25: #{transformer_forward.12} parent=0 // pred_fallthru
    _
  // Predicated region
  $region26: #{transformer_forward.12} parent=0 // pred_check
    _
  $region27: #{transformer_forward.12} parent=0 // pred_check_branch
    %25 = sbr.rel (0) target = $region29
  $region28: #{transformer_forward.12} parent=0 // pred_region
    _
  $region29: #{transformer_forward.12} parent=0 // pred_fallthru
    _
  %v27 = vld [vmem:[%s0] sm:$0xff]
  %v28 = vld [vmem:[%s0 + $0x8] sm:$0xff]
  %v29 = vpack.c.bf16 %v28, %v27
  %v30 = vld [vmem:[%s1] sm:$0xf]
  %v31 = vld [vmem:[%s1 + $0x4] sm:$0xf]
  %v32 = vld [vmem:[%s1 + $0x8] sm:$0xf]
  %v33 = vld [vmem:[%s1 + $0xc] sm:$0xf]
  %v34 = vld [vmem:[%s2] sm:$0x1]
  %v36 = vlaneseq
  %v37 = vshrl.u32 %v36, 7
  %v38 = vsub.s32 0, %v37
  %v39 = vrot.slane %v34, %v38
  %v45 = vunpack.c.l.b16 %v30
  %v46 = vunpack.c.l.b16 %v31
  %v47 = vunpack.c.l.b16 %v32
  %v48 = vunpack.c.l.b16 %v33
  %v49 = vpack.c.b16 %v46, %v45
  %v50 = vpack.c.b16 %v48, %v47
  %vm53 = vcmask 261120
  %v55 = vsel %vm53, %v29, 0
  %57 = vmatprep.subr.bf16.mxu0 0
  %58 = vmatpush1.bf16.msra.mxu0 %v49
  %59 = vmatprep.subr.bf16.mxu0 0
  %60 = vmatpush1.bf16.msra.mxu0 %v50
  %61 = vmatprep.subr.bf16.mxu0 0
  %62 = vmatpush1.bf16.msra.mxu0 0
  %63 = vmatprep.subr.bf16.mxu0 0
  %64 = vmatpush1.bf16.msra.mxu0 0
  %65 = vmatprep.subr.bf16.mxu0 0
  %66 = vmatpush1.bf16.msra.mxu0 0
  %67 = vmatprep.subr.bf16.mxu0 0
  %68 = vmatpush1.bf16.msra.mxu0 0
  %69 = vmatprep.subr.bf16.mxu0 0
  %70 = vmatpush1.bf16.msra.mxu0 0
  %71 = vmatprep.subr.bf16.mxu0 0
  %72 = vmatpush1.bf16.msra.mxu0 0
  %73 = vmatprep.subr.bf16.mxu0 0
  %74 = vmatpush1.bf16.msra.mxu0 0
  %75 = vmatprep.subr.bf16.mxu0 0
  %76 = vmatpush1.bf16.msra.mxu0 0
  %77 = vmatprep.subr.bf16.mxu0 0
  %78 = vmatpush1.bf16.msra.mxu0 0
  %79 = vmatprep.subr.bf16.mxu0 0
  %80 = vmatpush1.bf16.msra.mxu0 0
  %81 = vmatprep.subr.bf16.mxu0 0
  %82 = vmatpush1.bf16.msra.mxu0 0
  %83 = vmatprep.subr.bf16.mxu0 0
  %84 = vmatpush1.bf16.msra.mxu0 0
  %85 = vmatprep.subr.bf16.mxu0 0
  %86 = vmatpush1.bf16.msra.mxu0 0
  %87 = vmatprep.subr.bf16.mxu0 0
  %88 = vmatpush1.bf16.msra.mxu0 0
  %89 = vmatprep.mubr.bf16.mxu0 0
  %90 = vmatmul.mubr.bf16.gmra.mrb[0].mxu0 %v55
  %v91 = vpop.f32.mrb[0].mxu0
  %v92 = vadd.f32 %v39, %v91
  %v93 = vpop.f32.mrb[0].mxu0
  %v94 = vpop.f32.mrb[0].mxu0
  %v95 = vadd.f32 %v39, %v94
  %v96 = vpop.f32.mrb[0].mxu0
  %97 = vdwg.mxu0
  %v98 = vmax.f32 %v92, 0.0
  %v99 = vmax.f32 %v95, 0.0
  %v100 = vpack.c.bf16 %v99, %v98
  %v101 = vld [vmem:[%s3] sm:$0xf]
  %v102 = vld [vmem:[%s3 + $0x4] sm:$0xf]
  %v103 = vld [vmem:[%s3 + $0x8] sm:$0xf]
  %v104 = vld [vmem:[%s3 + $0xc] sm:$0xf]
  %v105 = vld [vmem:[%s3 + $0x10] sm:$0xf]
  %v106 = vld [vmem:[%s3 + $0x14] sm:$0xf]
  %v107 = vld [vmem:[%s3 + $0x18] sm:$0xf]
  %v108 = vld [vmem:[%s3 + $0x1c] sm:$0xf]
  %v109 = vld [vmem:[%s4] sm:$0x1]
  %v111 = vlaneseq
  %v112 = vshrl.u32 %v111, 7
  %v113 = vsub.s32 0, %v112
  %v114 = vrot.slane %v109, %v113
  %v124 = vunpack.c.l.b16 %v101
  %v125 = vunpack.c.l.b16 %v102
  %v126 = vunpack.c.l.b16 %v103
  %v127 = vunpack.c.l.b16 %v104
  %v128 = vunpack.c.l.b16 %v105
  %v129 = vunpack.c.l.b16 %v106
  %v130 = vunpack.c.l.b16 %v107
  %v131 = vunpack.c.l.b16 %v108
  %v132 = vpack.c.b16 %v125, %v124
  %v133 = vpack.c.b16 %v127, %v126
  %v134 = vpack.c.b16 %v129, %v128
  %v135 = vpack.c.b16 %v131, %v130
  %vm140 = vcmask 523264
  %v142 = vsel %vm140, %v100, 0
  %144 = vmatprep.subr.bf16.mxu0 0
  %145 = vmatpush1.bf16.msra.mxu0 %v132
  %146 = vmatprep.subr.bf16.mxu0 0
  %147 = vmatpush1.bf16.msra.mxu0 %v133
  %148 = vmatprep.subr.bf16.mxu0 0
  %149 = vmatpush1.bf16.msra.mxu0 %v134
  %150 = vmatprep.subr.bf16.mxu0 0
  %151 = vmatpush1.bf16.msra.mxu0 %v135
  %152 = vmatprep.subr.bf16.mxu0 0
  %153 = vmatpush1.bf16.msra.mxu0 0
  %154 = vmatprep.subr.bf16.mxu0 0
  %155 = vmatpush1.bf16.msra.mxu0 0
  %156 = vmatprep.subr.bf16.mxu0 0
  %157 = vmatpush1.bf16.msra.mxu0 0
  %158 = vmatprep.subr.bf16.mxu0 0
  %159 = vmatpush1.bf16.msra.mxu0 0
  %160 = vmatprep.subr.bf16.mxu0 0
  %161 = vmatpush1.bf16.msra.mxu0 0
  %162 = vmatprep.subr.bf16.mxu0 0
  %163 = vmatpush1.bf16.msra.mxu0 0
  %164 = vmatprep.subr.bf16.mxu0 0
  %165 = vmatpush1.bf16.msra.mxu0 0
  %166 = vmatprep.subr.bf16.mxu0 0
  %167 = vmatpush1.bf16.msra.mxu0 0
  %168 = vmatprep.subr.bf16.mxu0 0
  %169 = vmatpush1.bf16.msra.mxu0 0
  %170 = vmatprep.subr.bf16.mxu0 0
  %171 = vmatpush1.bf16.msra.mxu0 0
  %172 = vmatprep.subr.bf16.mxu0 0
  %173 = vmatpush1.bf16.msra.mxu0 0
  %174 = vmatprep.subr.bf16.mxu0 0
  %175 = vmatpush1.bf16.msra.mxu0 0
  %176 = vmatprep.mubr.bf16.mxu0 0
  %177 = vmatmul.mubr.bf16.gmra.mrb[0].mxu0 %v142
  %v178 = vpop.f32.mrb[0].mxu0
  %v179 = vadd.f32 %v114, %v178
  %v180 = vpop.f32.mrb[0].mxu0
  %v181 = vpop.f32.mrb[0].mxu0
  %v182 = vadd.f32 %v114, %v181
  %v183 = vpop.f32.mrb[0].mxu0
  %184 = vdwg.mxu0
  %v185 = vadd.f32 %v179, %v27
  %v186 = vadd.f32 %v182, %v28
  %v187 = vsel %vm53, %v185, 0.0
  %188 = vadd.xlane.f32.xlu0 %v187
  %v189 = vpop.xlane.xlu0 %188
  %v190 = vsel %vm53, %v186, 0.0
  %191 = vadd.xlane.f32.xlu0 %v190
  %v192 = vpop.xlane.xlu0 %191
  %v193 = vrcp.pop 32.0
  %v194 = vmul.f32 %v189, %v193
  %v195 = vmul.f32 %v192, %v193
  %v196 = vsub.f32 %v185, %v194
  %v197 = vsub.f32 %v186, %v195
  %v198 = vmul.f32 %v196, %v196
  %v199 = vmul.f32 %v197, %v197
  %v200 = vsel %vm53, %v198, 0.0
  %201 = vadd.xlane.f32.xlu0 %v200
  %v202 = vpop.xlane.xlu0 %201
  %v203 = vsel %vm53, %v199, 0.0
  %204 = vadd.xlane.f32.xlu0 %v203
  %v205 = vpop.xlane.xlu0 %204
  %v206 = vmul.f32 %v202, %v193
  %v207 = vmul.f32 %v205, %v193
  %v208 = vadd.f32 %v206, 1e-05
  %v209 = vadd.f32 %v207, 1e-05
  %v210 = vrsqrt.pop %v208
  %v211 = vrsqrt.pop %v209
  %v212 = vmul.f32 %v196, %v210
  %v213 = vmul.f32 %v197, %v211
  %v214 = vld [vmem:[%s5] sm:$0x1]
  %v216 = vlaneseq
  %v217 = vshrl.u32 %v216, 7
  %v218 = vsub.s32 0, %v217
  %v219 = vrot.slane %v214, %v218
  %v221 = vmul.f32 %v212, %v219
  %v222 = vmul.f32 %v213, %v219
  %v223 = vld [vmem:[%s6] sm:$0x1]
  %v225 = vlaneseq
  %v226 = vshrl.u32 %v225, 7
  %v227 = vsub.s32 0, %v226
  %v228 = vrot.slane %v223, %v227
  %v230 = vadd.f32 %v221, %v228
  %v231 = vadd.f32 %v222, %v228
  %232 = vst.msk [vmem:[%s7] sm:$0xff] %vm53, %v230
  %233 = vst.msk [vmem:[%s7 + $0x8] sm:$0xff] %vm53, %v231
  // Predicated region
  $region30: #{transformer_forward.12} parent=0 // pred_check
    _
  $region31: #{transformer_forward.12} parent=0 // pred_check_branch
    %235 = sbr.rel (0) target = $region33
  $region32: #{transformer_forward.12} parent=0 // pred_region
    _
  $region33: #{transformer_forward.12} parent=0 // pred_fallthru
    _
  // Predicated region
  $region34: #{transformer_forward.12} parent=0 // pred_check
    _
  $region35: #{transformer_forward.12} parent=0 // pred_check_branch
    %237 = sbr.rel (0) target = $region37
  $region36: #{transformer_forward.12} parent=0 // pred_region
    _
  $region37: #{transformer_forward.12} parent=0 // pred_fallthru
    _

// kernel: transformer_forward.11
$region0: #{transformer_forward.11}
  #allocation0 [shape = 'u32[]', space=smem, size = 0x4, offset = 0x4, fixed_abs, tag = 'smem constant byte address 0x4 - core index']
  #allocation1 [shape = 'u32[144,128]{1,0:T(1,128)}', space=vmem, size = 0x12000, scoped, tag = 'internal scratch']
  %s0 = inlined_call_operand.vmem [shape: f32[2,8,32], index: 0, kind: input, shape index: {}]
  %s1 = inlined_call_operand.vmem [shape: bf16[32,96], index: 1, kind: input, shape index: {}]
  %s2 = inlined_call_operand.vmem [shape: f32[1,96], index: 2, kind: input, shape index: {}]
  %s3 = inlined_call_operand.vmem [shape: bf16[32,32], index: 3, kind: input, shape index: {}]
  %s4 = inlined_call_operand.vmem [shape: f32[1,32], index: 4, kind: input, shape index: {}]
  %s5 = inlined_call_operand.vmem [shape: f32[1,32], index: 5, kind: input, shape index: {}]
  %s6 = inlined_call_operand.vmem [shape: f32[1,32], index: 6, kind: input, shape index: {}]
  %s7 = inlined_call_operand.vmem [shape: f32[2,8,32], index: 7, kind: output, shape index: {}]
  %s8 = sld [smem:[#allocation0]]
  $region61: #{transformer_forward.11} parent=0
    _
  %s10 = ssub.s32 1, %s8
  %s11 = scalar_select 0, %s10, %s8
  loop: start=0, step=1, limit=4
  $region2: #{transformer_forward.11} parent=0 // loop_pre_header
    _
  $region3: #{transformer_forward.11} parent=0 // loop_header
    %s13 = sphi 0, %s17
    %p14 = scmp.ge.s32.totalorder %s13, 4
    %s23 = sphi 0, %s25
    %s26 = sphi 0, %s23
    %s27 = sphi 0, %s26
    %s43 = sphi 0, %s27
    %s47 = sphi 0, %s47
    %s49 = sphi 0, %s47
    %s50 = sphi 0, %s49
    %s64 = sphi 0, %s50
    %s68 = sphi 0, %s68
    %s70 = sphi 0, %s68
    %s71 = sphi 0, %s70
    %s85 = sphi 0, %s71
    %s89 = sphi 0, %s89
    %s91 = sphi 0, %s89
    %s92 = sphi 0, %s91
    %s106 = sphi 0, %s92
    %s110 = sphi 0, %s110
    %s112 = sphi 0, %s110
    %s113 = sphi 0, %s112
    %s127 = sphi 0, %s113
    %s131 = sphi 0, %s131
    %s133 = sphi 0, %s131
    %s134 = sphi 0, %s133
    %s148 = sphi 0, %s134
    %s152 = sphi 0, %s152
    %s154 = sphi 0, %s152
    %s155 = sphi 0, %s154
    %s169 = sphi 0, %s155
    %s175 = sphi 0, %s177
    %s178 = sphi 0, %s175
    %s179 = sphi 0, %s178
    %s195 = sphi 0, %s179
  $region4: #{transformer_forward.11} parent=0 // loop_header_branch
    %16 = sbr.rel (%p14) target = $region8
  $region5: #{transformer_forward.11} parent=0 // loop_body
    %s18 = ssub.s32 %s13, 1
    %s19 = ssub.s32 %s13, 2
    %s20 = sadd.s32 %s13, 1
    %s21 = ssub.s32 %s13, %s20
    %p22 = scmp.eq.s32.totalorder %s21, 0
    %s24 = sadd.s32 %s23, 1
    %s25 = scalar_select %p22, %s23, %s24
    %p28 = pneg %p22
    %p29 = scmp.eq.s32.totalorder %s13, 1
    %p30 = por %p28, %p29
    %p31 = scmp.ne.s32.totalorder %s23, %s26
    %p32 = scmp.eq.s32.totalorder %s13, 0
    %p33 = por %p31, %p32
    %p34 = scmp.ne.s32.totalorder %s23, %s26
    %p35 = scmp.eq.s32.totalorder %s18, 1
    %p36 = por %p34, %p35
    %p37 = scmp.ne.s32.totalorder %s26, %s27
    %p38 = scmp.eq.s32.totalorder %s18, 0
    %p39 = por %p37, %p38
    %p40 = scmp.ne.s32.totalorder %s26, %s27
    %p41 = scmp.eq.s32.totalorder %s19, 1
    %p42 = por %p40, %p41
    %p44 = scmp.ne.s32.totalorder %s27, %s43
    %p45 = scmp.eq.s32.totalorder %s19, 0
    %p46 = por %p44, %p45
    %s48 = sadd.s32 %s47, 1
    %p51 = scmp.eq.s32.totalorder %s13, 1
    %p52 = scmp.ne.s32.totalorder %s47, %s49
    %p53 = scmp.eq.s32.totalorder %s13, 0
    %p54 = por %p52, %p53
    %p55 = scmp.ne.s32.totalorder %s47, %s49
    %p56 = scmp.eq.s32.totalorder %s18, 1
    %p57 = por %p55, %p56
    %p58 = scmp.ne.s32.totalorder %s49, %s50
    %p59 = scmp.eq.s32.totalorder %s18, 0
    %p60 = por %p58, %p59
    %p61 = scmp.ne.s32.totalorder %s49, %s50
    %p62 = scmp.eq.s32.totalorder %s19, 1
    %p63 = por %p61, %p62
    %p65 = scmp.ne.s32.totalorder %s50, %s64
    %p66 = scmp.eq.s32.totalorder %s19, 0
    %p67 = por %p65, %p66
    %s69 = sadd.s32 %s68, 1
    %p72 = scmp.eq.s32.totalorder %s13, 1
    %p73 = scmp.ne.s32.totalorder %s68, %s70
    %p74 = scmp.eq.s32.totalorder %s13, 0
    %p75 = por %p73, %p74
    %p76 = scmp.ne.s32.totalorder %s68, %s70
    %p77 = scmp.eq.s32.totalorder %s18, 1
    %p78 = por %p76, %p77
    %p79 = scmp.ne.s32.totalorder %s70, %s71
    %p80 = scmp.eq.s32.totalorder %s18, 0
    %p81 = por %p79, %p80
    %p82 = scmp.ne.s32.totalorder %s70, %s71
    %p83 = scmp.eq.s32.totalorder %s19, 1
    %p84 = por %p82, %p83
    %p86 = scmp.ne.s32.totalorder %s71, %s85
    %p87 = scmp.eq.s32.totalorder %s19, 0
    %p88 = por %p86, %p87
    %s90 = sadd.s32 %s89, 1
    %p93 = scmp.eq.s32.totalorder %s13, 1
    %p94 = scmp.ne.s32.totalorder %s89, %s91
    %p95 = scmp.eq.s32.totalorder %s13, 0
    %p96 = por %p94, %p95
    %p97 = scmp.ne.s32.totalorder %s89, %s91
    %p98 = scmp.eq.s32.totalorder %s18, 1
    %p99 = por %p97, %p98
    %p100 = scmp.ne.s32.totalorder %s91, %s92
    %p101 = scmp.eq.s32.totalorder %s18, 0
    %p102 = por %p100, %p101
    %p103 = scmp.ne.s32.totalorder %s91, %s92
    %p104 = scmp.eq.s32.totalorder %s19, 1
    %p105 = por %p103, %p104
    %p107 = scmp.ne.s32.totalorder %s92, %s106
    %p108 = scmp.eq.s32.totalorder %s19, 0
    %p109 = por %p107, %p108
    %s111 = sadd.s32 %s110, 1
    %p114 = scmp.eq.s32.totalorder %s13, 1
    %p115 = scmp.ne.s32.totalorder %s110, %s112
    %p116 = scmp.eq.s32.totalorder %s13, 0
    %p117 = por %p115, %p116
    %p118 = scmp.ne.s32.totalorder %s110, %s112
    %p119 = scmp.eq.s32.totalorder %s18, 1
    %p120 = por %p118, %p119
    %p121 = scmp.ne.s32.totalorder %s112, %s113
    %p122 = scmp.eq.s32.totalorder %s18, 0
    %p123 = por %p121, %p122
    %p124 = scmp.ne.s32.totalorder %s112, %s113
    %p125 = scmp.eq.s32.totalorder %s19, 1
    %p126 = por %p124, %p125
    %p128 = scmp.ne.s32.totalorder %s113, %s127
    %p129 = scmp.eq.s32.totalorder %s19, 0
    %p130 = por %p128, %p129
    %s132 = sadd.s32 %s131, 1
    %p135 = scmp.eq.s32.totalorder %s13, 1
    %p136 = scmp.ne.s32.totalorder %s131, %s133
    %p137 = scmp.eq.s32.totalorder %s13, 0
    %p138 = por %p136, %p137
    %p139 = scmp.ne.s32.totalorder %s131, %s133
    %p140 = scmp.eq.s32.totalorder %s18, 1
    %p141 = por %p139, %p140
    %p142 = scmp.ne.s32.totalorder %s133, %s134
    %p143 = scmp.eq.s32.totalorder %s18, 0
    %p144 = por %p142, %p143
    %p145 = scmp.ne.s32.totalorder %s133, %s134
    %p146 = scmp.eq.s32.totalorder %s19, 1
    %p147 = por %p145, %p146
    %p149 = scmp.ne.s32.totalorder %s134, %s148
    %p150 = scmp.eq.s32.totalorder %s19, 0
    %p151 = por %p149, %p150
    %s153 = sadd.s32 %s152, 1
    %p156 = scmp.eq.s32.totalorder %s13, 1
    %p157 = scmp.ne.s32.totalorder %s152, %s154
    %p158 = scmp.eq.s32.totalorder %s13, 0
    %p159 = por %p157, %p158
    %p160 = scmp.ne.s32.totalorder %s152, %s154
    %p161 = scmp.eq.s32.totalorder %s18, 1
    %p162 = por %p160, %p161
    %p163 = scmp.ne.s32.totalorder %s154, %s155
    %p164 = scmp.eq.s32.totalorder %s18, 0
    %p165 = por %p163, %p164
    %p166 = scmp.ne.s32.totalorder %s154, %s155
    %p167 = scmp.eq.s32.totalorder %s19, 1
    %p168 = por %p166, %p167
    %p170 = scmp.ne.s32.totalorder %s155, %s169
    %p171 = scmp.eq.s32.totalorder %s19, 0
    %p172 = por %p170, %p171
    %s173 = ssub.s32 %s13, %s20
    %p174 = scmp.eq.s32.totalorder %s173, 0
    %s176 = sadd.s32 %s175, 1
    %s177 = scalar_select %p174, %s175, %s176
    %p180 = pneg %p174
    %p181 = scmp.eq.s32.totalorder %s13, 1
    %p182 = por %p180, %p181
    %p183 = scmp.ne.s32.totalorder %s175, %s178
    %p184 = scmp.eq.s32.totalorder %s13, 0
    %p185 = por %p183, %p184
    %p186 = scmp.ne.s32.totalorder %s175, %s178
    %p187 = scmp.eq.s32.totalorder %s18, 1
    %p188 = por %p186, %p187
    %p189 = scmp.ne.s32.totalorder %s178, %s179
    %p190 = scmp.eq.s32.totalorder %s18, 0
    %p191 = por %p189, %p190
    %p192 = scmp.ne.s32.totalorder %s178, %s179
    %p193 = scmp.eq.s32.totalorder %s19, 1
    %p194 = por %p192, %p193
    %p196 = scmp.ne.s32.totalorder %s179, %s195
    %p197 = scmp.eq.s32.totalorder %s19, 0
    %p198 = por %p196, %p197
    %p199 = scmp.le.s32.totalorder 1, %s13
    %p200 = scmp.lt.s32.totalorder %s13, 3
    %p201 = pnand %p199, %p200
    %p202 = pneg %p201
    // Predicated region
    $region9: #{transformer_forward.11} parent=5 // pred_check
      _
    $region10: #{transformer_forward.11} parent=5 // pred_check_branch
      %204 = sbr.rel (%p201) target = $region12
    $region11: #{transformer_forward.11} parent=5 // pred_region
      %s205 = ssub.s32 %s13, 1
      // Predicated region
      $region13: #{transformer_forward.11} parent=11 // pred_check
        %p206 = pneg %p60
      $region14: #{transformer_forward.11} parent=11 // pred_check_branch
        %208 = sbr.rel (%p206) target = $region16
      $region15: #{transformer_forward.11} parent=11 // pred_region
        _
      $region16: #{transformer_forward.11} parent=11 // pred_fallthru
        _
      // Predicated region
      $region17: #{transformer_forward.11} parent=11 // pred_check
        %p209 = pneg %p81
      $region18: #{transformer_forward.11} parent=11 // pred_check_branch
        %211 = sbr.rel (%p209) target = $region20
      $region19: #{transformer_forward.11} parent=11 // pred_region
        _
      $region20: #{transformer_forward.11} parent=11 // pred_fallthru
        _
      // Predicated region
      $region21: #{transformer_forward.11} parent=11 // pred_check
        %p212 = pneg %p102
      $region22: #{transformer_forward.11} parent=11 // pred_check_branch
        %214 = sbr.rel (%p212) target = $region24
      $region23: #{transformer_forward.11} parent=11 // pred_region
        _
      $region24: #{transformer_forward.11} parent=11 // pred_fallthru
        _
      // Predicated region
      $region25: #{transformer_forward.11} parent=11 // pred_check
        %p215 = pneg %p123
      $region26: #{transformer_forward.11} parent=11 // pred_check_branch
        %217 = sbr.rel (%p215) target = $region28
      $region27: #{transformer_forward.11} parent=11 // pred_region
        _
      $region28: #{transformer_forward.11} parent=11 // pred_fallthru
        _
      // Predicated region
      $region29: #{transformer_forward.11} parent=11 // pred_check
        %p218 = pneg %p144
      $region30: #{transformer_forward.11} parent=11 // pred_check_branch
        %220 = sbr.rel (%p218) target = $region32
      $region31: #{transformer_forward.11} parent=11 // pred_region
        _
      $region32: #{transformer_forward.11} parent=11 // pred_fallthru
        _
      // Predicated region
      $region33: #{transformer_forward.11} parent=11 // pred_check
        %p221 = pneg %p165
      $region34: #{transformer_forward.11} parent=11 // pred_check_branch
        %223 = sbr.rel (%p221) target = $region36
      $region35: #{transformer_forward.11} parent=11 // pred_region
        _
      $region36: #{transformer_forward.11} parent=11 // pred_fallthru
        _
    $region12: #{transformer_forward.11} parent=5 // pred_fallthru
      _
    %p224 = scmp.lt.s32.totalorder %s13, 2
    // Predicated region
    $region37: #{transformer_forward.11} parent=5 // pred_check
      %p225 = pneg %p224
    $region38: #{transformer_forward.11} parent=5 // pred_check_branch
      %227 = sbr.rel (%p225) target = $region40
    $region39: #{transformer_forward.11} parent=5 // pred_region
      // Predicated region
      $region41: #{transformer_forward.11} parent=39 // pred_check
        %p228 = pneg %p33
      $region42: #{transformer_forward.11} parent=39 // pred_check_branch
        %230 = sbr.rel (%p228) target = $region44
      $region43: #{transformer_forward.11} parent=39 // pred_region
        %p231 = scmp.lt.s32.totalorder %s13, 1
        %s232 = scalar_select %p231, %s13, 1
        %s233 = smul.addr %s232, 8
        %s234 = scalar_lea.vmem %s0, %s233
      $region44: #{transformer_forward.11} parent=39 // pred_fallthru
        _
    $region40: #{transformer_forward.11} parent=5 // pred_fallthru
      _
    %p235 = scmp.le.s32.totalorder 1, %s13
    %p236 = scmp.lt.s32.totalorder %s13, 3
    %p237 = pnand %p235, %p236
    %p238 = pneg %p237
    // Predicated region
    $region45: #{transformer_forward.11} parent=5 // pred_check
      _
    $region46: #{transformer_forward.11} parent=5 // pred_check_branch
      %240 = sbr.rel (%p237) target = $region48
    $region47: #{transformer_forward.11} parent=5 // pred_region
      %s241 = ssub.s32 %s13, 1
      %p242 = scmp.lt.s32.totalorder %s18, 1
      %s243 = scalar_select %p242, %s18, 1
      %s244 = smul.addr %s243, 8
      %s245 = scalar_lea.vmem %s0, %s244
      %p246 = pneg %p39
      %p247 = pneg %p36
      %p248 = pneg %p60
      %p249 = pneg %p57
      %p250 = pneg %p81
      %p251 = pneg %p78
      %p252 = pneg %p102
      %p253 = pneg %p99
      %p254 = pneg %p123
      %p255 = pneg %p120
      %p256 = pneg %p144
      %p257 = pneg %p141
      %p258 = pneg %p165
      %p259 = pneg %p162
      %p260 = pneg %p191
      %p261 = pneg %p188
      %p262 = scmp.lt.s32.totalorder %s18, 1
      %s263 = scalar_select %p262, %s18, 1
      %s264 = smul.addr %s263, 8
      %s265 = scalar_lea.vmem %s7, %s264
      %p266 = scmp.lt.s32.totalorder %s18, 1
      %s267 = scalar_select %p266, %s18, 1
      %s268 = smul.addr %s267, 8
      %s269 = scalar_lea.vmem %s0, %s268
      %p270 = scmp.lt.s32.totalorder %s18, 1
      %s271 = scalar_select %p270, %s18, 1
      %s272 = smul.addr %s271, 8
      %s273 = scalar_lea.vmem %s7, %s272
      %v275 = vld [vmem:[%s269] sm:$0xff]
      %v276 = vpack.c.bf16 %v275, %v275
      %v277 = vld [vmem:[%s1] sm:$0xf]
      %v278 = vld [vmem:[%s1 + $0x4] sm:$0xf]
      %v279 = vld [vmem:[%s1 + $0x8] sm:$0xf]
      %v280 = vld [vmem:[%s1 + $0xc] sm:$0xf]
      %v281 = vld [vmem:[%s2] sm:$0x1]
      %v283 = vlaneseq
      %v284 = vshrl.u32 %v283, 7
      %v285 = vsub.s32 0, %v284
      %v286 = vrot.slane %v281, %v285
      %v292 = vunpack.c.l.b16 %v277
      %v293 = vunpack.c.l.b16 %v278
      %v294 = vunpack.c.l.b16 %v279
      %v295 = vunpack.c.l.b16 %v280
      %v296 = vpack.c.b16 %v293, %v292
      %v297 = vpack.c.b16 %v295, %v294
      %vm300 = vcmask 261120
      %v302 = vsel %vm300, %v276, 0
      %304 = vmatprep.subr.bf16.mxu0 0
      %305 = vmatpush1.bf16.msra.mxu0 %v296
      %306 = vmatprep.subr.bf16.mxu0 0
      %307 = vmatpush1.bf16.msra.mxu0 %v297
      %308 = vmatprep.subr.bf16.mxu0 0
      %309 = vmatpush1.bf16.msra.mxu0 0
      %310 = vmatprep.subr.bf16.mxu0 0
      %311 = vmatpush1.bf16.msra.mxu0 0
      %312 = vmatprep.subr.bf16.mxu0 0
      %313 = vmatpush1.bf16.msra.mxu0 0
      %314 = vmatprep.subr.bf16.mxu0 0
      %315 = vmatpush1.bf16.msra.mxu0 0
      %316 = vmatprep.subr.bf16.mxu0 0
      %317 = vmatpush1.bf16.msra.mxu0 0
      %318 = vmatprep.subr.bf16.mxu0 0
      %319 = vmatpush1.bf16.msra.mxu0 0
      %320 = vmatprep.subr.bf16.mxu0 0
      %321 = vmatpush1.bf16.msra.mxu0 0
      %322 = vmatprep.subr.bf16.mxu0 0
      %323 = vmatpush1.bf16.msra.mxu0 0
      %324 = vmatprep.subr.bf16.mxu0 0
      %325 = vmatpush1.bf16.msra.mxu0 0
      %326 = vmatprep.subr.bf16.mxu0 0
      %327 = vmatpush1.bf16.msra.mxu0 0
      %328 = vmatprep.subr.bf16.mxu0 0
      %329 = vmatpush1.bf16.msra.mxu0 0
      %330 = vmatprep.subr.bf16.mxu0 0
      %331 = vmatpush1.bf16.msra.mxu0 0
      %332 = vmatprep.subr.bf16.mxu0 0
      %333 = vmatpush1.bf16.msra.mxu0 0
      %334 = vmatprep.subr.bf16.mxu0 0
      %335 = vmatpush1.bf16.msra.mxu0 0
      %336 = vmatprep.mubr.bf16.mxu0 0
      %337 = vmatmul.mubr.bf16.gmra.mrb[0].mxu0 %v302
      %v338 = vpop.f32.mrb[0].mxu0
      %v339 = vadd.f32 %v286, %v338
      %v340 = vpop.f32.mrb[0].mxu0
      %v341 = vpop.f32.mrb[0].mxu0
      %v342 = vpop.f32.mrb[0].mxu0
      %343 = vdwg.mxu0
      %v344 = vmul.f32 %v339, 0.35355338
      %v345 = vpack.c.bf16 %v344, %v344
      %v346 = vpack.c.bf16 %v339, %v339
      %348 = vrot.lane.b32.xlu0 %v346, 96
      %v349 = vpop.permute.xlu0 %348
      %vm350 = vcmask 64512
      %v352 = vsel %vm350, %v345, 0
      %v355 = vsel %vm350, %v349, 0
      %357 = vmatprep.subr.bf16.mxu0 0
      %358 = vmatpush1.bf16.xpose.msra.mxu0 %v355
      %359 = vmatprep.subr.bf16.mxu0 0
      %360 = vmatpush1.bf16.xpose.msra.mxu0 0
      %361 = vmatprep.subr.bf16.mxu0 0
      %362 = vmatpush1.bf16.xpose.msra.mxu0 0
      %363 = vmatprep.subr.bf16.mxu0 0
      %364 = vmatpush1.bf16.xpose.msra.mxu0 0
      %365 = vmatprep.subr.bf16.mxu0 0
      %366 = vmatpush1.bf16.xpose.msra.mxu0 0
      %367 = vmatprep.subr.bf16.mxu0 0
      %368 = vmatpush1.bf16.xpose.msra.mxu0 0
      %369 = vmatprep.subr.bf16.mxu0 0
      %370 = vmatpush1.bf16.xpose.msra.mxu0 0
      %371 = vmatprep.subr.bf16.mxu0 0
      %372 = vmatpush1.bf16.xpose.msra.mxu0 0
      %373 = vmatprep.subr.bf16.mxu0 0
      %374 = vmatpush1.bf16.xpose.msra.mxu0 0
      %375 = vmatprep.subr.bf16.mxu0 0
      %376 = vmatpush1.bf16.xpose.msra.mxu0 0
      %377 = vmatprep.subr.bf16.mxu0 0
      %378 = vmatpush1.bf16.xpose.msra.mxu0 0
      %379 = vmatprep.subr.bf16.mxu0 0
      %380 = vmatpush1.bf16.xpose.msra.mxu0 0
      %381 = vmatprep.subr.bf16.mxu0 0
      %382 = vmatpush1.bf16.xpose.msra.mxu0 0
      %383 = vmatprep.subr.bf16.mxu0 0
      %384 = vmatpush1.bf16.xpose.msra.mxu0 0
      %385 = vmatprep.subr.bf16.mxu0 0
      %386 = vmatpush1.bf16.xpose.msra.mxu0 0
      %387 = vmatprep.subr.bf16.mxu0 0
      %388 = vmatpush1.bf16.xpose.msra.mxu0 0
      %389 = vmatprep.mubr.bf16.mxu0 0
      %390 = vmatmul.mubr.bf16.gmra.mrb[0].mxu0 %v352
      %v391 = vpop.f32.mrb[0].mxu0
      %v392 = vadd.f32 0.0, %v391
      %v393 = vpop.f32.mrb[0].mxu0
      %v394 = vpop.f32.mrb[0].mxu0
      %v395 = vpop.f32.mrb[0].mxu0
      %396 = vdwg.mxu0
      %v397 = vsel %vm350, %v392, -inf
      %398 = vmax.xlane.f32.xlu0 %v397
      %v399 = vpop.xlane.xlu0 %398
      %v400 = vsub.f32 %v392, %v399
      %v401 = vmul.f32 %v400, 1.442695
      %v402 = vpow.pop %v401
      %v403 = vsel %vm350, %v402, 0.0
      %404 = vadd.xlane.f32.xlu0 %v403
      %v405 = vpop.xlane.xlu0 %404
      %v406 = vrcp.pop %v405
      %v407 = vmul.f32 %v402, %v406
      %v408 = vpack.c.bf16 %v407, %v407
      %409 = vrot.lane.b32.xlu0 %v346, 64
      %v410 = vpop.permute.xlu0 %409
      %v412 = vsel %vm350, %v408, 0
      %vm414 = vcmask 1043456
      %v416 = vsel %vm414, %v410, 0
      %418 = vmatprep.subr.bf16.mxu0 0
      %419 = vmatpush1.bf16.msra.mxu0 %v416
      %420 = vmatprep.subr.bf16.mxu0 0
      %421 = vmatpush1.bf16.msra.mxu0 0
      %422 = vmatprep.subr.bf16.mxu0 0
      %423 = vmatpush1.bf16.msra.mxu0 0
      %424 = vmatprep.subr.bf16.mxu0 0
      %425 = vmatpush1.bf16.msra.mxu0 0
      %426 = vmatprep.subr.bf16.mxu0 0
      %427 = vmatpush1.bf16.msra.mxu0 0
      %428 = vmatprep.subr.bf16.mxu0 0
      %429 = vmatpush1.bf16.msra.mxu0 0
      %430 = vmatprep.subr.bf16.mxu0 0
      %431 = vmatpush1.bf16.msra.mxu0 0
      %432 = vmatprep.subr.bf16.mxu0 0
      %433 = vmatpush1.bf16.msra.mxu0 0
      %434 = vmatprep.subr.bf16.mxu0 0
      %435 = vmatpush1.bf16.msra.mxu0 0
      %436 = vmatprep.subr.bf16.mxu0 0
      %437 = vmatpush1.bf16.msra.mxu0 0
      %438 = vmatprep.subr.bf16.mxu0 0
      %439 = vmatpush1.bf16.msra.mxu0 0
      %440 = vmatprep.subr.bf16.mxu0 0
      %441 = vmatpush1.bf16.msra.mxu0 0
      %442 = vmatprep.subr.bf16.mxu0 0
      %443 = vmatpush1.bf16.msra.mxu0 0
      %444 = vmatprep.subr.bf16.mxu0 0
      %445 = vmatpush1.bf16.msra.mxu0 0
      %446 = vmatprep.subr.bf16.mxu0 0
      %447 = vmatpush1.bf16.msra.mxu0 0
      %448 = vmatprep.subr.bf16.mxu0 0
      %449 = vmatpush1.bf16.msra.mxu0 0
      %450 = vmatprep.mubr.bf16.mxu0 0
      %451 = vmatmul.mubr.bf16.gmra.mrb[0].mxu0 %v412
      %v452 = vpop.f32.mrb[0].mxu0
      %v453 = vadd.f32 0.0, %v452
      %v454 = vpop.f32.mrb[0].mxu0
      %v455 = vpop.f32.mrb[0].mxu0
      %v456 = vpop.f32.mrb[0].mxu0
      %457 = vdwg.mxu0
      %459 = vrot.lane.b32.xlu0 %v345, 120
      %v460 = vpop.permute.xlu0 %459
      %461 = vrot.lane.b32.xlu0 %v346, 88
      %v462 = vpop.permute.xlu0 %461
      %v464 = vsel %vm350, %v460, 0
      %v467 = vsel %vm350, %v462, 0
      %469 = vmatprep.subr.bf16.mxu0 0
      %470 = vmatpush1.bf16.xpose.msra.mxu0 %v467
      %471 = vmatprep.subr.bf16.mxu0 0
      %472 = vmatpush1.bf16.xpose.msra.mxu0 0
      %473 = vmatprep.subr.bf16.mxu0 0
      %474 = vmatpush1.bf16.xpose.msra.mxu0 0
      %475 = vmatprep.subr.bf16.mxu0 0
      %476 = vmatpush1.bf16.xpose.msra.mxu0 0
      %477 = vmatprep.subr.bf16.mxu0 0
      %478 = vmatpush1.bf16.xpose.msra.mxu0 0
      %479 = vmatprep.subr.bf16.mxu0 0
      %480 = vmatpush1.bf16.xpose.msra.mxu0 0
      %481 = vmatprep.subr.bf16.mxu0 0
      %482 = vmatpush1.bf16.xpose.msra.mxu0 0
      %483 = vmatprep.subr.bf16.mxu0 0
      %484 = vmatpush1.bf16.xpose.msra.mxu0 0
      %485 = vmatprep.subr.bf16.mxu0 0
      %486 = vmatpush1.bf16.xpose.msra.mxu0 0
      %487 = vmatprep.subr.bf16.mxu0 0
      %488 = vmatpush1.bf16.xpose.msra.mxu0 0
      %489 = vmatprep.subr.bf16.mxu0 0
      %490 = vmatpush1.bf16.xpose.msra.mxu0 0
      %491 = vmatprep.subr.bf16.mxu0 0
      %492 = vmatpush1.bf16.xpose.msra.mxu0 0
      %493 = vmatprep.subr.bf16.mxu0 0
      %494 = vmatpush1.bf16.xpose.msra.mxu0 0
      %495 = vmatprep.subr.bf16.mxu0 0
      %496 = vmatpush1.bf16.xpose.msra.mxu0 0
      %497 = vmatprep.subr.bf16.mxu0 0
      %498 = vmatpush1.bf16.xpose.msra.mxu0 0
      %499 = vmatprep.subr.bf16.mxu0 0
      %500 = vmatpush1.bf16.xpose.msra.mxu0 0
      %501 = vmatprep.mubr.bf16.mxu0 0
      %502 = vmatmul.mubr.bf16.gmra.mrb[0].mxu0 %v464
      %v503 = vpop.f32.mrb[0].mxu0
      %v504 = vadd.f32 0.0, %v503
      %v505 = vpop.f32.mrb[0].mxu0
      %v506 = vpop.f32.mrb[0].mxu0
      %v507 = vpop.f32.mrb[0].mxu0
      %508 = vdwg.mxu0
      %v509 = vsel %vm350, %v504, -inf
      %510 = vmax.xlane.f32.xlu0 %v509
      %v511 = vpop.xlane.xlu0 %510
      %v512 = vsub.f32 %v504, %v511
      %v513 = vmul.f32 %v512, 1.442695
      %v514 = vpow.pop %v513
      %v515 = vsel %vm350, %v514, 0.0
      %516 = vadd.xlane.f32.xlu0 %v515
      %v517 = vpop.xlane.xlu0 %516
      %v518 = vrcp.pop %v517
      %v519 = vmul.f32 %v514, %v518
      %v520 = vpack.c.bf16 %v519, %v519
      %521 = vrot.lane.b32.xlu0 %v346, 56
      %v522 = vpop.permute.xlu0 %521
      %v524 = vsel %vm350, %v520, 0
      %v527 = vsel %vm414, %v522, 0
      %529 = vmatprep.subr.bf16.mxu0 0
      %530 = vmatpush1.bf16.msra.mxu0 %v527
      %531 = vmatprep.subr.bf16.mxu0 0
      %532 = vmatpush1.bf16.msra.mxu0 0
      %533 = vmatprep.subr.bf16.mxu0 0
      %534 = vmatpush1.bf16.msra.mxu0 0
      %535 = vmatprep.subr.bf16.mxu0 0
      %536 = vmatpush1.bf16.msra.mxu0 0
      %537 = vmatprep.subr.bf16.mxu0 0
      %538 = vmatpush1.bf16.msra.mxu0 0
      %539 = vmatprep.subr.bf16.mxu0 0
      %540 = vmatpush1.bf16.msra.mxu0 0
      %541 = vmatprep.subr.bf16.mxu0 0
      %542 = vmatpush1.bf16.msra.mxu0 0
      %543 = vmatprep.subr.bf16.mxu0 0
      %544 = vmatpush1.bf16.msra.mxu0 0
      %545 = vmatprep.subr.bf16.mxu0 0
      %546 = vmatpush1.bf16.msra.mxu0 0
      %547 = vmatprep.subr.bf16.mxu0 0
      %548 = vmatpush1.bf16.msra.mxu0 0
      %549 = vmatprep.subr.bf16.mxu0 0
      %550 = vmatpush1.bf16.msra.mxu0 0
      %551 = vmatprep.subr.bf16.mxu0 0
      %552 = vmatpush1.bf16.msra.mxu0 0
      %553 = vmatprep.subr.bf16.mxu0 0
      %554 = vmatpush1.bf16.msra.mxu0 0
      %555 = vmatprep.subr.bf16.mxu0 0
      %556 = vmatpush1.bf16.msra.mxu0 0
      %557 = vmatprep.subr.bf16.mxu0 0
      %558 = vmatpush1.bf16.msra.mxu0 0
      %559 = vmatprep.subr.bf16.mxu0 0
      %560 = vmatpush1.bf16.msra.mxu0 0
      %561 = vmatprep.mubr.bf16.mxu0 0
      %562 = vmatmul.mubr.bf16.gmra.mrb[0].mxu0 %v524
      %v563 = vpop.f32.mrb[0].mxu0
      %v564 = vadd.f32 0.0, %v563
      %v565 = vpop.f32.mrb[0].mxu0
      %v566 = vpop.f32.mrb[0].mxu0
      %v567 = vpop.f32.mrb[0].mxu0
      %568 = vdwg.mxu0
      %569 = vrot.lane.b32.xlu0 %v345, 112
      %v570 = vpop.permute.xlu0 %569
      %571 = vrot.lane.b32.xlu0 %v346, 80
      %v572 = vpop.permute.xlu0 %571
      %v574 = vsel %vm350, %v570, 0
      %v577 = vsel %vm350, %v572, 0
      %579 = vmatprep.subr.bf16.mxu0 0
      %580 = vmatpush1.bf16.xpose.msra.mxu0 %v577
      %581 = vmatprep.subr.bf16.mxu0 0
      %582 = vmatpush1.bf16.xpose.msra.mxu0 0
      %583 = vmatprep.subr.bf16.mxu0 0
      %584 = vmatpush1.bf16.xpose.msra.mxu0 0
      %585 = vmatprep.subr.bf16.mxu0 0
      %586 = vmatpush1.bf16.xpose.msra.mxu0 0
      %587 = vmatprep.subr.bf16.mxu0 0
      %588 = vmatpush1.bf16.xpose.msra.mxu0 0
      %589 = vmatprep.subr.bf16.mxu0 0
      %590 = vmatpush1.bf16.xpose.msra.mxu0 0
      %591 = vmatprep.subr.bf16.mxu0 0
      %592 = vmatpush1.bf16.xpose.msra.mxu0 0
      %593 = vmatprep.subr.bf16.mxu0 0
      %594 = vmatpush1.bf16.xpose.msra.mxu0 0
      %595 = vmatprep.subr.bf16.mxu0 0
      %596 = vmatpush1.bf16.xpose.msra.mxu0 0
      %597 = vmatprep.subr.bf16.mxu0 0
      %598 = vmatpush1.bf16.xpose.msra.mxu0 0
      %599 = vmatprep.subr.bf16.mxu0 0
      %600 = vmatpush1.bf16.xpose.msra.mxu0 0
      %601 = vmatprep.subr.bf16.mxu0 0
      %602 = vmatpush1.bf16.xpose.msra.mxu0 0
      %603 = vmatprep.subr.bf16.mxu0 0
      %604 = vmatpush1.bf16.xpose.msra.mxu0 0
      %605 = vmatprep.subr.bf16.mxu0 0
      %606 = vmatpush1.bf16.xpose.msra.mxu0 0
      %607 = vmatprep.subr.bf16.mxu0 0
      %608 = vmatpush1.bf16.xpose.msra.mxu0 0
      %609 = vmatprep.subr.bf16.mxu0 0
      %610 = vmatpush1.bf16.xpose.msra.mxu0 0
      %611 = vmatprep.mubr.bf16.mxu0 0
      %612 = vmatmul.mubr.bf16.gmra.mrb[0].mxu0 %v574
      %v613 = vpop.f32.mrb[0].mxu0
      %v614 = vadd.f32 0.0, %v613
      %v615 = vpop.f32.mrb[0].mxu0
      %v616 = vpop.f32.mrb[0].mxu0
      %v617 = vpop.f32.mrb[0].mxu0
      %618 = vdwg.mxu0
      %v619 = vsel %vm350, %v614, -inf
      %620 = vmax.xlane.f32.xlu0 %v619
      %v621 = vpop.xlane.xlu0 %620
      %v622 = vsub.f32 %v614, %v621
      %v623 = vmul.f32 %v622, 1.442695
      %v624 = vpow.pop %v623
      %v625 = vsel %vm350, %v624, 0.0
      %626 = vadd.xlane.f32.xlu0 %v625
      %v627 = vpop.xlane.xlu0 %626
      %v628 = vrcp.pop %v627
      %v629 = vmul.f32 %v624, %v628
      %v630 = vpack.c.bf16 %v629, %v629
      %631 = vrot.lane.b32.xlu0 %v346, 48
      %v632 = vpop.permute.xlu0 %631
      %v634 = vsel %vm350, %v630, 0
      %v637 = vsel %vm414, %v632, 0
      %639 = vmatprep.subr.bf16.mxu0 0
      %640 = vmatpush1.bf16.msra.mxu0 %v637
      %641 = vmatprep.subr.bf16.mxu0 0
      %642 = vmatpush1.bf16.msra.mxu0 0
      %643 = vmatprep.subr.bf16.mxu0 0
      %644 = vmatpush1.bf16.msra.mxu0 0
      %645 = vmatprep.subr.bf16.mxu0 0
      %646 = vmatpush1.bf16.msra.mxu0 0
      %647 = vmatprep.subr.bf16.mxu0 0
      %648 = vmatpush1.bf16.msra.mxu0 0
      %649 = vmatprep.subr.bf16.mxu0 0
      %650 = vmatpush1.bf16.msra.mxu0 0
      %651 = vmatprep.subr.bf16.mxu0 0
      %652 = vmatpush1.bf16.msra.mxu0 0
      %653 = vmatprep.subr.bf16.mxu0 0
      %654 = vmatpush1.bf16.msra.mxu0 0
      %655 = vmatprep.subr.bf16.mxu0 0
      %656 = vmatpush1.bf16.msra.mxu0 0
      %657 = vmatprep.subr.bf16.mxu0 0
      %658 = vmatpush1.bf16.msra.mxu0 0
      %659 = vmatprep.subr.bf16.mxu0 0
      %660 = vmatpush1.bf16.msra.mxu0 0
      %661 = vmatprep.subr.bf16.mxu0 0
      %662 = vmatpush1.bf16.msra.mxu0 0
      %663 = vmatprep.subr.bf16.mxu0 0
      %664 = vmatpush1.bf16.msra.mxu0 0
      %665 = vmatprep.subr.bf16.mxu0 0
      %666 = vmatpush1.bf16.msra.mxu0 0
      %667 = vmatprep.subr.bf16.mxu0 0
      %668 = vmatpush1.bf16.msra.mxu0 0
      %669 = vmatprep.subr.bf16.mxu0 0
      %670 = vmatpush1.bf16.msra.mxu0 0
      %671 = vmatprep.mubr.bf16.mxu0 0
      %672 = vmatmul.mubr.bf16.gmra.mrb[0].mxu0 %v634
      %v673 = vpop.f32.mrb[0].mxu0
      %v674 = vadd.f32 0.0, %v673
      %v675 = vpop.f32.mrb[0].mxu0
      %v676 = vpop.f32.mrb[0].mxu0
      %v677 = vpop.f32.mrb[0].mxu0
      %678 = vdwg.mxu0
      %679 = vrot.lane.b32.xlu0 %v345, 104
      %v680 = vpop.permute.xlu0 %679
      %681 = vrot.lane.b32.xlu0 %v346, 72
      %v682 = vpop.permute.xlu0 %681
      %v684 = vsel %vm350, %v680, 0
      %v687 = vsel %vm350, %v682, 0
      %689 = vmatprep.subr.bf16.mxu0 0
      %690 = vmatpush1.bf16.xpose.msra.mxu0 %v687
      %691 = vmatprep.subr.bf16.mxu0 0
      %692 = vmatpush1.bf16.xpose.msra.mxu0 0
      %693 = vmatprep.subr.bf16.mxu0 0
      %694 = vmatpush1.bf16.xpose.msra.mxu0 0
      %695 = vmatprep.subr.bf16.mxu0 0
      %696 = vmatpush1.bf16.xpose.msra.mxu0 0
      %697 = vmatprep.subr.bf16.mxu0 0
      %698 = vmatpush1.bf16.xpose.msra.mxu0 0
      %699 = vmatprep.subr.bf16.mxu0 0
      %700 = vmatpush1.bf16.xpose.msra.mxu0 0
      %701 = vmatprep.subr.bf16.mxu0 0
      %702 = vmatpush1.bf16.xpose.msra.mxu0 0
      %703 = vmatprep.subr.bf16.mxu0 0
      %704 = vmatpush1.bf16.xpose.msra.mxu0 0
      %705 = vmatprep.subr.bf16.mxu0 0
      %706 = vmatpush1.bf16.xpose.msra.mxu0 0
      %707 = vmatprep.subr.bf16.mxu0 0
      %708 = vmatpush1.bf16.xpose.msra.mxu0 0
      %709 = vmatprep.subr.bf16.mxu0 0
      %710 = vmatpush1.bf16.xpose.msra.mxu0 0
      %711 = vmatprep.subr.bf16.mxu0 0
      %712 = vmatpush1.bf16.xpose.msra.mxu0 0
      %713 = vmatprep.subr.bf16.mxu0 0
      %714 = vmatpush1.bf16.xpose.msra.mxu0 0
      %715 = vmatprep.subr.bf16.mxu0 0
      %716 = vmatpush1.bf16.xpose.msra.mxu0 0
      %717 = vmatprep.subr.bf16.mxu0 0
      %718 = vmatpush1.bf16.xpose.msra.mxu0 0
      %719 = vmatprep.subr.bf16.mxu0 0
      %720 = vmatpush1.bf16.xpose.msra.mxu0 0
      %721 = vmatprep.mubr.bf16.mxu0 0
      %722 = vmatmul.mubr.bf16.gmra.mrb[0].mxu0 %v684
      %v723 = vpop.f32.mrb[0].mxu0
      %v724 = vadd.f32 0.0, %v723
      %v725 = vpop.f32.mrb[0].mxu0
      %v726 = vpop.f32.mrb[0].mxu0
      %v727 = vpop.f32.mrb[0].mxu0
      %728 = vdwg.mxu0
      %v729 = vsel %vm350, %v724, -inf
      %730 = vmax.xlane.f32.xlu0 %v729
      %v731 = vpop.xlane.xlu0 %730
      %v732 = vsub.f32 %v724, %v731
      %v733 = vmul.f32 %v732, 1.442695
      %v734 = vpow.pop %v733
      %v735 = vsel %vm350, %v734, 0.0
      %736 = vadd.xlane.f32.xlu0 %v735
      %v737 = vpop.xlane.xlu0 %736
      %v738 = vrcp.pop %v737
      %v739 = vmul.f32 %v734, %v738
      %v740 = vpack.c.bf16 %v739, %v739
      %741 = vrot.lane.b32.xlu0 %v346, 40
      %v742 = vpop.permute.xlu0 %741
      %v744 = vsel %vm350, %v740, 0
      %v747 = vsel %vm414, %v742, 0
      %749 = vmatprep.subr.bf16.mxu0 0
      %750 = vmatpush1.bf16.msra.mxu0 %v747
      %751 = vmatprep.subr.bf16.mxu0 0
      %752 = vmatpush1.bf16.msra.mxu0 0
      %753 = vmatprep.subr.bf16.mxu0 0
      %754 = vmatpush1.bf16.msra.mxu0 0
      %755 = vmatprep.subr.bf16.mxu0 0
      %756 = vmatpush1.bf16.msra.mxu0 0
      %757 = vmatprep.subr.bf16.mxu0 0
      %758 = vmatpush1.bf16.msra.mxu0 0
      %759 = vmatprep.subr.bf16.mxu0 0
      %760 = vmatpush1.bf16.msra.mxu0 0
      %761 = vmatprep.subr.bf16.mxu0 0
      %762 = vmatpush1.bf16.msra.mxu0 0
      %763 = vmatprep.subr.bf16.mxu0 0
      %764 = vmatpush1.bf16.msra.mxu0 0
      %765 = vmatprep.subr.bf16.mxu0 0
      %766 = vmatpush1.bf16.msra.mxu0 0
      %767 = vmatprep.subr.bf16.mxu0 0
      %768 = vmatpush1.bf16.msra.mxu0 0
      %769 = vmatprep.subr.bf16.mxu0 0
      %770 = vmatpush1.bf16.msra.mxu0 0
      %771 = vmatprep.subr.bf16.mxu0 0
      %772 = vmatpush1.bf16.msra.mxu0 0
      %773 = vmatprep.subr.bf16.mxu0 0
      %774 = vmatpush1.bf16.msra.mxu0 0
      %775 = vmatprep.subr.bf16.mxu0 0
      %776 = vmatpush1.bf16.msra.mxu0 0
      %777 = vmatprep.subr.bf16.mxu0 0
      %778 = vmatpush1.bf16.msra.mxu0 0
      %779 = vmatprep.subr.bf16.mxu0 0
      %780 = vmatpush1.bf16.msra.mxu0 0
      %781 = vmatprep.mubr.bf16.mxu0 0
      %782 = vmatmul.mubr.bf16.gmra.mrb[0].mxu0 %v744
      %v783 = vpop.f32.mrb[0].mxu0
      %v784 = vadd.f32 0.0, %v783
      %v785 = vpop.f32.mrb[0].mxu0
      %v786 = vpop.f32.mrb[0].mxu0
      %v787 = vpop.f32.mrb[0].mxu0
      %788 = vdwg.mxu0
      %790 = vrot.lane.b32.xlu0 %v564, 8
      %v791 = vpop.permute.xlu0 %790
      %794 = vrot.lane.b32.xlu0 %v674, 16
      %v795 = vpop.permute.xlu0 %794
      %798 = vrot.lane.b32.xlu0 %v784, 24
      %v799 = vpop.permute.xlu0 %798
      %v801 = vsel %vm350, %v453, %v791
      %vm802 = vcmask 130048
      %v803 = vsel %vm802, %v801, %v795
      %vm804 = vcmask 195584
      %v805 = vsel %vm804, %v803, %v799
      %v806 = vpack.c.bf16 %v805, %v805
      %v807 = vld [vmem:[%s3] sm:$0xf]
      %v808 = vld [vmem:[%s3 + $0x4] sm:$0xf]
      %v809 = vld [vmem:[%s3 + $0x8] sm:$0xf]
      %v810 = vld [vmem:[%s3 + $0xc] sm:$0xf]
      %v811 = vld [vmem:[%s4] sm:$0x1]
      %v813 = vlaneseq
      %v814 = vshrl.u32 %v813, 7
      %v815 = vsub.s32 0, %v814
      %v816 = vrot.slane %v811, %v815
      %v822 = vunpack.c.l.b16 %v807
      %v823 = vunpack.c.l.b16 %v808
      %v824 = vunpack.c.l.b16 %v809
      %v825 = vunpack.c.l.b16 %v810
      %v826 = vpack.c.b16 %v823, %v822
      %v827 = vpack.c.b16 %v825, %v824
      %v831 = vsel %vm300, %v806, 0
      %833 = vmatprep.subr.bf16.mxu0 0
      %834 = vmatpush1.bf16.msra.mxu0 %v826
      %835 = vmatprep.subr.bf16.mxu0 0
      %836 = vmatpush1.bf16.msra.mxu0 %v827
      %837 = vmatprep.subr.bf16.mxu0 0
      %838 = vmatpush1.bf16.msra.mxu0 0
      %839 = vmatprep.subr.bf16.mxu0 0
      %840 = vmatpush1.bf16.msra.mxu0 0
      %841 = vmatprep.subr.bf16.mxu0 0
      %842 = vmatpush1.bf16.msra.mxu0 0
      %843 = vmatprep.subr.bf16.mxu0 0
      %844 = vmatpush1.bf16.msra.mxu0 0
      %845 = vmatprep.subr.bf16.mxu0 0
      %846 = vmatpush1.bf16.msra.mxu0 0
      %847 = vmatprep.subr.bf16.mxu0 0
      %848 = vmatpush1.bf16.msra.mxu0 0
      %849 = vmatprep.subr.bf16.mxu0 0
      %850 = vmatpush1.bf16.msra.mxu0 0
      %851 = vmatprep.subr.bf16.mxu0 0
      %852 = vmatpush1.bf16.msra.mxu0 0
      %853 = vmatprep.subr.bf16.mxu0 0
      %854 = vmatpush1.bf16.msra.mxu0 0
      %855 = vmatprep.subr.bf16.mxu0 0
      %856 = vmatpush1.bf16.msra.mxu0 0
      %857 = vmatprep.subr.bf16.mxu0 0
      %858 = vmatpush1.bf16.msra.mxu0 0
      %859 = vmatprep.subr.bf16.mxu0 0
      %860 = vmatpush1.bf16.msra.mxu0 0
      %861 = vmatprep.subr.bf16.mxu0 0
      %862 = vmatpush1.bf16.msra.mxu0 0
      %863 = vmatprep.subr.bf16.mxu0 0
      %864 = vmatpush1.bf16.msra.mxu0 0
      %865 = vmatprep.mubr.bf16.mxu0 0
      %866 = vmatmul.mubr.bf16.gmra.mrb[0].mxu0 %v831
      %v867 = vpop.f32.mrb[0].mxu0
      %v868 = vadd.f32 %v816, %v867
      %v869 = vpop.f32.mrb[0].mxu0
      %v870 = vpop.f32.mrb[0].mxu0
      %v871 = vpop.f32.mrb[0].mxu0
      %872 = vdwg.mxu0
      %v873 = vadd.f32 %v868, %v275
      %v874 = vsel %vm300, %v873, 0.0
      %875 = vadd.xlane.f32.xlu0 %v874
      %v876 = vpop.xlane.xlu0 %875
      %v877 = vrcp.pop 32.0
      %v878 = vmul.f32 %v876, %v877
      %v879 = vsub.f32 %v873, %v878
      %v880 = vmul.f32 %v879, %v879
      %v881 = vsel %vm300, %v880, 0.0
      %882 = vadd.xlane.f32.xlu0 %v881
      %v883 = vpop.xlane.xlu0 %882
      %v884 = vmul.f32 %v883, %v877
      %v885 = vadd.f32 %v884, 1e-05
      %v886 = vrsqrt.pop %v885
      %v887 = vmul.f32 %v879, %v886
      %v888 = vld [vmem:[%s5] sm:$0x1]
      %v890 = vlaneseq
      %v891 = vshrl.u32 %v890, 7
      %v892 = vsub.s32 0, %v891
      %v893 = vrot.slane %v888, %v892
      %v895 = vmul.f32 %v887, %v893
      %v896 = vld [vmem:[%s6] sm:$0x1]
      %v898 = vlaneseq
      %v899 = vshrl.u32 %v898, 7
      %v900 = vsub.s32 0, %v899
      %v901 = vrot.slane %v896, %v900
      %v903 = vadd.f32 %v895, %v901
      %904 = vst.msk [vmem:[%s273] sm:$0xff] %vm300, %v903
      %p905 = scmp.lt.s32.totalorder %s18, 1
      %s906 = scalar_select %p905, %s18, 1
      %s907 = smul.addr %s906, 8
      %s908 = scalar_lea.vmem %s7, %s907
      // Predicated region
      $region49: #{transformer_forward.11} parent=47 // pred_check
        %p909 = pneg %p188
      $region50: #{transformer_forward.11} parent=47 // pred_check_branch
        %911 = sbr.rel (%p909) target = $region52
      $region51: #{transformer_forward.11} parent=47 // pred_region
        _
      $region52: #{transformer_forward.11} parent=47 // pred_fallthru
        _
    $region48: #{transformer_forward.11} parent=5 // pred_fallthru
      _
    %p912 = scmp.le.s32.totalorder 2, %s13
    // Predicated region
    $region53: #{transformer_forward.11} parent=5 // pred_check
      %p913 = pneg %p912
    $region54: #{transformer_forward.11} parent=5 // pred_check_branch
      %915 = sbr.rel (%p913) target = $region56
    $region55: #{transformer_forward.11} parent=5 // pred_region
      %s916 = ssub.s32 %s13, 2
      // Predicated region
      $region57: #{transformer_forward.11} parent=55 // pred_check
        %p917 = pneg %p194
      $region58: #{transformer_forward.11} parent=55 // pred_check_branch
        %919 = sbr.rel (%p917) target = $region60
      $region59: #{transformer_forward.11} parent=55 // pred_region
        %p920 = scmp.lt.s32.totalorder %s19, 1
        %s921 = scalar_select %p920, %s19, 1
        %s922 = smul.addr %s921, 8
        %s923 = scalar_lea.vmem %s7, %s922
      $region60: #{transformer_forward.11} parent=55 // pred_fallthru
        _
    $region56: #{transformer_forward.11} parent=5 // pred_fallthru
      _
  $region6: #{transformer_forward.11} parent=0 // loop_footer
    %s17 = sadd.s32 1, %s13
  $region7: #{transformer_forward.11} parent=0 // loop_footer_branch
    %12 = sbr.rel target = $region3
  $region8: #{transformer_forward.11} parent=0 // loop_exit
    _

// kernel: transformer_forward.16
$region0: #{transformer_forward.16}
  #allocation0 [shape = 'u32[]', space=smem, size = 0x4, offset = 0x4, fixed_abs, tag = 'smem constant byte address 0x4 - core index']
  #allocation1 [shape = 'u32[144,128]{1,0:T(1,128)}', space=vmem, size = 0x12000, scoped, tag = 'internal scratch']
  %s0 = inlined_call_operand.vmem [shape: f32[2,8,32], index: 0, kind: input, shape index: {}]
  %s1 = inlined_call_operand.vmem [shape: f32[2,8,32], index: 1, kind: input, shape index: {}]
  %s2 = inlined_call_operand.vmem [shape: bf16[32,32], index: 2, kind: input, shape index: {}]
  %s3 = inlined_call_operand.vmem [shape: f32[1,32], index: 3, kind: input, shape index: {}]
  %s4 = inlined_call_operand.vmem [shape: bf16[32,64], index: 4, kind: input, shape index: {}]
  %s5 = inlined_call_operand.vmem [shape: f32[1,64], index: 5, kind: input, shape index: {}]
  %s6 = inlined_call_operand.vmem [shape: bf16[32,32], index: 6, kind: input, shape index: {}]
  %s7 = inlined_call_operand.vmem [shape: f32[1,32], index: 7, kind: input, shape index: {}]
  %s8 = inlined_call_operand.vmem [shape: f32[1,32], index: 8, kind: input, shape index: {}]
  %s9 = inlined_call_operand.vmem [shape: f32[1,32], index: 9, kind: input, shape index: {}]
  %s10 = inlined_call_operand.vmem [shape: f32[2,8,32], index: 10, kind: output, shape index: {}]
  %s11 = sld [smem:[#allocation0]]
  $region73: #{transformer_forward.16} parent=0
    _
  %s13 = ssub.s32 1, %s11
  %s14 = scalar_select 0, %s13, %s11
  loop: start=0, step=1, limit=4
  $region2: #{transformer_forward.16} parent=0 // loop_pre_header
    _
  $region3: #{transformer_forward.16} parent=0 // loop_header
    %s16 = sphi 0, %s20
    %p17 = scmp.ge.s32.totalorder %s16, 4
    %s26 = sphi 0, %s28
    %s29 = sphi 0, %s26
    %s30 = sphi 0, %s29
    %s46 = sphi 0, %s30
    %s52 = sphi 0, %s54
    %s55 = sphi 0, %s52
    %s56 = sphi 0, %s55
    %s72 = sphi 0, %s56
    %s76 = sphi 0, %s76
    %s78 = sphi 0, %s76
    %s79 = sphi 0, %s78
    %s93 = sphi 0, %s79
    %s97 = sphi 0, %s97
    %s99 = sphi 0, %s97
    %s100 = sphi 0, %s99
    %s114 = sphi 0, %s100
    %s118 = sphi 0, %s118
    %s120 = sphi 0, %s118
    %s121 = sphi 0, %s120
    %s135 = sphi 0, %s121
    %s139 = sphi 0, %s139
    %s141 = sphi 0, %s139
    %s142 = sphi 0, %s141
    %s156 = sphi 0, %s142
    %s160 = sphi 0, %s160
    %s162 = sphi 0, %s160
    %s163 = sphi 0, %s162
    %s177 = sphi 0, %s163
    %s181 = sphi 0, %s181
    %s183 = sphi 0, %s181
    %s184 = sphi 0, %s183
    %s198 = sphi 0, %s184
    %s202 = sphi 0, %s202
    %s204 = sphi 0, %s202
    %s205 = sphi 0, %s204
    %s219 = sphi 0, %s205
    %s223 = sphi 0, %s223
    %s225 = sphi 0, %s223
    %s226 = sphi 0, %s225
    %s240 = sphi 0, %s226
    %s246 = sphi 0, %s248
    %s249 = sphi 0, %s246
    %s250 = sphi 0, %s249
    %s266 = sphi 0, %s250
  $region4: #{transformer_forward.16} parent=0 // loop_header_branch
    %19 = sbr.rel (%p17) target = $region8
  $region5: #{transformer_forward.16} parent=0 // loop_body
    %s21 = ssub.s32 %s16, 1
    %s22 = ssub.s32 %s16, 2
    %s23 = sadd.s32 %s16, 1
    %s24 = ssub.s32 %s16, %s23
    %p25 = scmp.eq.s32.totalorder %s24, 0
    %s27 = sadd.s32 %s26, 1
    %s28 = scalar_select %p25, %s26, %s27
    %p31 = pneg %p25
    %p32 = scmp.eq.s32.totalorder %s16, 1
    %p33 = por %p31, %p32
    %p34 = scmp.ne.s32.totalorder %s26, %s29
    %p35 = scmp.eq.s32.totalorder %s16, 0
    %p36 = por %p34, %p35
    %p37 = scmp.ne.s32.totalorder %s26, %s29
    %p38 = scmp.eq.s32.totalorder %s21, 1
    %p39 = por %p37, %p38
    %p40 = scmp.ne.s32.totalorder %s29, %s30
    %p41 = scmp.eq.s32.totalorder %s21, 0
    %p42 = por %p40, %p41
    %p43 = scmp.ne.s32.totalorder %s29, %s30
    %p44 = scmp.eq.s32.totalorder %s22, 1
    %p45 = por %p43, %p44
    %p47 = scmp.ne.s32.totalorder %s30, %s46
    %p48 = scmp.eq.s32.totalorder %s22, 0
    %p49 = por %p47, %p48
    %s50 = ssub.s32 %s16, %s23
    %p51 = scmp.eq.s32.totalorder %s50, 0
    %s53 = sadd.s32 %s52, 1
    %s54 = scalar_select %p51, %s52, %s53
    %p57 = pneg %p51
    %p58 = scmp.eq.s32.totalorder %s16, 1
    %p59 = por %p57, %p58
    %p60 = scmp.ne.s32.totalorder %s52, %s55
    %p61 = scmp.eq.s32.totalorder %s16, 0
    %p62 = por %p60, %p61
    %p63 = scmp.ne.s32.totalorder %s52, %s55
    %p64 = scmp.eq.s32.totalorder %s21, 1
    %p65 = por %p63, %p64
    %p66 = scmp.ne.s32.totalorder %s55, %s56
    %p67 = scmp.eq.s32.totalorder %s21, 0
    %p68 = por %p66, %p67
    %p69 = scmp.ne.s32.totalorder %s55, %s56
    %p70 = scmp.eq.s32.totalorder %s22, 1
    %p71 = por %p69, %p70
    %p73 = scmp.ne.s32.totalorder %s56, %s72
    %p74 = scmp.eq.s32.totalorder %s22, 0
    %p75 = por %p73, %p74
    %s77 = sadd.s32 %s76, 1
    %p80 = scmp.eq.s32.totalorder %s16, 1
    %p81 = scmp.ne.s32.totalorder %s76, %s78
    %p82 = scmp.eq.s32.totalorder %s16, 0
    %p83 = por %p81, %p82
    %p84 = scmp.ne.s32.totalorder %s76, %s78
    %p85 = scmp.eq.s32.totalorder %s21, 1
    %p86 = por %p84, %p85
    %p87 = scmp.ne.s32.totalorder %s78, %s79
    %p88 = scmp.eq.s32.totalorder %s21, 0
    %p89 = por %p87, %p88
    %p90 = scmp.ne.s32.totalorder %s78, %s79
    %p91 = scmp.eq.s32.totalorder %s22, 1
    %p92 = por %p90, %p91
    %p94 = scmp.ne.s32.totalorder %s79, %s93
    %p95 = scmp.eq.s32.totalorder %s22, 0
    %p96 = por %p94, %p95
    %s98 = sadd.s32 %s97, 1
    %p101 = scmp.eq.s32.totalorder %s16, 1
    %p102 = scmp.ne.s32.totalorder %s97, %s99
    %p103 = scmp.eq.s32.totalorder %s16, 0
    %p104 = por %p102, %p103
    %p105 = scmp.ne.s32.totalorder %s97, %s99
    %p106 = scmp.eq.s32.totalorder %s21, 1
    %p107 = por %p105, %p106
    %p108 = scmp.ne.s32.totalorder %s99, %s100
    %p109 = scmp.eq.s32.totalorder %s21, 0
    %p110 = por %p108, %p109
    %p111 = scmp.ne.s32.totalorder %s99, %s100
    %p112 = scmp.eq.s32.totalorder %s22, 1
    %p113 = por %p111, %p112
    %p115 = scmp.ne.s32.totalorder %s100, %s114
    %p116 = scmp.eq.s32.totalorder %s22, 0
    %p117 = por %p115, %p116
    %s119 = sadd.s32 %s118, 1
    %p122 = scmp.eq.s32.totalorder %s16, 1
    %p123 = scmp.ne.s32.totalorder %s118, %s120
    %p124 = scmp.eq.s32.totalorder %s16, 0
    %p125 = por %p123, %p124
    %p126 = scmp.ne.s32.totalorder %s118, %s120
    %p127 = scmp.eq.s32.totalorder %s21, 1
    %p128 = por %p126, %p127
    %p129 = scmp.ne.s32.totalorder %s120, %s121
    %p130 = scmp.eq.s32.totalorder %s21, 0
    %p131 = por %p129, %p130
    %p132 = scmp.ne.s32.totalorder %s120, %s121
    %p133 = scmp.eq.s32.totalorder %s22, 1
    %p134 = por %p132, %p133
    %p136 = scmp.ne.s32.totalorder %s121, %s135
    %p137 = scmp.eq.s32.totalorder %s22, 0
    %p138 = por %p136, %p137
    %s140 = sadd.s32 %s139, 1
    %p143 = scmp.eq.s32.totalorder %s16, 1
    %p144 = scmp.ne.s32.totalorder %s139, %s141
    %p145 = scmp.eq.s32.totalorder %s16, 0
    %p146 = por %p144, %p145
    %p147 = scmp.ne.s32.totalorder %s139, %s141
    %p148 = scmp.eq.s32.totalorder %s21, 1
    %p149 = por %p147, %p148
    %p150 = scmp.ne.s32.totalorder %s141, %s142
    %p151 = scmp.eq.s32.totalorder %s21, 0
    %p152 = por %p150, %p151
    %p153 = scmp.ne.s32.totalorder %s141, %s142
    %p154 = scmp.eq.s32.totalorder %s22, 1
    %p155 = por %p153, %p154
    %p157 = scmp.ne.s32.totalorder %s142, %s156
    %p158 = scmp.eq.s32.totalorder %s22, 0
    %p159 = por %p157, %p158
    %s161 = sadd.s32 %s160, 1
    %p164 = scmp.eq.s32.totalorder %s16, 1
    %p165 = scmp.ne.s32.totalorder %s160, %s162
    %p166 = scmp.eq.s32.totalorder %s16, 0
    %p167 = por %p165, %p166
    %p168 = scmp.ne.s32.totalorder %s160, %s162
    %p169 = scmp.eq.s32.totalorder %s21, 1
    %p170 = por %p168, %p169
    %p171 = scmp.ne.s32.totalorder %s162, %s163
    %p172 = scmp.eq.s32.totalorder %s21, 0
    %p173 = por %p171, %p172
    %p174 = scmp.ne.s32.totalorder %s162, %s163
    %p175 = scmp.eq.s32.totalorder %s22, 1
    %p176 = por %p174, %p175
    %p178 = scmp.ne.s32.totalorder %s163, %s177
    %p179 = scmp.eq.s32.totalorder %s22, 0
    %p180 = por %p178, %p179
    %s182 = sadd.s32 %s181, 1
    %p185 = scmp.eq.s32.totalorder %s16, 1
    %p186 = scmp.ne.s32.totalorder %s181, %s183
    %p187 = scmp.eq.s32.totalorder %s16, 0
    %p188 = por %p186, %p187
    %p189 = scmp.ne.s32.totalorder %s181, %s183
    %p190 = scmp.eq.s32.totalorder %s21, 1
    %p191 = por %p189, %p190
    %p192 = scmp.ne.s32.totalorder %s183, %s184
    %p193 = scmp.eq.s32.totalorder %s21, 0
    %p194 = por %p192, %p193
    %p195 = scmp.ne.s32.totalorder %s183, %s184
    %p196 = scmp.eq.s32.totalorder %s22, 1
    %p197 = por %p195, %p196
    %p199 = scmp.ne.s32.totalorder %s184, %s198
    %p200 = scmp.eq.s32.totalorder %s22, 0
    %p201 = por %p199, %p200
    %s203 = sadd.s32 %s202, 1
    %p206 = scmp.eq.s32.totalorder %s16, 1
    %p207 = scmp.ne.s32.totalorder %s202, %s204
    %p208 = scmp.eq.s32.totalorder %s16, 0
    %p209 = por %p207, %p208
    %p210 = scmp.ne.s32.totalorder %s202, %s204
    %p211 = scmp.eq.s32.totalorder %s21, 1
    %p212 = por %p210, %p211
    %p213 = scmp.ne.s32.totalorder %s204, %s205
    %p214 = scmp.eq.s32.totalorder %s21, 0
    %p215 = por %p213, %p214
    %p216 = scmp.ne.s32.totalorder %s204, %s205
    %p217 = scmp.eq.s32.totalorder %s22, 1
    %p218 = por %p216, %p217
    %p220 = scmp.ne.s32.totalorder %s205, %s219
    %p221 = scmp.eq.s32.totalorder %s22, 0
    %p222 = por %p220, %p221
    %s224 = sadd.s32 %s223, 1
    %p227 = scmp.eq.s32.totalorder %s16, 1
    %p228 = scmp.ne.s32.totalorder %s223, %s225
    %p229 = scmp.eq.s32.totalorder %s16, 0
    %p230 = por %p228, %p229
    %p231 = scmp.ne.s32.totalorder %s223, %s225
    %p232 = scmp.eq.s32.totalorder %s21, 1
    %p233 = por %p231, %p232
    %p234 = scmp.ne.s32.totalorder %s225, %s226
    %p235 = scmp.eq.s32.totalorder %s21, 0
    %p236 = por %p234, %p235
    %p237 = scmp.ne.s32.totalorder %s225, %s226
    %p238 = scmp.eq.s32.totalorder %s22, 1
    %p239 = por %p237, %p238
    %p241 = scmp.ne.s32.totalorder %s226, %s240
    %p242 = scmp.eq.s32.totalorder %s22, 0
    %p243 = por %p241, %p242
    %s244 = ssub.s32 %s16, %s23
    %p245 = scmp.eq.s32.totalorder %s244, 0
    %s247 = sadd.s32 %s246, 1
    %s248 = scalar_select %p245, %s246, %s247
    %p251 = pneg %p245
    %p252 = scmp.eq.s32.totalorder %s16, 1
    %p253 = por %p251, %p252
    %p254 = scmp.ne.s32.totalorder %s246, %s249
    %p255 = scmp.eq.s32.totalorder %s16, 0
    %p256 = por %p254, %p255
    %p257 = scmp.ne.s32.totalorder %s246, %s249
    %p258 = scmp.eq.s32.totalorder %s21, 1
    %p259 = por %p257, %p258
    %p260 = scmp.ne.s32.totalorder %s249, %s250
    %p261 = scmp.eq.s32.totalorder %s21, 0
    %p262 = por %p260, %p261
    %p263 = scmp.ne.s32.totalorder %s249, %s250
    %p264 = scmp.eq.s32.totalorder %s22, 1
    %p265 = por %p263, %p264
    %p267 = scmp.ne.s32.totalorder %s250, %s266
    %p268 = scmp.eq.s32.totalorder %s22, 0
    %p269 = por %p267, %p268
    %p270 = scmp.le.s32.totalorder 1, %s16
    %p271 = scmp.lt.s32.totalorder %s16, 3
    %p272 = pnand %p270, %p271
    %p273 = pneg %p272
    // Predicated region
    $region9: #{transformer_forward.16} parent=5 // pred_check
      _
    $region10: #{transformer_forward.16} parent=5 // pred_check_branch
      %275 = sbr.rel (%p272) target = $region12
    $region11: #{transformer_forward.16} parent=5 // pred_region
      %s276 = ssub.s32 %s16, 1
      // Predicated region
      $region13: #{transformer_forward.16} parent=11 // pred_check
        %p277 = pneg %p89
      $region14: #{transformer_forward.16} parent=11 // pred_check_branch
        %279 = sbr.rel (%p277) target = $region16
      $region15: #{transformer_forward.16} parent=11 // pred_region
        _
      $region16: #{transformer_forward.16} parent=11 // pred_fallthru
        _
      // Predicated region
      $region17: #{transformer_forward.16} parent=11 // pred_check
        %p280 = pneg %p110
      $region18: #{transformer_forward.16} parent=11 // pred_check_branch
        %282 = sbr.rel (%p280) target = $region20
      $region19: #{transformer_forward.16} parent=11 // pred_region
        _
      $region20: #{transformer_forward.16} parent=11 // pred_fallthru
        _
      // Predicated region
      $region21: #{transformer_forward.16} parent=11 // pred_check
        %p283 = pneg %p131
      $region22: #{transformer_forward.16} parent=11 // pred_check_branch
        %285 = sbr.rel (%p283) target = $region24
      $region23: #{transformer_forward.16} parent=11 // pred_region
        _
      $region24: #{transformer_forward.16} parent=11 // pred_fallthru
        _
      // Predicated region
      $region25: #{transformer_forward.16} parent=11 // pred_check
        %p286 = pneg %p152
      $region26: #{transformer_forward.16} parent=11 // pred_check_branch
        %288 = sbr.rel (%p286) target = $region28
      $region27: #{transformer_forward.16} parent=11 // pred_region
        _
      $region28: #{transformer_forward.16} parent=11 // pred_fallthru
        _
      // Predicated region
      $region29: #{transformer_forward.16} parent=11 // pred_check
        %p289 = pneg %p173
      $region30: #{transformer_forward.16} parent=11 // pred_check_branch
        %291 = sbr.rel (%p289) target = $region32
      $region31: #{transformer_forward.16} parent=11 // pred_region
        _
      $region32: #{transformer_forward.16} parent=11 // pred_fallthru
        _
      // Predicated region
      $region33: #{transformer_forward.16} parent=11 // pred_check
        %p292 = pneg %p194
      $region34: #{transformer_forward.16} parent=11 // pred_check_branch
        %294 = sbr.rel (%p292) target = $region36
      $region35: #{transformer_forward.16} parent=11 // pred_region
        _
      $region36: #{transformer_forward.16} parent=11 // pred_fallthru
        _
      // Predicated region
      $region37: #{transformer_forward.16} parent=11 // pred_check
        %p295 = pneg %p215
      $region38: #{transformer_forward.16} parent=11 // pred_check_branch
        %297 = sbr.rel (%p295) target = $region40
      $region39: #{transformer_forward.16} parent=11 // pred_region
        _
      $region40: #{transformer_forward.16} parent=11 // pred_fallthru
        _
      // Predicated region
      $region41: #{transformer_forward.16} parent=11 // pred_check
        %p298 = pneg %p236
      $region42: #{transformer_forward.16} parent=11 // pred_check_branch
        %300 = sbr.rel (%p298) target = $region44
      $region43: #{transformer_forward.16} parent=11 // pred_region
        _
      $region44: #{transformer_forward.16} parent=11 // pred_fallthru
        _
    $region12: #{transformer_forward.16} parent=5 // pred_fallthru
      _
    %p301 = scmp.lt.s32.totalorder %s16, 2
    // Predicated region
    $region45: #{transformer_forward.16} parent=5 // pred_check
      %p302 = pneg %p301
    $region46: #{transformer_forward.16} parent=5 // pred_check_branch
      %304 = sbr.rel (%p302) target = $region48
    $region47: #{transformer_forward.16} parent=5 // pred_region
      // Predicated region
      $region49: #{transformer_forward.16} parent=47 // pred_check
        %p305 = pneg %p36
      $region50: #{transformer_forward.16} parent=47 // pred_check_branch
        %307 = sbr.rel (%p305) target = $region52
      $region51: #{transformer_forward.16} parent=47 // pred_region
        %p308 = scmp.lt.s32.totalorder %s16, 1
        %s309 = scalar_select %p308, %s16, 1
        %s310 = smul.addr %s309, 8
        %s311 = scalar_lea.vmem %s0, %s310
      $region52: #{transformer_forward.16} parent=47 // pred_fallthru
        _
      // Predicated region
      $region53: #{transformer_forward.16} parent=47 // pred_check
        %p312 = pneg %p62
      $region54: #{transformer_forward.16} parent=47 // pred_check_branch
        %314 = sbr.rel (%p312) target = $region56
      $region55: #{transformer_forward.16} parent=47 // pred_region
        %p315 = scmp.lt.s32.totalorder %s16, 1
        %s316 = scalar_select %p315, %s16, 1
        %s317 = smul.addr %s316, 8
        %s318 = scalar_lea.vmem %s1, %s317
      $region56: #{transformer_forward.16} parent=47 // pred_fallthru
        _
    $region48: #{transformer_forward.16} parent=5 // pred_fallthru
      _
    %p319 = scmp.le.s32.totalorder 1, %s16
    %p320 = scmp.lt.s32.totalorder %s16, 3
    %p321 = pnand %p319, %p320
    %p322 = pneg %p321
    // Predicated region
    $region57: #{transformer_forward.16} parent=5 // pred_check
      _
    $region58: #{transformer_forward.16} parent=5 // pred_check_branch
      %324 = sbr.rel (%p321) target = $region60
    $region59: #{transformer_forward.16} parent=5 // pred_region
      %s325 = ssub.s32 %s16, 1
      %p326 = scmp.lt.s32.totalorder %s21, 1
      %s327 = scalar_select %p326, %s21, 1
      %s328 = smul.addr %s327, 8
      %s329 = scalar_lea.vmem %s0, %s328
      %p330 = pneg %p42
      %p331 = pneg %p39
      %p332 = scmp.lt.s32.totalorder %s21, 1
      %s333 = scalar_select %p332, %s21, 1
      %s334 = smul.addr %s333, 8
      %s335 = scalar_lea.vmem %s1, %s334
      %p336 = pneg %p68
      %p337 = pneg %p65
      %p338 = pneg %p89
      %p339 = pneg %p86
      %p340 = pneg %p110
      %p341 = pneg %p107
      %p342 = pneg %p131
      %p343 = pneg %p128
      %p344 = pneg %p152
      %p345 = pneg %p149
      %p346 = pneg %p173
      %p347 = pneg %p170
      %p348 = pneg %p194
      %p349 = pneg %p191
      %p350 = pneg %p215
      %p351 = pneg %p212
      %p352 = pneg %p236
      %p353 = pneg %p233
      %p354 = pneg %p262
      %p355 = pneg %p259
      %p356 = scmp.lt.s32.totalorder %s21, 1
      %s357 = scalar_select %p356, %s21, 1
      %s358 = smul.addr %s357, 8
      %s359 = scalar_lea.vmem %s10, %s358
      %p360 = scmp.lt.s32.totalorder %s21, 1
      %s361 = scalar_select %p360, %s21, 1
      %s362 = smul.addr %s361, 8
      %s363 = scalar_lea.vmem %s0, %s362
      %p364 = scmp.lt.s32.totalorder %s21, 1
      %s365 = scalar_select %p364, %s21, 1
      %s366 = smul.addr %s365, 8
      %s367 = scalar_lea.vmem %s1, %s366
      %p368 = scmp.lt.s32.totalorder %s21, 1
      %s369 = scalar_select %p368, %s21, 1
      %s370 = smul.addr %s369, 8
      %s371 = scalar_lea.vmem %s10, %s370
      %v373 = vld [vmem:[%s363] sm:$0xff]
      %v374 = vld [vmem:[%s367] sm:$0xff]
      %v375 = vpack.c.bf16 %v373, %v373
      %v376 = vld [vmem:[%s2] sm:$0xf]
      %v377 = vld [vmem:[%s2 + $0x4] sm:$0xf]
      %v378 = vld [vmem:[%s2 + $0x8] sm:$0xf]
      %v379 = vld [vmem:[%s2 + $0xc] sm:$0xf]
      %v380 = vld [vmem:[%s3] sm:$0x1]
      %v382 = vlaneseq
      %v383 = vshrl.u32 %v382, 7
      %v384 = vsub.s32 0, %v383
      %v385 = vrot.slane %v380, %v384
      %v391 = vunpack.c.l.b16 %v376
      %v392 = vunpack.c.l.b16 %v377
      %v393 = vunpack.c.l.b16 %v378
      %v394 = vunpack.c.l.b16 %v379
      %v395 = vpack.c.b16 %v392, %v391
      %v396 = vpack.c.b16 %v394, %v393
      %vm399 = vcmask 261120
      %v401 = vsel %vm399, %v375, 0
      %403 = vmatprep.subr.bf16.mxu0 0
      %404 = vmatpush1.bf16.msra.mxu0 %v395
      %405 = vmatprep.subr.bf16.mxu0 0
      %406 = vmatpush1.bf16.msra.mxu0 %v396
      %407 = vmatprep.subr.bf16.mxu0 0
      %408 = vmatpush1.bf16.msra.mxu0 0
      %409 = vmatprep.subr.bf16.mxu0 0
      %410 = vmatpush1.bf16.msra.mxu0 0
      %411 = vmatprep.subr.bf16.mxu0 0
      %412 = vmatpush1.bf16.msra.mxu0 0
      %413 = vmatprep.subr.bf16.mxu0 0
      %414 = vmatpush1.bf16.msra.mxu0 0
      %415 = vmatprep.subr.bf16.mxu0 0
      %416 = vmatpush1.bf16.msra.mxu0 0
      %417 = vmatprep.subr.bf16.mxu0 0
      %418 = vmatpush1.bf16.msra.mxu0 0
      %419 = vmatprep.subr.bf16.mxu0 0
      %420 = vmatpush1.bf16.msra.mxu0 0
      %421 = vmatprep.subr.bf16.mxu0 0
      %422 = vmatpush1.bf16.msra.mxu0 0
      %423 = vmatprep.subr.bf16.mxu0 0
      %424 = vmatpush1.bf16.msra.mxu0 0
      %425 = vmatprep.subr.bf16.mxu0 0
      %426 = vmatpush1.bf16.msra.mxu0 0
      %427 = vmatprep.subr.bf16.mxu0 0
      %428 = vmatpush1.bf16.msra.mxu0 0
      %429 = vmatprep.subr.bf16.mxu0 0
      %430 = vmatpush1.bf16.msra.mxu0 0
      %431 = vmatprep.subr.bf16.mxu0 0
      %432 = vmatpush1.bf16.msra.mxu0 0
      %433 = vmatprep.subr.bf16.mxu0 0
      %434 = vmatpush1.bf16.msra.mxu0 0
      %435 = vmatprep.mubr.bf16.mxu0 0
      %436 = vmatmul.mubr.bf16.gmra.mrb[0].mxu0 %v401
      %v437 = vpop.f32.mrb[0].mxu0
      %v438 = vadd.f32 %v385, %v437
      %v439 = vpop.f32.mrb[0].mxu0
      %v440 = vpop.f32.mrb[0].mxu0
      %v441 = vpop.f32.mrb[0].mxu0
      %442 = vdwg.mxu0
      %v443 = vmul.f32 %v438, 0.35355338
      %v444 = vpack.c.bf16 %v374, %v374
      %v445 = vld [vmem:[%s4] sm:$0xf]
      %v446 = vld [vmem:[%s4 + $0x4] sm:$0xf]
      %v447 = vld [vmem:[%s4 + $0x8] sm:$0xf]
      %v448 = vld [vmem:[%s4 + $0xc] sm:$0xf]
      %v449 = vld [vmem:[%s5] sm:$0x1]
      %v451 = vlaneseq
      %v452 = vshrl.u32 %v451, 7
      %v453 = vsub.s32 0, %v452
      %v454 = vrot.slane %v449, %v453
      %v460 = vunpack.c.l.b16 %v445
      %v461 = vunpack.c.l.b16 %v446
      %v462 = vunpack.c.l.b16 %v447
      %v463 = vunpack.c.l.b16 %v448
      %v464 = vpack.c.b16 %v461, %v460
      %v465 = vpack.c.b16 %v463, %v462
      %v469 = vsel %vm399, %v444, 0
      %471 = vmatprep.subr.bf16.mxu0 0
      %472 = vmatpush1.bf16.msra.mxu0 %v464
      %473 = vmatprep.subr.bf16.mxu0 0
      %474 = vmatpush1.bf16.msra.mxu0 %v465
      %475 = vmatprep.subr.bf16.mxu0 0
      %476 = vmatpush1.bf16.msra.mxu0 0
      %477 = vmatprep.subr.bf16.mxu0 0
      %478 = vmatpush1.bf16.msra.mxu0 0
      %479 = vmatprep.subr.bf16.mxu0 0
      %480 = vmatpush1.bf16.msra.mxu0 0
      %481 = vmatprep.subr.bf16.mxu0 0
      %482 = vmatpush1.bf16.msra.mxu0 0
      %483 = vmatprep.subr.bf16.mxu0 0
      %484 = vmatpush1.bf16.msra.mxu0 0
      %485 = vmatprep.subr.bf16.mxu0 0
      %486 = vmatpush1.bf16.msra.mxu0 0
      %487 = vmatprep.subr.bf16.mxu0 0
      %488 = vmatpush1.bf16.msra.mxu0 0
      %489 = vmatprep.subr.bf16.mxu0 0
      %490 = vmatpush1.bf16.msra.mxu0 0
      %491 = vmatprep.subr.bf16.mxu0 0
      %492 = vmatpush1.bf16.msra.mxu0 0
      %493 = vmatprep.subr.bf16.mxu0 0
      %494 = vmatpush1.bf16.msra.mxu0 0
      %495 = vmatprep.subr.bf16.mxu0 0
      %496 = vmatpush1.bf16.msra.mxu0 0
      %497 = vmatprep.subr.bf16.mxu0 0
      %498 = vmatpush1.bf16.msra.mxu0 0
      %499 = vmatprep.subr.bf16.mxu0 0
      %500 = vmatpush1.bf16.msra.mxu0 0
      %501 = vmatprep.subr.bf16.mxu0 0
      %502 = vmatpush1.bf16.msra.mxu0 0
      %503 = vmatprep.mubr.bf16.mxu0 0
      %504 = vmatmul.mubr.bf16.gmra.mrb[0].mxu0 %v469
      %v505 = vpop.f32.mrb[0].mxu0
      %v506 = vadd.f32 %v454, %v505
      %v507 = vpop.f32.mrb[0].mxu0
      %v508 = vpop.f32.mrb[0].mxu0
      %v509 = vpop.f32.mrb[0].mxu0
      %510 = vdwg.mxu0
      %v511 = vpack.c.bf16 %v443, %v443
      %v512 = vpack.c.bf16 %v506, %v506
      %vm513 = vcmask 64512
      %v515 = vsel %vm513, %v511, 0
      %v518 = vsel %vm513, %v512, 0
      %520 = vmatprep.subr.bf16.mxu0 0
      %521 = vmatpush1.bf16.xpose.msra.mxu0 %v518
      %522 = vmatprep.subr.bf16.mxu0 0
      %523 = vmatpush1.bf16.xpose.msra.mxu0 0
      %524 = vmatprep.subr.bf16.mxu0 0
      %525 = vmatpush1.bf16.xpose.msra.mxu0 0
      %526 = vmatprep.subr.bf16.mxu0 0
      %527 = vmatpush1.bf16.xpose.msra.mxu0 0
      %528 = vmatprep.subr.bf16.mxu0 0
      %529 = vmatpush1.bf16.xpose.msra.mxu0 0
      %530 = vmatprep.subr.bf16.mxu0 0
      %531 = vmatpush1.bf16.xpose.msra.mxu0 0
      %532 = vmatprep.subr.bf16.mxu0 0
      %533 = vmatpush1.bf16.xpose.msra.mxu0 0
      %534 = vmatprep.subr.bf16.mxu0 0
      %535 = vmatpush1.bf16.xpose.msra.mxu0 0
      %536 = vmatprep.subr.bf16.mxu0 0
      %537 = vmatpush1.bf16.xpose.msra.mxu0 0
      %538 = vmatprep.subr.bf16.mxu0 0
      %539 = vmatpush1.bf16.xpose.msra.mxu0 0
      %540 = vmatprep.subr.bf16.mxu0 0
      %541 = vmatpush1.bf16.xpose.msra.mxu0 0
      %542 = vmatprep.subr.bf16.mxu0 0
      %543 = vmatpush1.bf16.xpose.msra.mxu0 0
      %544 = vmatprep.subr.bf16.mxu0 0
      %545 = vmatpush1.bf16.xpose.msra.mxu0 0
      %546 = vmatprep.subr.bf16.mxu0 0
      %547 = vmatpush1.bf16.xpose.msra.mxu0 0
      %548 = vmatprep.subr.bf16.mxu0 0
      %549 = vmatpush1.bf16.xpose.msra.mxu0 0
      %550 = vmatprep.subr.bf16.mxu0 0
      %551 = vmatpush1.bf16.xpose.msra.mxu0 0
      %552 = vmatprep.mubr.bf16.mxu0 0
      %553 = vmatmul.mubr.bf16.gmra.mrb[0].mxu0 %v515
      %v554 = vpop.f32.mrb[0].mxu0
      %v555 = vadd.f32 0.0, %v554
      %v556 = vpop.f32.mrb[0].mxu0
      %v557 = vpop.f32.mrb[0].mxu0
      %v558 = vpop.f32.mrb[0].mxu0
      %559 = vdwg.mxu0
      %v560 = vsel %vm513, %v555, -inf
      %561 = vmax.xlane.f32.xlu0 %v560
      %v562 = vpop.xlane.xlu0 %561
      %v563 = vsub.f32 %v555, %v562
      %v564 = vmul.f32 %v563, 1.442695
      %v565 = vpow.pop %v564
      %v566 = vsel %vm513, %v565, 0.0
      %567 = vadd.xlane.f32.xlu0 %v566
      %v568 = vpop.xlane.xlu0 %567
      %v569 = vrcp.pop %v568
      %v570 = vmul.f32 %v565, %v569
      %v571 = vpack.c.bf16 %v570, %v570
      %573 = vrot.lane.b32.xlu0 %v512, 96
      %v574 = vpop.permute.xlu0 %573
      %v576 = vsel %vm513, %v571, 0
      %vm578 = vcmask 1043456
      %v580 = vsel %vm578, %v574, 0
      %582 = vmatprep.subr.bf16.mxu0 0
      %583 = vmatpush1.bf16.msra.mxu0 %v580
      %584 = vmatprep.subr.bf16.mxu0 0
      %585 = vmatpush1.bf16.msra.mxu0 0
      %586 = vmatprep.subr.bf16.mxu0 0
      %587 = vmatpush1.bf16.msra.mxu0 0
      %588 = vmatprep.subr.bf16.mxu0 0
      %589 = vmatpush1.bf16.msra.mxu0 0
      %590 = vmatprep.subr.bf16.mxu0 0
      %591 = vmatpush1.bf16.msra.mxu0 0
      %592 = vmatprep.subr.bf16.mxu0 0
      %593 = vmatpush1.bf16.msra.mxu0 0
      %594 = vmatprep.subr.bf16.mxu0 0
      %595 = vmatpush1.bf16.msra.mxu0 0
      %596 = vmatprep.subr.bf16.mxu0 0
      %597 = vmatpush1.bf16.msra.mxu0 0
      %598 = vmatprep.subr.bf16.mxu0 0
      %599 = vmatpush1.bf16.msra.mxu0 0
      %600 = vmatprep.subr.bf16.mxu0 0
      %601 = vmatpush1.bf16.msra.mxu0 0
      %602 = vmatprep.subr.bf16.mxu0 0
      %603 = vmatpush1.bf16.msra.mxu0 0
      %604 = vmatprep.subr.bf16.mxu0 0
      %605 = vmatpush1.bf16.msra.mxu0 0
      %606 = vmatprep.subr.bf16.mxu0 0
      %607 = vmatpush1.bf16.msra.mxu0 0
      %608 = vmatprep.subr.bf16.mxu0 0
      %609 = vmatpush1.bf16.msra.mxu0 0
      %610 = vmatprep.subr.bf16.mxu0 0
      %611 = vmatpush1.bf16.msra.mxu0 0
      %612 = vmatprep.subr.bf16.mxu0 0
      %613 = vmatpush1.bf16.msra.mxu0 0
      %614 = vmatprep.mubr.bf16.mxu0 0
      %615 = vmatmul.mubr.bf16.gmra.mrb[0].mxu0 %v576
      %v616 = vpop.f32.mrb[0].mxu0
      %v617 = vadd.f32 0.0, %v616
      %v618 = vpop.f32.mrb[0].mxu0
      %v619 = vpop.f32.mrb[0].mxu0
      %v620 = vpop.f32.mrb[0].mxu0
      %621 = vdwg.mxu0
      %623 = vrot.lane.b32.xlu0 %v511, 120
      %v624 = vpop.permute.xlu0 %623
      %625 = vrot.lane.b32.xlu0 %v512, 120
      %v626 = vpop.permute.xlu0 %625
      %v628 = vsel %vm513, %v624, 0
      %v631 = vsel %vm513, %v626, 0
      %633 = vmatprep.subr.bf16.mxu0 0
      %634 = vmatpush1.bf16.xpose.msra.mxu0 %v631
      %635 = vmatprep.subr.bf16.mxu0 0
      %636 = vmatpush1.bf16.xpose.msra.mxu0 0
      %637 = vmatprep.subr.bf16.mxu0 0
      %638 = vmatpush1.bf16.xpose.msra.mxu0 0
      %639 = vmatprep.subr.bf16.mxu0 0
      %640 = vmatpush1.bf16.xpose.msra.mxu0 0
      %641 = vmatprep.subr.bf16.mxu0 0
      %642 = vmatpush1.bf16.xpose.msra.mxu0 0
      %643 = vmatprep.subr.bf16.mxu0 0
      %644 = vmatpush1.bf16.xpose.msra.mxu0 0
      %645 = vmatprep.subr.bf16.mxu0 0
      %646 = vmatpush1.bf16.xpose.msra.mxu0 0
      %647 = vmatprep.subr.bf16.mxu0 0
      %648 = vmatpush1.bf16.xpose.msra.mxu0 0
      %649 = vmatprep.subr.bf16.mxu0 0
      %650 = vmatpush1.bf16.xpose.msra.mxu0 0
      %651 = vmatprep.subr.bf16.mxu0 0
      %652 = vmatpush1.bf16.xpose.msra.mxu0 0
      %653 = vmatprep.subr.bf16.mxu0 0
      %654 = vmatpush1.bf16.xpose.msra.mxu0 0
      %655 = vmatprep.subr.bf16.mxu0 0
      %656 = vmatpush1.bf16.xpose.msra.mxu0 0
      %657 = vmatprep.subr.bf16.mxu0 0
      %658 = vmatpush1.bf16.xpose.msra.mxu0 0
      %659 = vmatprep.subr.bf16.mxu0 0
      %660 = vmatpush1.bf16.xpose.msra.mxu0 0
      %661 = vmatprep.subr.bf16.mxu0 0
      %662 = vmatpush1.bf16.xpose.msra.mxu0 0
      %663 = vmatprep.subr.bf16.mxu0 0
      %664 = vmatpush1.bf16.xpose.msra.mxu0 0
      %665 = vmatprep.mubr.bf16.mxu0 0
      %666 = vmatmul.mubr.bf16.gmra.mrb[0].mxu0 %v628
      %v667 = vpop.f32.mrb[0].mxu0
      %v668 = vadd.f32 0.0, %v667
      %v669 = vpop.f32.mrb[0].mxu0
      %v670 = vpop.f32.mrb[0].mxu0
      %v671 = vpop.f32.mrb[0].mxu0
      %672 = vdwg.mxu0
      %v673 = vsel %vm513, %v668, -inf
      %674 = vmax.xlane.f32.xlu0 %v673
      %v675 = vpop.xlane.xlu0 %674
      %v676 = vsub.f32 %v668, %v675
      %v677 = vmul.f32 %v676, 1.442695
      %v678 = vpow.pop %v677
      %v679 = vsel %vm513, %v678, 0.0
      %680 = vadd.xlane.f32.xlu0 %v679
      %v681 = vpop.xlane.xlu0 %680
      %v682 = vrcp.pop %v681
      %v683 = vmul.f32 %v678, %v682
      %v684 = vpack.c.bf16 %v683, %v683
      %685 = vrot.lane.b32.xlu0 %v512, 88
      %v686 = vpop.permute.xlu0 %685
      %v688 = vsel %vm513, %v684, 0
      %v691 = vsel %vm578, %v686, 0
      %693 = vmatprep.subr.bf16.mxu0 0
      %694 = vmatpush1.bf16.msra.mxu0 %v691
      %695 = vmatprep.subr.bf16.mxu0 0
      %696 = vmatpush1.bf16.msra.mxu0 0
      %697 = vmatprep.subr.bf16.mxu0 0
      %698 = vmatpush1.bf16.msra.mxu0 0
      %699 = vmatprep.subr.bf16.mxu0 0
      %700 = vmatpush1.bf16.msra.mxu0 0
      %701 = vmatprep.subr.bf16.mxu0 0
      %702 = vmatpush1.bf16.msra.mxu0 0
      %703 = vmatprep.subr.bf16.mxu0 0
      %704 = vmatpush1.bf16.msra.mxu0 0
      %705 = vmatprep.subr.bf16.mxu0 0
      %706 = vmatpush1.bf16.msra.mxu0 0
      %707 = vmatprep.subr.bf16.mxu0 0
      %708 = vmatpush1.bf16.msra.mxu0 0
      %709 = vmatprep.subr.bf16.mxu0 0
      %710 = vmatpush1.bf16.msra.mxu0 0
      %711 = vmatprep.subr.bf16.mxu0 0
      %712 = vmatpush1.bf16.msra.mxu0 0
      %713 = vmatprep.subr.bf16.mxu0 0
      %714 = vmatpush1.bf16.msra.mxu0 0
      %715 = vmatprep.subr.bf16.mxu0 0
      %716 = vmatpush1.bf16.msra.mxu0 0
      %717 = vmatprep.subr.bf16.mxu0 0
      %718 = vmatpush1.bf16.msra.mxu0 0
      %719 = vmatprep.subr.bf16.mxu0 0
      %720 = vmatpush1.bf16.msra.mxu0 0
      %721 = vmatprep.subr.bf16.mxu0 0
      %722 = vmatpush1.bf16.msra.mxu0 0
      %723 = vmatprep.subr.bf16.mxu0 0
      %724 = vmatpush1.bf16.msra.mxu0 0
      %725 = vmatprep.mubr.bf16.mxu0 0
      %726 = vmatmul.mubr.bf16.gmra.mrb[0].mxu0 %v688
      %v727 = vpop.f32.mrb[0].mxu0
      %v728 = vadd.f32 0.0, %v727
      %v729 = vpop.f32.mrb[0].mxu0
      %v730 = vpop.f32.mrb[0].mxu0
      %v731 = vpop.f32.mrb[0].mxu0
      %732 = vdwg.mxu0
      %733 = vrot.lane.b32.xlu0 %v511, 112
      %v734 = vpop.permute.xlu0 %733
      %735 = vrot.lane.b32.xlu0 %v512, 112
      %v736 = vpop.permute.xlu0 %735
      %v738 = vsel %vm513, %v734, 0
      %v741 = vsel %vm513, %v736, 0
      %743 = vmatprep.subr.bf16.mxu0 0
      %744 = vmatpush1.bf16.xpose.msra.mxu0 %v741
      %745 = vmatprep.subr.bf16.mxu0 0
      %746 = vmatpush1.bf16.xpose.msra.mxu0 0
      %747 = vmatprep.subr.bf16.mxu0 0
      %748 = vmatpush1.bf16.xpose.msra.mxu0 0
      %749 = vmatprep.subr.bf16.mxu0 0
      %750 = vmatpush1.bf16.xpose.msra.mxu0 0
      %751 = vmatprep.subr.bf16.mxu0 0
      %752 = vmatpush1.bf16.xpose.msra.mxu0 0
      %753 = vmatprep.subr.bf16.mxu0 0
      %754 = vmatpush1.bf16.xpose.msra.mxu0 0
      %755 = vmatprep.subr.bf16.mxu0 0
      %756 = vmatpush1.bf16.xpose.msra.mxu0 0
      %757 = vmatprep.subr.bf16.mxu0 0
      %758 = vmatpush1.bf16.xpose.msra.mxu0 0
      %759 = vmatprep.subr.bf16.mxu0 0
      %760 = vmatpush1.bf16.xpose.msra.mxu0 0
      %761 = vmatprep.subr.bf16.mxu0 0
      %762 = vmatpush1.bf16.xpose.msra.mxu0 0
      %763 = vmatprep.subr.bf16.mxu0 0
      %764 = vmatpush1.bf16.xpose.msra.mxu0 0
      %765 = vmatprep.subr.bf16.mxu0 0
      %766 = vmatpush1.bf16.xpose.msra.mxu0 0
      %767 = vmatprep.subr.bf16.mxu0 0
      %768 = vmatpush1.bf16.xpose.msra.mxu0 0
      %769 = vmatprep.subr.bf16.mxu0 0
      %770 = vmatpush1.bf16.xpose.msra.mxu0 0
      %771 = vmatprep.subr.bf16.mxu0 0
      %772 = vmatpush1.bf16.xpose.msra.mxu0 0
      %773 = vmatprep.subr.bf16.mxu0 0
      %774 = vmatpush1.bf16.xpose.msra.mxu0 0
      %775 = vmatprep.mubr.bf16.mxu0 0
      %776 = vmatmul.mubr.bf16.gmra.mrb[0].mxu0 %v738
      %v777 = vpop.f32.mrb[0].mxu0
      %v778 = vadd.f32 0.0, %v777
      %v779 = vpop.f32.mrb[0].mxu0
      %v780 = vpop.f32.mrb[0].mxu0
      %v781 = vpop.f32.mrb[0].mxu0
      %782 = vdwg.mxu0
      %v783 = vsel %vm513, %v778, -inf
      %784 = vmax.xlane.f32.xlu0 %v783
      %v785 = vpop.xlane.xlu0 %784
      %v786 = vsub.f32 %v778, %v785
      %v787 = vmul.f32 %v786, 1.442695
      %v788 = vpow.pop %v787
      %v789 = vsel %vm513, %v788, 0.0
      %790 = vadd.xlane.f32.xlu0 %v789
      %v791 = vpop.xlane.xlu0 %790
      %v792 = vrcp.pop %v791
      %v793 = vmul.f32 %v788, %v792
      %v794 = vpack.c.bf16 %v793, %v793
      %795 = vrot.lane.b32.xlu0 %v512, 80
      %v796 = vpop.permute.xlu0 %795
      %v798 = vsel %vm513, %v794, 0
      %v801 = vsel %vm578, %v796, 0
      %803 = vmatprep.subr.bf16.mxu0 0
      %804 = vmatpush1.bf16.msra.mxu0 %v801
      %805 = vmatprep.subr.bf16.mxu0 0
      %806 = vmatpush1.bf16.msra.mxu0 0
      %807 = vmatprep.subr.bf16.mxu0 0
      %808 = vmatpush1.bf16.msra.mxu0 0
      %809 = vmatprep.subr.bf16.mxu0 0
      %810 = vmatpush1.bf16.msra.mxu0 0
      %811 = vmatprep.subr.bf16.mxu0 0
      %812 = vmatpush1.bf16.msra.mxu0 0
      %813 = vmatprep.subr.bf16.mxu0 0
      %814 = vmatpush1.bf16.msra.mxu0 0
      %815 = vmatprep.subr.bf16.mxu0 0
      %816 = vmatpush1.bf16.msra.mxu0 0
      %817 = vmatprep.subr.bf16.mxu0 0
      %818 = vmatpush1.bf16.msra.mxu0 0
      %819 = vmatprep.subr.bf16.mxu0 0
      %820 = vmatpush1.bf16.msra.mxu0 0
      %821 = vmatprep.subr.bf16.mxu0 0
      %822 = vmatpush1.bf16.msra.mxu0 0
      %823 = vmatprep.subr.bf16.mxu0 0
      %824 = vmatpush1.bf16.msra.mxu0 0
      %825 = vmatprep.subr.bf16.mxu0 0
      %826 = vmatpush1.bf16.msra.mxu0 0
      %827 = vmatprep.subr.bf16.mxu0 0
      %828 = vmatpush1.bf16.msra.mxu0 0
      %829 = vmatprep.subr.bf16.mxu0 0
      %830 = vmatpush1.bf16.msra.mxu0 0
      %831 = vmatprep.subr.bf16.mxu0 0
      %832 = vmatpush1.bf16.msra.mxu0 0
      %833 = vmatprep.subr.bf16.mxu0 0
      %834 = vmatpush1.bf16.msra.mxu0 0
      %835 = vmatprep.mubr.bf16.mxu0 0
      %836 = vmatmul.mubr.bf16.gmra.mrb[0].mxu0 %v798
      %v837 = vpop.f32.mrb[0].mxu0
      %v838 = vadd.f32 0.0, %v837
      %v839 = vpop.f32.mrb[0].mxu0
      %v840 = vpop.f32.mrb[0].mxu0
      %v841 = vpop.f32.mrb[0].mxu0
      %842 = vdwg.mxu0
      %843 = vrot.lane.b32.xlu0 %v511, 104
      %v844 = vpop.permute.xlu0 %843
      %845 = vrot.lane.b32.xlu0 %v512, 104
      %v846 = vpop.permute.xlu0 %845
      %v848 = vsel %vm513, %v844, 0
      %v851 = vsel %vm513, %v846, 0
      %853 = vmatprep.subr.bf16.mxu0 0
      %854 = vmatpush1.bf16.xpose.msra.mxu0 %v851
      %855 = vmatprep.subr.bf16.mxu0 0
      %856 = vmatpush1.bf16.xpose.msra.mxu0 0
      %857 = vmatprep.subr.bf16.mxu0 0
      %858 = vmatpush1.bf16.xpose.msra.mxu0 0
      %859 = vmatprep.subr.bf16.mxu0 0
      %860 = vmatpush1.bf16.xpose.msra.mxu0 0
      %861 = vmatprep.subr.bf16.mxu0 0
      %862 = vmatpush1.bf16.xpose.msra.mxu0 0
      %863 = vmatprep.subr.bf16.mxu0 0
      %864 = vmatpush1.bf16.xpose.msra.mxu0 0
      %865 = vmatprep.subr.bf16.mxu0 0
      %866 = vmatpush1.bf16.xpose.msra.mxu0 0
      %867 = vmatprep.subr.bf16.mxu0 0
      %868 = vmatpush1.bf16.xpose.msra.mxu0 0
      %869 = vmatprep.subr.bf16.mxu0 0
      %870 = vmatpush1.bf16.xpose.msra.mxu0 0
      %871 = vmatprep.subr.bf16.mxu0 0
      %872 = vmatpush1.bf16.xpose.msra.mxu0 0
      %873 = vmatprep.subr.bf16.mxu0 0
      %874 = vmatpush1.bf16.xpose.msra.mxu0 0
      %875 = vmatprep.subr.bf16.mxu0 0
      %876 = vmatpush1.bf16.xpose.msra.mxu0 0
      %877 = vmatprep.subr.bf16.mxu0 0
      %878 = vmatpush1.bf16.xpose.msra.mxu0 0
      %879 = vmatprep.subr.bf16.mxu0 0
      %880 = vmatpush1.bf16.xpose.msra.mxu0 0
      %881 = vmatprep.subr.bf16.mxu0 0
      %882 = vmatpush1.bf16.xpose.msra.mxu0 0
      %883 = vmatprep.subr.bf16.mxu0 0
      %884 = vmatpush1.bf16.xpose.msra.mxu0 0
      %885 = vmatprep.mubr.bf16.mxu0 0
      %886 = vmatmul.mubr.bf16.gmra.mrb[0].mxu0 %v848
      %v887 = vpop.f32.mrb[0].mxu0
      %v888 = vadd.f32 0.0, %v887
      %v889 = vpop.f32.mrb[0].mxu0
      %v890 = vpop.f32.mrb[0].mxu0
      %v891 = vpop.f32.mrb[0].mxu0
      %892 = vdwg.mxu0
      %v893 = vsel %vm513, %v888, -inf
      %894 = vmax.xlane.f32.xlu0 %v893
      %v895 = vpop.xlane.xlu0 %894
      %v896 = vsub.f32 %v888, %v895
      %v897 = vmul.f32 %v896, 1.442695
      %v898 = vpow.pop %v897
      %v899 = vsel %vm513, %v898, 0.0
      %900 = vadd.xlane.f32.xlu0 %v899
      %v901 = vpop.xlane.xlu0 %900
      %v902 = vrcp.pop %v901
      %v903 = vmul.f32 %v898, %v902
      %v904 = vpack.c.bf16 %v903, %v903
      %905 = vrot.lane.b32.xlu0 %v512, 72
      %v906 = vpop.permute.xlu0 %905
      %v908 = vsel %vm513, %v904, 0
      %v911 = vsel %vm578, %v906, 0
      %913 = vmatprep.subr.bf16.mxu0 0
      %914 = vmatpush1.bf16.msra.mxu0 %v911
      %915 = vmatprep.subr.bf16.mxu0 0
      %916 = vmatpush1.bf16.msra.mxu0 0
      %917 = vmatprep.subr.bf16.mxu0 0
      %918 = vmatpush1.bf16.msra.mxu0 0
      %919 = vmatprep.subr.bf16.mxu0 0
      %920 = vmatpush1.bf16.msra.mxu0 0
      %921 = vmatprep.subr.bf16.mxu0 0
      %922 = vmatpush1.bf16.msra.mxu0 0
      %923 = vmatprep.subr.bf16.mxu0 0
      %924 = vmatpush1.bf16.msra.mxu0 0
      %925 = vmatprep.subr.bf16.mxu0 0
      %926 = vmatpush1.bf16.msra.mxu0 0
      %927 = vmatprep.subr.bf16.mxu0 0
      %928 = vmatpush1.bf16.msra.mxu0 0
      %929 = vmatprep.subr.bf16.mxu0 0
      %930 = vmatpush1.bf16.msra.mxu0 0
      %931 = vmatprep.subr.bf16.mxu0 0
      %932 = vmatpush1.bf16.msra.mxu0 0
      %933 = vmatprep.subr.bf16.mxu0 0
      %934 = vmatpush1.bf16.msra.mxu0 0
      %935 = vmatprep.subr.bf16.mxu0 0
      %936 = vmatpush1.bf16.msra.mxu0 0
      %937 = vmatprep.subr.bf16.mxu0 0
      %938 = vmatpush1.bf16.msra.mxu0 0
      %939 = vmatprep.subr.bf16.mxu0 0
      %940 = vmatpush1.bf16.msra.mxu0 0
      %941 = vmatprep.subr.bf16.mxu0 0
      %942 = vmatpush1.bf16.msra.mxu0 0
      %943 = vmatprep.subr.bf16.mxu0 0
      %944 = vmatpush1.bf16.msra.mxu0 0
      %945 = vmatprep.mubr.bf16.mxu0 0
      %946 = vmatmul.mubr.bf16.gmra.mrb[0].mxu0 %v908
      %v947 = vpop.f32.mrb[0].mxu0
      %v948 = vadd.f32 0.0, %v947
      %v949 = vpop.f32.mrb[0].mxu0
      %v950 = vpop.f32.mrb[0].mxu0
      %v951 = vpop.f32.mrb[0].mxu0
      %952 = vdwg.mxu0
      %954 = vrot.lane.b32.xlu0 %v728, 8
      %v955 = vpop.permute.xlu0 %954
      %958 = vrot.lane.b32.xlu0 %v838, 16
      %v959 = vpop.permute.xlu0 %958
      %962 = vrot.lane.b32.xlu0 %v948, 24
      %v963 = vpop.permute.xlu0 %962
      %v965 = vsel %vm513, %v617, %v955
      %vm966 = vcmask 130048
      %v967 = vsel %vm966, %v965, %v959
      %vm968 = vcmask 195584
      %v969 = vsel %vm968, %v967, %v963
      %v970 = vpack.c.bf16 %v969, %v969
      %v971 = vld [vmem:[%s6] sm:$0xf]
      %v972 = vld [vmem:[%s6 + $0x4] sm:$0xf]
      %v973 = vld [vmem:[%s6 + $0x8] sm:$0xf]
      %v974 = vld [vmem:[%s6 + $0xc] sm:$0xf]
      %v975 = vld [vmem:[%s7] sm:$0x1]
      %v977 = vlaneseq
      %v978 = vshrl.u32 %v977, 7
      %v979 = vsub.s32 0, %v978
      %v980 = vrot.slane %v975, %v979
      %v986 = vunpack.c.l.b16 %v971
      %v987 = vunpack.c.l.b16 %v972
      %v988 = vunpack.c.l.b16 %v973
      %v989 = vunpack.c.l.b16 %v974
      %v990 = vpack.c.b16 %v987, %v986
      %v991 = vpack.c.b16 %v989, %v988
      %v995 = vsel %vm399, %v970, 0
      %997 = vmatprep.subr.bf16.mxu0 0
      %998 = vmatpush1.bf16.msra.mxu0 %v990
      %999 = vmatprep.subr.bf16.mxu0 0
      %1000 = vmatpush1.bf16.msra.mxu0 %v991
      %1001 = vmatprep.subr.bf16.mxu0 0
      %1002 = vmatpush1.bf16.msra.mxu0 0
      %1003 = vmatprep.subr.bf16.mxu0 0
      %1004 = vmatpush1.bf16.msra.mxu0 0
      %1005 = vmatprep.subr.bf16.mxu0 0
      %1006 = vmatpush1.bf16.msra.mxu0 0
      %1007 = vmatprep.subr.bf16.mxu0 0
      %1008 = vmatpush1.bf16.msra.mxu0 0
      %1009 = vmatprep.subr.bf16.mxu0 0
      %1010 = vmatpush1.bf16.msra.mxu0 0
      %1011 = vmatprep.subr.bf16.mxu0 0
      %1012 = vmatpush1.bf16.msra.mxu0 0
      %1013 = vmatprep.subr.bf16.mxu0 0
      %1014 = vmatpush1.bf16.msra.mxu0 0
      %1015 = vmatprep.subr.bf16.mxu0 0
      %1016 = vmatpush1.bf16.msra.mxu0 0
      %1017 = vmatprep.subr.bf16.mxu0 0
      %1018 = vmatpush1.bf16.msra.mxu0 0
      %1019 = vmatprep.subr.bf16.mxu0 0
      %1020 = vmatpush1.bf16.msra.mxu0 0
      %1021 = vmatprep.subr.bf16.mxu0 0
      %1022 = vmatpush1.bf16.msra.mxu0 0
      %1023 = vmatprep.subr.bf16.mxu0 0
      %1024 = vmatpush1.bf16.msra.mxu0 0
      %1025 = vmatprep.subr.bf16.mxu0 0
      %1026 = vmatpush1.bf16.msra.mxu0 0
      %1027 = vmatprep.subr.bf16.mxu0 0
      %1028 = vmatpush1.bf16.msra.mxu0 0
      %1029 = vmatprep.mubr.bf16.mxu0 0
      %1030 = vmatmul.mubr.bf16.gmra.mrb[0].mxu0 %v995
      %v1031 = vpop.f32.mrb[0].mxu0
      %v1032 = vadd.f32 %v980, %v1031
      %v1033 = vpop.f32.mrb[0].mxu0
      %v1034 = vpop.f32.mrb[0].mxu0
      %v1035 = vpop.f32.mrb[0].mxu0
      %1036 = vdwg.mxu0
      %v1037 = vadd.f32 %v1032, %v373
      %v1038 = vsel %vm399, %v1037, 0.0
      %1039 = vadd.xlane.f32.xlu0 %v1038
      %v1040 = vpop.xlane.xlu0 %1039
      %v1041 = vrcp.pop 32.0
      %v1042 = vmul.f32 %v1040, %v1041
      %v1043 = vsub.f32 %v1037, %v1042
      %v1044 = vmul.f32 %v1043, %v1043
      %v1045 = vsel %vm399, %v1044, 0.0
      %1046 = vadd.xlane.f32.xlu0 %v1045
      %v1047 = vpop.xlane.xlu0 %1046
      %v1048 = vmul.f32 %v1047, %v1041
      %v1049 = vadd.f32 %v1048, 1e-05
      %v1050 = vrsqrt.pop %v1049
      %v1051 = vmul.f32 %v1043, %v1050
      %v1052 = vld [vmem:[%s8] sm:$0x1]
      %v1054 = vlaneseq
      %v1055 = vshrl.u32 %v1054, 7
      %v1056 = vsub.s32 0, %v1055
      %v1057 = vrot.slane %v1052, %v1056
      %v1059 = vmul.f32 %v1051, %v1057
      %v1060 = vld [vmem:[%s9] sm:$0x1]
      %v1062 = vlaneseq
      %v1063 = vshrl.u32 %v1062, 7
      %v1064 = vsub.s32 0, %v1063
      %v1065 = vrot.slane %v1060, %v1064
      %v1067 = vadd.f32 %v1059, %v1065
      %1068 = vst.msk [vmem:[%s371] sm:$0xff] %vm399, %v1067
      %p1069 = scmp.lt.s32.totalorder %s21, 1
      %s1070 = scalar_select %p1069, %s21, 1
      %s1071 = smul.addr %s1070, 8
      %s1072 = scalar_lea.vmem %s10, %s1071
      // Predicated region
      $region61: #{transformer_forward.16} parent=59 // pred_check
        %p1073 = pneg %p259
      $region62: #{transformer_forward.16} parent=59 // pred_check_branch
        %1075 = sbr.rel (%p1073) target = $region64
      $region63: #{transformer_forward.16} parent=59 // pred_region
        _
      $region64: #{transformer_forward.16} parent=59 // pred_fallthru
        _
    $region60: #{transformer_forward.16} parent=5 // pred_fallthru
      _
    %p1076 = scmp.le.s32.totalorder 2, %s16
    // Predicated region
    $region65: #{transformer_forward.16} parent=5 // pred_check
      %p1077 = pneg %p1076
    $region66: #{transformer_forward.16} parent=5 // pred_check_branch
      %1079 = sbr.rel (%p1077) target = $region68
    $region67: #{transformer_forward.16} parent=5 // pred_region
      %s1080 = ssub.s32 %s16, 2
      // Predicated region
      $region69: #{transformer_forward.16} parent=67 // pred_check
        %p1081 = pneg %p265
      $region70: #{transformer_forward.16} parent=67 // pred_check_branch
        %1083 = sbr.rel (%p1081) target = $region72
      $region71: #{transformer_forward.16} parent=67 // pred_region
        %p1084 = scmp.lt.s32.totalorder %s22, 1
        %s1085 = scalar_select %p1084, %s22, 1
        %s1086 = smul.addr %s1085, 8
        %s1087 = scalar_lea.vmem %s10, %s1086
      $region72: #{transformer_forward.16} parent=67 // pred_fallthru
        _
    $region68: #{transformer_forward.16} parent=5 // pred_fallthru
      _
  $region6: #{transformer_forward.16} parent=0 // loop_footer
    %s20 = sadd.s32 1, %s16
  $region7: #{transformer_forward.16} parent=0 // loop_footer_branch
    %15 = sbr.rel target = $region3
  $region8: #{transformer_forward.16} parent=0 // loop_exit
    _

// kernel: transformer_forward.15
$region0: #{transformer_forward.15}
  #allocation0 [shape = 'u32[]', space=smem, size = 0x4, offset = 0x4, fixed_abs, tag = 'smem constant byte address 0x4 - core index']
  #allocation1 [shape = 'u32[144,128]{1,0:T(1,128)}', space=vmem, size = 0x12000, scoped, tag = 'internal scratch']
  %s0 = inlined_call_operand.vmem [shape: f32[2,8,32], index: 0, kind: input, shape index: {}]
  %s1 = inlined_call_operand.vmem [shape: bf16[32,96], index: 1, kind: input, shape index: {}]
  %s2 = inlined_call_operand.vmem [shape: f32[1,96], index: 2, kind: input, shape index: {}]
  %s3 = inlined_call_operand.vmem [shape: bf16[32,32], index: 3, kind: input, shape index: {}]
  %s4 = inlined_call_operand.vmem [shape: f32[1,32], index: 4, kind: input, shape index: {}]
  %s5 = inlined_call_operand.vmem [shape: f32[1,32], index: 5, kind: input, shape index: {}]
  %s6 = inlined_call_operand.vmem [shape: f32[1,32], index: 6, kind: input, shape index: {}]
  %s7 = inlined_call_operand.vmem [shape: f32[2,8,32], index: 7, kind: output, shape index: {}]
  %s8 = sld [smem:[#allocation0]]
  $region61: #{transformer_forward.15} parent=0
    _
  %s10 = ssub.s32 1, %s8
  %s11 = scalar_select 0, %s10, %s8
  loop: start=0, step=1, limit=4
  $region2: #{transformer_forward.15} parent=0 // loop_pre_header
    _
  $region3: #{transformer_forward.15} parent=0 // loop_header
    %s13 = sphi 0, %s17
    %p14 = scmp.ge.s32.totalorder %s13, 4
    %s23 = sphi 0, %s25
    %s26 = sphi 0, %s23
    %s27 = sphi 0, %s26
    %s43 = sphi 0, %s27
    %s47 = sphi 0, %s47
    %s49 = sphi 0, %s47
    %s50 = sphi 0, %s49
    %s64 = sphi 0, %s50
    %s68 = sphi 0, %s68
    %s70 = sphi 0, %s68
    %s71 = sphi 0, %s70
    %s85 = sphi 0, %s71
    %s89 = sphi 0, %s89
    %s91 = sphi 0, %s89
    %s92 = sphi 0, %s91
    %s106 = sphi 0, %s92
    %s110 = sphi 0, %s110
    %s112 = sphi 0, %s110
    %s113 = sphi 0, %s112
    %s127 = sphi 0, %s113
    %s131 = sphi 0, %s131
    %s133 = sphi 0, %s131
    %s134 = sphi 0, %s133
    %s148 = sphi 0, %s134
    %s152 = sphi 0, %s152
    %s154 = sphi 0, %s152
    %s155 = sphi 0, %s154
    %s169 = sphi 0, %s155
    %s175 = sphi 0, %s177
    %s178 = sphi 0, %s175
    %s179 = sphi 0, %s178
    %s195 = sphi 0, %s179
  $region4: #{transformer_forward.15} parent=0 // loop_header_branch
    %16 = sbr.rel (%p14) target = $region8
  $region5: #{transformer_forward.15} parent=0 // loop_body
    %s18 = ssub.s32 %s13, 1
    %s19 = ssub.s32 %s13, 2
    %s20 = sadd.s32 %s13, 1
    %s21 = ssub.s32 %s13, %s20
    %p22 = scmp.eq.s32.totalorder %s21, 0
    %s24 = sadd.s32 %s23, 1
    %s25 = scalar_select %p22, %s23, %s24
    %p28 = pneg %p22
    %p29 = scmp.eq.s32.totalorder %s13, 1
    %p30 = por %p28, %p29
    %p31 = scmp.ne.s32.totalorder %s23, %s26
    %p32 = scmp.eq.s32.totalorder %s13, 0
    %p33 = por %p31, %p32
    %p34 = scmp.ne.s32.totalorder %s23, %s26
    %p35 = scmp.eq.s32.totalorder %s18, 1
    %p36 = por %p34, %p35
    %p37 = scmp.ne.s32.totalorder %s26, %s27
    %p38 = scmp.eq.s32.totalorder %s18, 0
    %p39 = por %p37, %p38
    %p40 = scmp.ne.s32.totalorder %s26, %s27
    %p41 = scmp.eq.s32.totalorder %s19, 1
    %p42 = por %p40, %p41
    %p44 = scmp.ne.s32.totalorder %s27, %s43
    %p45 = scmp.eq.s32.totalorder %s19, 0
    %p46 = por %p44, %p45
    %s48 = sadd.s32 %s47, 1
    %p51 = scmp.eq.s32.totalorder %s13, 1
    %p52 = scmp.ne.s32.totalorder %s47, %s49
    %p53 = scmp.eq.s32.totalorder %s13, 0
    %p54 = por %p52, %p53
    %p55 = scmp.ne.s32.totalorder %s47, %s49
    %p56 = scmp.eq.s32.totalorder %s18, 1
    %p57 = por %p55, %p56
    %p58 = scmp.ne.s32.totalorder %s49, %s50
    %p59 = scmp.eq.s32.totalorder %s18, 0
    %p60 = por %p58, %p59
    %p61 = scmp.ne.s32.totalorder %s49, %s50
    %p62 = scmp.eq.s32.totalorder %s19, 1
    %p63 = por %p61, %p62
    %p65 = scmp.ne.s32.totalorder %s50, %s64
    %p66 = scmp.eq.s32.totalorder %s19, 0
    %p67 = por %p65, %p66
    %s69 = sadd.s32 %s68, 1
    %p72 = scmp.eq.s32.totalorder %s13, 1
    %p73 = scmp.ne.s32.totalorder %s68, %s70
    %p74 = scmp.eq.s32.totalorder %s13, 0
    %p75 = por %p73, %p74
    %p76 = scmp.ne.s32.totalorder %s68, %s70
    %p77 = scmp.eq.s32.totalorder %s18, 1
    %p78 = por %p76, %p77
    %p79 = scmp.ne.s32.totalorder %s70, %s71
    %p80 = scmp.eq.s32.totalorder %s18, 0
    %p81 = por %p79, %p80
    %p82 = scmp.ne.s32.totalorder %s70, %s71
    %p83 = scmp.eq.s32.totalorder %s19, 1
    %p84 = por %p82, %p83
    %p86 = scmp.ne.s32.totalorder %s71, %s85
    %p87 = scmp.eq.s32.totalorder %s19, 0
    %p88 = por %p86, %p87
    %s90 = sadd.s32 %s89, 1
    %p93 = scmp.eq.s32.totalorder %s13, 1
    %p94 = scmp.ne.s32.totalorder %s89, %s91
    %p95 = scmp.eq.s32.totalorder %s13, 0
    %p96 = por %p94, %p95
    %p97 = scmp.ne.s32.totalorder %s89, %s91
    %p98 = scmp.eq.s32.totalorder %s18, 1
    %p99 = por %p97, %p98
    %p100 = scmp.ne.s32.totalorder %s91, %s92
    %p101 = scmp.eq.s32.totalorder %s18, 0
    %p102 = por %p100, %p101
    %p103 = scmp.ne.s32.totalorder %s91, %s92
    %p104 = scmp.eq.s32.totalorder %s19, 1
    %p105 = por %p103, %p104
    %p107 = scmp.ne.s32.totalorder %s92, %s106
    %p108 = scmp.eq.s32.totalorder %s19, 0
    %p109 = por %p107, %p108
    %s111 = sadd.s32 %s110, 1
    %p114 = scmp.eq.s32.totalorder %s13, 1
    %p115 = scmp.ne.s32.totalorder %s110, %s112
    %p116 = scmp.eq.s32.totalorder %s13, 0
    %p117 = por %p115, %p116
    %p118 = scmp.ne.s32.totalorder %s110, %s112
    %p119 = scmp.eq.s32.totalorder %s18, 1
    %p120 = por %p118, %p119
    %p121 = scmp.ne.s32.totalorder %s112, %s113
    %p122 = scmp.eq.s32.totalorder %s18, 0
    %p123 = por %p121, %p122
    %p124 = scmp.ne.s32.totalorder %s112, %s113
    %p125 = scmp.eq.s32.totalorder %s19, 1
    %p126 = por %p124, %p125
    %p128 = scmp.ne.s32.totalorder %s113, %s127
    %p129 = scmp.eq.s32.totalorder %s19, 0
    %p130 = por %p128, %p129
    %s132 = sadd.s32 %s131, 1
    %p135 = scmp.eq.s32.totalorder %s13, 1
    %p136 = scmp.ne.s32.totalorder %s131, %s133
    %p137 = scmp.eq.s32.totalorder %s13, 0
    %p138 = por %p136, %p137
    %p139 = scmp.ne.s32.totalorder %s131, %s133
    %p140 = scmp.eq.s32.totalorder %s18, 1
    %p141 = por %p139, %p140
    %p142 = scmp.ne.s32.totalorder %s133, %s134
    %p143 = scmp.eq.s32.totalorder %s18, 0
    %p144 = por %p142, %p143
    %p145 = scmp.ne.s32.totalorder %s133, %s134
    %p146 = scmp.eq.s32.totalorder %s19, 1
    %p147 = por %p145, %p146
    %p149 = scmp.ne.s32.totalorder %s134, %s148
    %p150 = scmp.eq.s32.totalorder %s19, 0
    %p151 = por %p149, %p150
    %s153 = sadd.s32 %s152, 1
    %p156 = scmp.eq.s32.totalorder %s13, 1
    %p157 = scmp.ne.s32.totalorder %s152, %s154
    %p158 = scmp.eq.s32.totalorder %s13, 0
    %p159 = por %p157, %p158
    %p160 = scmp.ne.s32.totalorder %s152, %s154
    %p161 = scmp.eq.s32.totalorder %s18, 1
    %p162 = por %p160, %p161
    %p163 = scmp.ne.s32.totalorder %s154, %s155
    %p164 = scmp.eq.s32.totalorder %s18, 0
    %p165 = por %p163, %p164
    %p166 = scmp.ne.s32.totalorder %s154, %s155
    %p167 = scmp.eq.s32.totalorder %s19, 1
    %p168 = por %p166, %p167
    %p170 = scmp.ne.s32.totalorder %s155, %s169
    %p171 = scmp.eq.s32.totalorder %s19, 0
    %p172 = por %p170, %p171
    %s173 = ssub.s32 %s13, %s20
    %p174 = scmp.eq.s32.totalorder %s173, 0
    %s176 = sadd.s32 %s175, 1
    %s177 = scalar_select %p174, %s175, %s176
    %p180 = pneg %p174
    %p181 = scmp.eq.s32.totalorder %s13, 1
    %p182 = por %p180, %p181
    %p183 = scmp.ne.s32.totalorder %s175, %s178
    %p184 = scmp.eq.s32.totalorder %s13, 0
    %p185 = por %p183, %p184
    %p186 = scmp.ne.s32.totalorder %s175, %s178
    %p187 = scmp.eq.s32.totalorder %s18, 1
    %p188 = por %p186, %p187
    %p189 = scmp.ne.s32.totalorder %s178, %s179
    %p190 = scmp.eq.s32.totalorder %s18, 0
    %p191 = por %p189, %p190
    %p192 = scmp.ne.s32.totalorder %s178, %s179
    %p193 = scmp.eq.s32.totalorder %s19, 1
    %p194 = por %p192, %p193
    %p196 = scmp.ne.s32.totalorder %s179, %s195
    %p197 = scmp.eq.s32.totalorder %s19, 0
    %p198 = por %p196, %p197
    %p199 = scmp.le.s32.totalorder 1, %s13
    %p200 = scmp.lt.s32.totalorder %s13, 3
    %p201 = pnand %p199, %p200
    %p202 = pneg %p201
    // Predicated region
    $region9: #{transformer_forward.15} parent=5 // pred_check
      _
    $region10: #{transformer_forward.15} parent=5 // pred_check_branch
      %204 = sbr.rel (%p201) target = $region12
    $region11: #{transformer_forward.15} parent=5 // pred_region
      %s205 = ssub.s32 %s13, 1
      // Predicated region
      $region13: #{transformer_forward.15} parent=11 // pred_check
        %p206 = pneg %p60
      $region14: #{transformer_forward.15} parent=11 // pred_check_branch
        %208 = sbr.rel (%p206) target = $region16
      $region15: #{transformer_forward.15} parent=11 // pred_region
        _
      $region16: #{transformer_forward.15} parent=11 // pred_fallthru
        _
      // Predicated region
      $region17: #{transformer_forward.15} parent=11 // pred_check
        %p209 = pneg %p81
      $region18: #{transformer_forward.15} parent=11 // pred_check_branch
        %211 = sbr.rel (%p209) target = $region20
      $region19: #{transformer_forward.15} parent=11 // pred_region
        _
      $region20: #{transformer_forward.15} parent=11 // pred_fallthru
        _
      // Predicated region
      $region21: #{transformer_forward.15} parent=11 // pred_check
        %p212 = pneg %p102
      $region22: #{transformer_forward.15} parent=11 // pred_check_branch
        %214 = sbr.rel (%p212) target = $region24
      $region23: #{transformer_forward.15} parent=11 // pred_region
        _
      $region24: #{transformer_forward.15} parent=11 // pred_fallthru
        _
      // Predicated region
      $region25: #{transformer_forward.15} parent=11 // pred_check
        %p215 = pneg %p123
      $region26: #{transformer_forward.15} parent=11 // pred_check_branch
        %217 = sbr.rel (%p215) target = $region28
      $region27: #{transformer_forward.15} parent=11 // pred_region
        _
      $region28: #{transformer_forward.15} parent=11 // pred_fallthru
        _
      // Predicated region
      $region29: #{transformer_forward.15} parent=11 // pred_check
        %p218 = pneg %p144
      $region30: #{transformer_forward.15} parent=11 // pred_check_branch
        %220 = sbr.rel (%p218) target = $region32
      $region31: #{transformer_forward.15} parent=11 // pred_region
        _
      $region32: #{transformer_forward.15} parent=11 // pred_fallthru
        _
      // Predicated region
      $region33: #{transformer_forward.15} parent=11 // pred_check
        %p221 = pneg %p165
      $region34: #{transformer_forward.15} parent=11 // pred_check_branch
        %223 = sbr.rel (%p221) target = $region36
      $region35: #{transformer_forward.15} parent=11 // pred_region
        _
      $region36: #{transformer_forward.15} parent=11 // pred_fallthru
        _
    $region12: #{transformer_forward.15} parent=5 // pred_fallthru
      _
    %p224 = scmp.lt.s32.totalorder %s13, 2
    // Predicated region
    $region37: #{transformer_forward.15} parent=5 // pred_check
      %p225 = pneg %p224
    $region38: #{transformer_forward.15} parent=5 // pred_check_branch
      %227 = sbr.rel (%p225) target = $region40
    $region39: #{transformer_forward.15} parent=5 // pred_region
      // Predicated region
      $region41: #{transformer_forward.15} parent=39 // pred_check
        %p228 = pneg %p33
      $region42: #{transformer_forward.15} parent=39 // pred_check_branch
        %230 = sbr.rel (%p228) target = $region44
      $region43: #{transformer_forward.15} parent=39 // pred_region
        %p231 = scmp.lt.s32.totalorder %s13, 1
        %s232 = scalar_select %p231, %s13, 1
        %s233 = smul.addr %s232, 8
        %s234 = scalar_lea.vmem %s0, %s233
      $region44: #{transformer_forward.15} parent=39 // pred_fallthru
        _
    $region40: #{transformer_forward.15} parent=5 // pred_fallthru
      _
    %p235 = scmp.le.s32.totalorder 1, %s13
    %p236 = scmp.lt.s32.totalorder %s13, 3
    %p237 = pnand %p235, %p236
    %p238 = pneg %p237
    // Predicated region
    $region45: #{transformer_forward.15} parent=5 // pred_check
      _
    $region46: #{transformer_forward.15} parent=5 // pred_check_branch
      %240 = sbr.rel (%p237) target = $region48
    $region47: #{transformer_forward.15} parent=5 // pred_region
      %s241 = ssub.s32 %s13, 1
      %p242 = scmp.lt.s32.totalorder %s18, 1
      %s243 = scalar_select %p242, %s18, 1
      %s244 = smul.addr %s243, 8
      %s245 = scalar_lea.vmem %s0, %s244
      %p246 = pneg %p39
      %p247 = pneg %p36
      %p248 = pneg %p60
      %p249 = pneg %p57
      %p250 = pneg %p81
      %p251 = pneg %p78
      %p252 = pneg %p102
      %p253 = pneg %p99
      %p254 = pneg %p123
      %p255 = pneg %p120
      %p256 = pneg %p144
      %p257 = pneg %p141
      %p258 = pneg %p165
      %p259 = pneg %p162
      %p260 = pneg %p191
      %p261 = pneg %p188
      %p262 = scmp.lt.s32.totalorder %s18, 1
      %s263 = scalar_select %p262, %s18, 1
      %s264 = smul.addr %s263, 8
      %s265 = scalar_lea.vmem %s7, %s264
      %p266 = scmp.lt.s32.totalorder %s18, 1
      %s267 = scalar_select %p266, %s18, 1
      %s268 = smul.addr %s267, 8
      %s269 = scalar_lea.vmem %s0, %s268
      %p270 = scmp.lt.s32.totalorder %s18, 1
      %s271 = scalar_select %p270, %s18, 1
      %s272 = smul.addr %s271, 8
      %s273 = scalar_lea.vmem %s7, %s272
      %v275 = vld [vmem:[%s269] sm:$0xff]
      %v276 = vpack.c.bf16 %v275, %v275
      %v277 = vld [vmem:[%s1] sm:$0xf]
      %v278 = vld [vmem:[%s1 + $0x4] sm:$0xf]
      %v279 = vld [vmem:[%s1 + $0x8] sm:$0xf]
      %v280 = vld [vmem:[%s1 + $0xc] sm:$0xf]
      %v281 = vld [vmem:[%s2] sm:$0x1]
      %v283 = vlaneseq
      %v284 = vshrl.u32 %v283, 7
      %v285 = vsub.s32 0, %v284
      %v286 = vrot.slane %v281, %v285
      %v292 = vunpack.c.l.b16 %v277
      %v293 = vunpack.c.l.b16 %v278
      %v294 = vunpack.c.l.b16 %v279
      %v295 = vunpack.c.l.b16 %v280
      %v296 = vpack.c.b16 %v293, %v292
      %v297 = vpack.c.b16 %v295, %v294
      %vm300 = vcmask 261120
      %v302 = vsel %vm300, %v276, 0
      %304 = vmatprep.subr.bf16.mxu0 0
      %305 = vmatpush1.bf16.msra.mxu0 %v296
      %306 = vmatprep.subr.bf16.mxu0 0
      %307 = vmatpush1.bf16.msra.mxu0 %v297
      %308 = vmatprep.subr.bf16.mxu0 0
      %309 = vmatpush1.bf16.msra.mxu0 0
      %310 = vmatprep.subr.bf16.mxu0 0
      %311 = vmatpush1.bf16.msra.mxu0 0
      %312 = vmatprep.subr.bf16.mxu0 0
      %313 = vmatpush1.bf16.msra.mxu0 0
      %314 = vmatprep.subr.bf16.mxu0 0
      %315 = vmatpush1.bf16.msra.mxu0 0
      %316 = vmatprep.subr.bf16.mxu0 0
      %317 = vmatpush1.bf16.msra.mxu0 0
      %318 = vmatprep.subr.bf16.mxu0 0
      %319 = vmatpush1.bf16.msra.mxu0 0
      %320 = vmatprep.subr.bf16.mxu0 0
      %321 = vmatpush1.bf16.msra.mxu0 0
      %322 = vmatprep.subr.bf16.mxu0 0
      %323 = vmatpush1.bf16.msra.mxu0 0
      %324 = vmatprep.subr.bf16.mxu0 0
      %325 = vmatpush1.bf16.msra.mxu0 0
      %326 = vmatprep.subr.bf16.mxu0 0
      %327 = vmatpush1.bf16.msra.mxu0 0
      %328 = vmatprep.subr.bf16.mxu0 0
      %329 = vmatpush1.bf16.msra.mxu0 0
      %330 = vmatprep.subr.bf16.mxu0 0
      %331 = vmatpush1.bf16.msra.mxu0 0
      %332 = vmatprep.subr.bf16.mxu0 0
      %333 = vmatpush1.bf16.msra.mxu0 0
      %334 = vmatprep.subr.bf16.mxu0 0
      %335 = vmatpush1.bf16.msra.mxu0 0
      %336 = vmatprep.mubr.bf16.mxu0 0
      %337 = vmatmul.mubr.bf16.gmra.mrb[0].mxu0 %v302
      %v338 = vpop.f32.mrb[0].mxu0
      %v339 = vadd.f32 %v286, %v338
      %v340 = vpop.f32.mrb[0].mxu0
      %v341 = vpop.f32.mrb[0].mxu0
      %v342 = vpop.f32.mrb[0].mxu0
      %343 = vdwg.mxu0
      %v344 = vmul.f32 %v339, 0.35355338
      %v345 = vlaneseq
      %v346 = vshrl.u32 %v345, 7
      %v347 = vlaneseq
      %v348 = vand.u32 %v347, 127
      %vm349 = vcmp.gt.s32.totalorder %v348, %v346
      %v350 = vsel %vm349, -1e+09, 0.0
      %v351 = vpack.c.bf16 %v344, %v344
      %v352 = vpack.c.bf16 %v339, %v339
      %354 = vrot.lane.b32.xlu0 %v352, 96
      %v355 = vpop.permute.xlu0 %354
      %vm356 = vcmask 64512
      %v358 = vsel %vm356, %v351, 0
      %v361 = vsel %vm356, %v355, 0
      %363 = vmatprep.subr.bf16.mxu0 0
      %364 = vmatpush1.bf16.xpose.msra.mxu0 %v361
      %365 = vmatprep.subr.bf16.mxu0 0
      %366 = vmatpush1.bf16.xpose.msra.mxu0 0
      %367 = vmatprep.subr.bf16.mxu0 0
      %368 = vmatpush1.bf16.xpose.msra.mxu0 0
      %369 = vmatprep.subr.bf16.mxu0 0
      %370 = vmatpush1.bf16.xpose.msra.mxu0 0
      %371 = vmatprep.subr.bf16.mxu0 0
      %372 = vmatpush1.bf16.xpose.msra.mxu0 0
      %373 = vmatprep.subr.bf16.mxu0 0
      %374 = vmatpush1.bf16.xpose.msra.mxu0 0
      %375 = vmatprep.subr.bf16.mxu0 0
      %376 = vmatpush1.bf16.xpose.msra.mxu0 0
      %377 = vmatprep.subr.bf16.mxu0 0
      %378 = vmatpush1.bf16.xpose.msra.mxu0 0
      %379 = vmatprep.subr.bf16.mxu0 0
      %380 = vmatpush1.bf16.xpose.msra.mxu0 0
      %381 = vmatprep.subr.bf16.mxu0 0
      %382 = vmatpush1.bf16.xpose.msra.mxu0 0
      %383 = vmatprep.subr.bf16.mxu0 0
      %384 = vmatpush1.bf16.xpose.msra.mxu0 0
      %385 = vmatprep.subr.bf16.mxu0 0
      %386 = vmatpush1.bf16.xpose.msra.mxu0 0
      %387 = vmatprep.subr.bf16.mxu0 0
      %388 = vmatpush1.bf16.xpose.msra.mxu0 0
      %389 = vmatprep.subr.bf16.mxu0 0
      %390 = vmatpush1.bf16.xpose.msra.mxu0 0
      %391 = vmatprep.subr.bf16.mxu0 0
      %392 = vmatpush1.bf16.xpose.msra.mxu0 0
      %393 = vmatprep.subr.bf16.mxu0 0
      %394 = vmatpush1.bf16.xpose.msra.mxu0 0
      %395 = vmatprep.mubr.bf16.mxu0 0
      %396 = vmatmul.mubr.bf16.gmra.mrb[0].mxu0 %v358
      %v397 = vpop.f32.mrb[0].mxu0
      %v398 = vadd.f32 %v350, %v397
      %v399 = vpop.f32.mrb[0].mxu0
      %v400 = vpop.f32.mrb[0].mxu0
      %v401 = vpop.f32.mrb[0].mxu0
      %402 = vdwg.mxu0
      %v403 = vsel %vm356, %v398, -inf
      %404 = vmax.xlane.f32.xlu0 %v403
      %v405 = vpop.xlane.xlu0 %404
      %v406 = vsub.f32 %v398, %v405
      %v407 = vmul.f32 %v406, 1.442695
      %v408 = vpow.pop %v407
      %v409 = vsel %vm356, %v408, 0.0
      %410 = vadd.xlane.f32.xlu0 %v409
      %v411 = vpop.xlane.xlu0 %410
      %v412 = vrcp.pop %v411
      %v413 = vmul.f32 %v408, %v412
      %v414 = vpack.c.bf16 %v413, %v413
      %415 = vrot.lane.b32.xlu0 %v352, 64
      %v416 = vpop.permute.xlu0 %415
      %v418 = vsel %vm356, %v414, 0
      %vm420 = vcmask 1043456
      %v422 = vsel %vm420, %v416, 0
      %424 = vmatprep.subr.bf16.mxu0 0
      %425 = vmatpush1.bf16.msra.mxu0 %v422
      %426 = vmatprep.subr.bf16.mxu0 0
      %427 = vmatpush1.bf16.msra.mxu0 0
      %428 = vmatprep.subr.bf16.mxu0 0
      %429 = vmatpush1.bf16.msra.mxu0 0
      %430 = vmatprep.subr.bf16.mxu0 0
      %431 = vmatpush1.bf16.msra.mxu0 0
      %432 = vmatprep.subr.bf16.mxu0 0
      %433 = vmatpush1.bf16.msra.mxu0 0
      %434 = vmatprep.subr.bf16.mxu0 0
      %435 = vmatpush1.bf16.msra.mxu0 0
      %436 = vmatprep.subr.bf16.mxu0 0
      %437 = vmatpush1.bf16.msra.mxu0 0
      %438 = vmatprep.subr.bf16.mxu0 0
      %439 = vmatpush1.bf16.msra.mxu0 0
      %440 = vmatprep.subr.bf16.mxu0 0
      %441 = vmatpush1.bf16.msra.mxu0 0
      %442 = vmatprep.subr.bf16.mxu0 0
      %443 = vmatpush1.bf16.msra.mxu0 0
      %444 = vmatprep.subr.bf16.mxu0 0
      %445 = vmatpush1.bf16.msra.mxu0 0
      %446 = vmatprep.subr.bf16.mxu0 0
      %447 = vmatpush1.bf16.msra.mxu0 0
      %448 = vmatprep.subr.bf16.mxu0 0
      %449 = vmatpush1.bf16.msra.mxu0 0
      %450 = vmatprep.subr.bf16.mxu0 0
      %451 = vmatpush1.bf16.msra.mxu0 0
      %452 = vmatprep.subr.bf16.mxu0 0
      %453 = vmatpush1.bf16.msra.mxu0 0
      %454 = vmatprep.subr.bf16.mxu0 0
      %455 = vmatpush1.bf16.msra.mxu0 0
      %456 = vmatprep.mubr.bf16.mxu0 0
      %457 = vmatmul.mubr.bf16.gmra.mrb[0].mxu0 %v418
      %v458 = vpop.f32.mrb[0].mxu0
      %v459 = vadd.f32 0.0, %v458
      %v460 = vpop.f32.mrb[0].mxu0
      %v461 = vpop.f32.mrb[0].mxu0
      %v462 = vpop.f32.mrb[0].mxu0
      %463 = vdwg.mxu0
      %465 = vrot.lane.b32.xlu0 %v351, 120
      %v466 = vpop.permute.xlu0 %465
      %467 = vrot.lane.b32.xlu0 %v352, 88
      %v468 = vpop.permute.xlu0 %467
      %v470 = vsel %vm356, %v466, 0
      %v473 = vsel %vm356, %v468, 0
      %475 = vmatprep.subr.bf16.mxu0 0
      %476 = vmatpush1.bf16.xpose.msra.mxu0 %v473
      %477 = vmatprep.subr.bf16.mxu0 0
      %478 = vmatpush1.bf16.xpose.msra.mxu0 0
      %479 = vmatprep.subr.bf16.mxu0 0
      %480 = vmatpush1.bf16.xpose.msra.mxu0 0
      %481 = vmatprep.subr.bf16.mxu0 0
      %482 = vmatpush1.bf16.xpose.msra.mxu0 0
      %483 = vmatprep.subr.bf16.mxu0 0
      %484 = vmatpush1.bf16.xpose.msra.mxu0 0
      %485 = vmatprep.subr.bf16.mxu0 0
      %486 = vmatpush1.bf16.xpose.msra.mxu0 0
      %487 = vmatprep.subr.bf16.mxu0 0
      %488 = vmatpush1.bf16.xpose.msra.mxu0 0
      %489 = vmatprep.subr.bf16.mxu0 0
      %490 = vmatpush1.bf16.xpose.msra.mxu0 0
      %491 = vmatprep.subr.bf16.mxu0 0
      %492 = vmatpush1.bf16.xpose.msra.mxu0 0
      %493 = vmatprep.subr.bf16.mxu0 0
      %494 = vmatpush1.bf16.xpose.msra.mxu0 0
      %495 = vmatprep.subr.bf16.mxu0 0
      %496 = vmatpush1.bf16.xpose.msra.mxu0 0
      %497 = vmatprep.subr.bf16.mxu0 0
      %498 = vmatpush1.bf16.xpose.msra.mxu0 0
      %499 = vmatprep.subr.bf16.mxu0 0
      %500 = vmatpush1.bf16.xpose.msra.mxu0 0
      %501 = vmatprep.subr.bf16.mxu0 0
      %502 = vmatpush1.bf16.xpose.msra.mxu0 0
      %503 = vmatprep.subr.bf16.mxu0 0
      %504 = vmatpush1.bf16.xpose.msra.mxu0 0
      %505 = vmatprep.subr.bf16.mxu0 0
      %506 = vmatpush1.bf16.xpose.msra.mxu0 0
      %507 = vmatprep.mubr.bf16.mxu0 0
      %508 = vmatmul.mubr.bf16.gmra.mrb[0].mxu0 %v470
      %v509 = vpop.f32.mrb[0].mxu0
      %v510 = vadd.f32 %v350, %v509
      %v511 = vpop.f32.mrb[0].mxu0
      %v512 = vpop.f32.mrb[0].mxu0
      %v513 = vpop.f32.mrb[0].mxu0
      %514 = vdwg.mxu0
      %v515 = vsel %vm356, %v510, -inf
      %516 = vmax.xlane.f32.xlu0 %v515
      %v517 = vpop.xlane.xlu0 %516
      %v518 = vsub.f32 %v510, %v517
      %v519 = vmul.f32 %v518, 1.442695
      %v520 = vpow.pop %v519
      %v521 = vsel %vm356, %v520, 0.0
      %522 = vadd.xlane.f32.xlu0 %v521
      %v523 = vpop.xlane.xlu0 %522
      %v524 = vrcp.pop %v523
      %v525 = vmul.f32 %v520, %v524
      %v526 = vpack.c.bf16 %v525, %v525
      %527 = vrot.lane.b32.xlu0 %v352, 56
      %v528 = vpop.permute.xlu0 %527
      %v530 = vsel %vm356, %v526, 0
      %v533 = vsel %vm420, %v528, 0
      %535 = vmatprep.subr.bf16.mxu0 0
      %536 = vmatpush1.bf16.msra.mxu0 %v533
      %537 = vmatprep.subr.bf16.mxu0 0
      %538 = vmatpush1.bf16.msra.mxu0 0
      %539 = vmatprep.subr.bf16.mxu0 0
      %540 = vmatpush1.bf16.msra.mxu0 0
      %541 = vmatprep.subr.bf16.mxu0 0
      %542 = vmatpush1.bf16.msra.mxu0 0
      %543 = vmatprep.subr.bf16.mxu0 0
      %544 = vmatpush1.bf16.msra.mxu0 0
      %545 = vmatprep.subr.bf16.mxu0 0
      %546 = vmatpush1.bf16.msra.mxu0 0
      %547 = vmatprep.subr.bf16.mxu0 0
      %548 = vmatpush1.bf16.msra.mxu0 0
      %549 = vmatprep.subr.bf16.mxu0 0
      %550 = vmatpush1.bf16.msra.mxu0 0
      %551 = vmatprep.subr.bf16.mxu0 0
      %552 = vmatpush1.bf16.msra.mxu0 0
      %553 = vmatprep.subr.bf16.mxu0 0
      %554 = vmatpush1.bf16.msra.mxu0 0
      %555 = vmatprep.subr.bf16.mxu0 0
      %556 = vmatpush1.bf16.msra.mxu0 0
      %557 = vmatprep.subr.bf16.mxu0 0
      %558 = vmatpush1.bf16.msra.mxu0 0
      %559 = vmatprep.subr.bf16.mxu0 0
      %560 = vmatpush1.bf16.msra.mxu0 0
      %561 = vmatprep.subr.bf16.mxu0 0
      %562 = vmatpush1.bf16.msra.mxu0 0
      %563 = vmatprep.subr.bf16.mxu0 0
      %564 = vmatpush1.bf16.msra.mxu0 0
      %565 = vmatprep.subr.bf16.mxu0 0
      %566 = vmatpush1.bf16.msra.mxu0 0
      %567 = vmatprep.mubr.bf16.mxu0 0
      %568 = vmatmul.mubr.bf16.gmra.mrb[0].mxu0 %v530
      %v569 = vpop.f32.mrb[0].mxu0
      %v570 = vadd.f32 0.0, %v569
      %v571 = vpop.f32.mrb[0].mxu0
      %v572 = vpop.f32.mrb[0].mxu0
      %v573 = vpop.f32.mrb[0].mxu0
      %574 = vdwg.mxu0
      %575 = vrot.lane.b32.xlu0 %v351, 112
      %v576 = vpop.permute.xlu0 %575
      %577 = vrot.lane.b32.xlu0 %v352, 80
      %v578 = vpop.permute.xlu0 %577
      %v580 = vsel %vm356, %v576, 0
      %v583 = vsel %vm356, %v578, 0
      %585 = vmatprep.subr.bf16.mxu0 0
      %586 = vmatpush1.bf16.xpose.msra.mxu0 %v583
      %587 = vmatprep.subr.bf16.mxu0 0
      %588 = vmatpush1.bf16.xpose.msra.mxu0 0
      %589 = vmatprep.subr.bf16.mxu0 0
      %590 = vmatpush1.bf16.xpose.msra.mxu0 0
      %591 = vmatprep.subr.bf16.mxu0 0
      %592 = vmatpush1.bf16.xpose.msra.mxu0 0
      %593 = vmatprep.subr.bf16.mxu0 0
      %594 = vmatpush1.bf16.xpose.msra.mxu0 0
      %595 = vmatprep.subr.bf16.mxu0 0
      %596 = vmatpush1.bf16.xpose.msra.mxu0 0
      %597 = vmatprep.subr.bf16.mxu0 0
      %598 = vmatpush1.bf16.xpose.msra.mxu0 0
      %599 = vmatprep.subr.bf16.mxu0 0
      %600 = vmatpush1.bf16.xpose.msra.mxu0 0
      %601 = vmatprep.subr.bf16.mxu0 0
      %602 = vmatpush1.bf16.xpose.msra.mxu0 0
      %603 = vmatprep.subr.bf16.mxu0 0
      %604 = vmatpush1.bf16.xpose.msra.mxu0 0
      %605 = vmatprep.subr.bf16.mxu0 0
      %606 = vmatpush1.bf16.xpose.msra.mxu0 0
      %607 = vmatprep.subr.bf16.mxu0 0
      %608 = vmatpush1.bf16.xpose.msra.mxu0 0
      %609 = vmatprep.subr.bf16.mxu0 0
      %610 = vmatpush1.bf16.xpose.msra.mxu0 0
      %611 = vmatprep.subr.bf16.mxu0 0
      %612 = vmatpush1.bf16.xpose.msra.mxu0 0
      %613 = vmatprep.subr.bf16.mxu0 0
      %614 = vmatpush1.bf16.xpose.msra.mxu0 0
      %615 = vmatprep.subr.bf16.mxu0 0
      %616 = vmatpush1.bf16.xpose.msra.mxu0 0
      %617 = vmatprep.mubr.bf16.mxu0 0
      %618 = vmatmul.mubr.bf16.gmra.mrb[0].mxu0 %v580
      %v619 = vpop.f32.mrb[0].mxu0
      %v620 = vadd.f32 %v350, %v619
      %v621 = vpop.f32.mrb[0].mxu0
      %v622 = vpop.f32.mrb[0].mxu0
      %v623 = vpop.f32.mrb[0].mxu0
      %624 = vdwg.mxu0
      %v625 = vsel %vm356, %v620, -inf
      %626 = vmax.xlane.f32.xlu0 %v625
      %v627 = vpop.xlane.xlu0 %626
      %v628 = vsub.f32 %v620, %v627
      %v629 = vmul.f32 %v628, 1.442695
      %v630 = vpow.pop %v629
      %v631 = vsel %vm356, %v630, 0.0
      %632 = vadd.xlane.f32.xlu0 %v631
      %v633 = vpop.xlane.xlu0 %632
      %v634 = vrcp.pop %v633
      %v635 = vmul.f32 %v630, %v634
      %v636 = vpack.c.bf16 %v635, %v635
      %637 = vrot.lane.b32.xlu0 %v352, 48
      %v638 = vpop.permute.xlu0 %637
      %v640 = vsel %vm356, %v636, 0
      %v643 = vsel %vm420, %v638, 0
      %645 = vmatprep.subr.bf16.mxu0 0
      %646 = vmatpush1.bf16.msra.mxu0 %v643
      %647 = vmatprep.subr.bf16.mxu0 0
      %648 = vmatpush1.bf16.msra.mxu0 0
      %649 = vmatprep.subr.bf16.mxu0 0
      %650 = vmatpush1.bf16.msra.mxu0 0
      %651 = vmatprep.subr.bf16.mxu0 0
      %652 = vmatpush1.bf16.msra.mxu0 0
      %653 = vmatprep.subr.bf16.mxu0 0
      %654 = vmatpush1.bf16.msra.mxu0 0
      %655 = vmatprep.subr.bf16.mxu0 0
      %656 = vmatpush1.bf16.msra.mxu0 0
      %657 = vmatprep.subr.bf16.mxu0 0
      %658 = vmatpush1.bf16.msra.mxu0 0
      %659 = vmatprep.subr.bf16.mxu0 0
      %660 = vmatpush1.bf16.msra.mxu0 0
      %661 = vmatprep.subr.bf16.mxu0 0
      %662 = vmatpush1.bf16.msra.mxu0 0
      %663 = vmatprep.subr.bf16.mxu0 0
      %664 = vmatpush1.bf16.msra.mxu0 0
      %665 = vmatprep.subr.bf16.mxu0 0
      %666 = vmatpush1.bf16.msra.mxu0 0
      %667 = vmatprep.subr.bf16.mxu0 0
      %668 = vmatpush1.bf16.msra.mxu0 0
      %669 = vmatprep.subr.bf16.mxu0 0
      %670 = vmatpush1.bf16.msra.mxu0 0
      %671 = vmatprep.subr.bf16.mxu0 0
      %672 = vmatpush1.bf16.msra.mxu0 0
      %673 = vmatprep.subr.bf16.mxu0 0
      %674 = vmatpush1.bf16.msra.mxu0 0
      %675 = vmatprep.subr.bf16.mxu0 0
      %676 = vmatpush1.bf16.msra.mxu0 0
      %677 = vmatprep.mubr.bf16.mxu0 0
      %678 = vmatmul.mubr.bf16.gmra.mrb[0].mxu0 %v640
      %v679 = vpop.f32.mrb[0].mxu0
      %v680 = vadd.f32 0.0, %v679
      %v681 = vpop.f32.mrb[0].mxu0
      %v682 = vpop.f32.mrb[0].mxu0
      %v683 = vpop.f32.mrb[0].mxu0
      %684 = vdwg.mxu0
      %685 = vrot.lane.b32.xlu0 %v351, 104
      %v686 = vpop.permute.xlu0 %685
      %687 = vrot.lane.b32.xlu0 %v352, 72
      %v688 = vpop.permute.xlu0 %687
      %v690 = vsel %vm356, %v686, 0
      %v693 = vsel %vm356, %v688, 0
      %695 = vmatprep.subr.bf16.mxu0 0
      %696 = vmatpush1.bf16.xpose.msra.mxu0 %v693
      %697 = vmatprep.subr.bf16.mxu0 0
      %698 = vmatpush1.bf16.xpose.msra.mxu0 0
      %699 = vmatprep.subr.bf16.mxu0 0
      %700 = vmatpush1.bf16.xpose.msra.mxu0 0
      %701 = vmatprep.subr.bf16.mxu0 0
      %702 = vmatpush1.bf16.xpose.msra.mxu0 0
      %703 = vmatprep.subr.bf16.mxu0 0
      %704 = vmatpush1.bf16.xpose.msra.mxu0 0
      %705 = vmatprep.subr.bf16.mxu0 0
      %706 = vmatpush1.bf16.xpose.msra.mxu0 0
      %707 = vmatprep.subr.bf16.mxu0 0
      %708 = vmatpush1.bf16.xpose.msra.mxu0 0
      %709 = vmatprep.subr.bf16.mxu0 0
      %710 = vmatpush1.bf16.xpose.msra.mxu0 0
      %711 = vmatprep.subr.bf16.mxu0 0
      %712 = vmatpush1.bf16.xpose.msra.mxu0 0
      %713 = vmatprep.subr.bf16.mxu0 0
      %714 = vmatpush1.bf16.xpose.msra.mxu0 0
      %715 = vmatprep.subr.bf16.mxu0 0
      %716 = vmatpush1.bf16.xpose.msra.mxu0 0
      %717 = vmatprep.subr.bf16.mxu0 0
      %718 = vmatpush1.bf16.xpose.msra.mxu0 0
      %719 = vmatprep.subr.bf16.mxu0 0
      %720 = vmatpush1.bf16.xpose.msra.mxu0 0
      %721 = vmatprep.subr.bf16.mxu0 0
      %722 = vmatpush1.bf16.xpose.msra.mxu0 0
      %723 = vmatprep.subr.bf16.mxu0 0
      %724 = vmatpush1.bf16.xpose.msra.mxu0 0
      %725 = vmatprep.subr.bf16.mxu0 0
      %726 = vmatpush1.bf16.xpose.msra.mxu0 0
      %727 = vmatprep.mubr.bf16.mxu0 0
      %728 = vmatmul.mubr.bf16.gmra.mrb[0].mxu0 %v690
      %v729 = vpop.f32.mrb[0].mxu0
      %v730 = vadd.f32 %v350, %v729
      %v731 = vpop.f32.mrb[0].mxu0
      %v732 = vpop.f32.mrb[0].mxu0
      %v733 = vpop.f32.mrb[0].mxu0
      %734 = vdwg.mxu0
      %v735 = vsel %vm356, %v730, -inf
      %736 = vmax.xlane.f32.xlu0 %v735
      %v737 = vpop.xlane.xlu0 %736
      %v738 = vsub.f32 %v730, %v737
      %v739 = vmul.f32 %v738, 1.442695
      %v740 = vpow.pop %v739
      %v741 = vsel %vm356, %v740, 0.0
      %742 = vadd.xlane.f32.xlu0 %v741
      %v743 = vpop.xlane.xlu0 %742
      %v744 = vrcp.pop %v743
      %v745 = vmul.f32 %v740, %v744
      %v746 = vpack.c.bf16 %v745, %v745
      %747 = vrot.lane.b32.xlu0 %v352, 40
      %v748 = vpop.permute.xlu0 %747
      %v750 = vsel %vm356, %v746, 0
      %v753 = vsel %vm420, %v748, 0
      %755 = vmatprep.subr.bf16.mxu0 0
      %756 = vmatpush1.bf16.msra.mxu0 %v753
      %757 = vmatprep.subr.bf16.mxu0 0
      %758 = vmatpush1.bf16.msra.mxu0 0
      %759 = vmatprep.subr.bf16.mxu0 0
      %760 = vmatpush1.bf16.msra.mxu0 0
      %761 = vmatprep.subr.bf16.mxu0 0
      %762 = vmatpush1.bf16.msra.mxu0 0
      %763 = vmatprep.subr.bf16.mxu0 0
      %764 = vmatpush1.bf16.msra.mxu0 0
      %765 = vmatprep.subr.bf16.mxu0 0
      %766 = vmatpush1.bf16.msra.mxu0 0
      %767 = vmatprep.subr.bf16.mxu0 0
      %768 = vmatpush1.bf16.msra.mxu0 0
      %769 = vmatprep.subr.bf16.mxu0 0
      %770 = vmatpush1.bf16.msra.mxu0 0
      %771 = vmatprep.subr.bf16.mxu0 0
      %772 = vmatpush1.bf16.msra.mxu0 0
      %773 = vmatprep.subr.bf16.mxu0 0
      %774 = vmatpush1.bf16.msra.mxu0 0
      %775 = vmatprep.subr.bf16.mxu0 0
      %776 = vmatpush1.bf16.msra.mxu0 0
      %777 = vmatprep.subr.bf16.mxu0 0
      %778 = vmatpush1.bf16.msra.mxu0 0
      %779 = vmatprep.subr.bf16.mxu0 0
      %780 = vmatpush1.bf16.msra.mxu0 0
      %781 = vmatprep.subr.bf16.mxu0 0
      %782 = vmatpush1.bf16.msra.mxu0 0
      %783 = vmatprep.subr.bf16.mxu0 0
      %784 = vmatpush1.bf16.msra.mxu0 0
      %785 = vmatprep.subr.bf16.mxu0 0
      %786 = vmatpush1.bf16.msra.mxu0 0
      %787 = vmatprep.mubr.bf16.mxu0 0
      %788 = vmatmul.mubr.bf16.gmra.mrb[0].mxu0 %v750
      %v789 = vpop.f32.mrb[0].mxu0
      %v790 = vadd.f32 0.0, %v789
      %v791 = vpop.f32.mrb[0].mxu0
      %v792 = vpop.f32.mrb[0].mxu0
      %v793 = vpop.f32.mrb[0].mxu0
      %794 = vdwg.mxu0
      %796 = vrot.lane.b32.xlu0 %v570, 8
      %v797 = vpop.permute.xlu0 %796
      %800 = vrot.lane.b32.xlu0 %v680, 16
      %v801 = vpop.permute.xlu0 %800
      %804 = vrot.lane.b32.xlu0 %v790, 24
      %v805 = vpop.permute.xlu0 %804
      %v807 = vsel %vm356, %v459, %v797
      %vm808 = vcmask 130048
      %v809 = vsel %vm808, %v807, %v801
      %vm810 = vcmask 195584
      %v811 = vsel %vm810, %v809, %v805
      %v812 = vpack.c.bf16 %v811, %v811
      %v813 = vld [vmem:[%s3] sm:$0xf]
      %v814 = vld [vmem:[%s3 + $0x4] sm:$0xf]
      %v815 = vld [vmem:[%s3 + $0x8] sm:$0xf]
      %v816 = vld [vmem:[%s3 + $0xc] sm:$0xf]
      %v817 = vld [vmem:[%s4] sm:$0x1]
      %v819 = vlaneseq
      %v820 = vshrl.u32 %v819, 7
      %v821 = vsub.s32 0, %v820
      %v822 = vrot.slane %v817, %v821
      %v828 = vunpack.c.l.b16 %v813
      %v829 = vunpack.c.l.b16 %v814
      %v830 = vunpack.c.l.b16 %v815
      %v831 = vunpack.c.l.b16 %v816
      %v832 = vpack.c.b16 %v829, %v828
      %v833 = vpack.c.b16 %v831, %v830
      %v837 = vsel %vm300, %v812, 0
      %839 = vmatprep.subr.bf16.mxu0 0
      %840 = vmatpush1.bf16.msra.mxu0 %v832
      %841 = vmatprep.subr.bf16.mxu0 0
      %842 = vmatpush1.bf16.msra.mxu0 %v833
      %843 = vmatprep.subr.bf16.mxu0 0
      %844 = vmatpush1.bf16.msra.mxu0 0
      %845 = vmatprep.subr.bf16.mxu0 0
      %846 = vmatpush1.bf16.msra.mxu0 0
      %847 = vmatprep.subr.bf16.mxu0 0
      %848 = vmatpush1.bf16.msra.mxu0 0
      %849 = vmatprep.subr.bf16.mxu0 0
      %850 = vmatpush1.bf16.msra.mxu0 0
      %851 = vmatprep.subr.bf16.mxu0 0
      %852 = vmatpush1.bf16.msra.mxu0 0
      %853 = vmatprep.subr.bf16.mxu0 0
      %854 = vmatpush1.bf16.msra.mxu0 0
      %855 = vmatprep.subr.bf16.mxu0 0
      %856 = vmatpush1.bf16.msra.mxu0 0
      %857 = vmatprep.subr.bf16.mxu0 0
      %858 = vmatpush1.bf16.msra.mxu0 0
      %859 = vmatprep.subr.bf16.mxu0 0
      %860 = vmatpush1.bf16.msra.mxu0 0
      %861 = vmatprep.subr.bf16.mxu0 0
      %862 = vmatpush1.bf16.msra.mxu0 0
      %863 = vmatprep.subr.bf16.mxu0 0
      %864 = vmatpush1.bf16.msra.mxu0 0
      %865 = vmatprep.subr.bf16.mxu0 0
      %866 = vmatpush1.bf16.msra.mxu0 0
      %867 = vmatprep.subr.bf16.mxu0 0
      %868 = vmatpush1.bf16.msra.mxu0 0
      %869 = vmatprep.subr.bf16.mxu0 0
      %870 = vmatpush1.bf16.msra.mxu0 0
      %871 = vmatprep.mubr.bf16.mxu0 0
      %872 = vmatmul.mubr.bf16.gmra.mrb[0].mxu0 %v837
      %v873 = vpop.f32.mrb[0].mxu0
      %v874 = vadd.f32 %v822, %v873
      %v875 = vpop.f32.mrb[0].mxu0
      %v876 = vpop.f32.mrb[0].mxu0
      %v877 = vpop.f32.mrb[0].mxu0
      %878 = vdwg.mxu0
      %v879 = vadd.f32 %v874, %v275
      %v880 = vsel %vm300, %v879, 0.0
      %881 = vadd.xlane.f32.xlu0 %v880
      %v882 = vpop.xlane.xlu0 %881
      %v883 = vrcp.pop 32.0
      %v884 = vmul.f32 %v882, %v883
      %v885 = vsub.f32 %v879, %v884
      %v886 = vmul.f32 %v885, %v885
      %v887 = vsel %vm300, %v886, 0.0
      %888 = vadd.xlane.f32.xlu0 %v887
      %v889 = vpop.xlane.xlu0 %888
      %v890 = vmul.f32 %v889, %v883
      %v891 = vadd.f32 %v890, 1e-05
      %v892 = vrsqrt.pop %v891
      %v893 = vmul.f32 %v885, %v892
      %v894 = vld [vmem:[%s5] sm:$0x1]
      %v896 = vlaneseq
      %v897 = vshrl.u32 %v896, 7
      %v898 = vsub.s32 0, %v897
      %v899 = vrot.slane %v894, %v898
      %v901 = vmul.f32 %v893, %v899
      %v902 = vld [vmem:[%s6] sm:$0x1]
      %v904 = vlaneseq
      %v905 = vshrl.u32 %v904, 7
      %v906 = vsub.s32 0, %v905
      %v907 = vrot.slane %v902, %v906
      %v909 = vadd.f32 %v901, %v907
      %910 = vst.msk [vmem:[%s273] sm:$0xff] %vm300, %v909
      %p911 = scmp.lt.s32.totalorder %s18, 1
      %s912 = scalar_select %p911, %s18, 1
      %s913 = smul.addr %s912, 8
      %s914 = scalar_lea.vmem %s7, %s913
      // Predicated region
      $region49: #{transformer_forward.15} parent=47 // pred_check
        %p915 = pneg %p188
      $region50: #{transformer_forward.15} parent=47 // pred_check_branch
        %917 = sbr.rel (%p915) target = $region52
      $region51: #{transformer_forward.15} parent=47 // pred_region
        _
      $region52: #{transformer_forward.15} parent=47 // pred_fallthru
        _
    $region48: #{transformer_forward.15} parent=5 // pred_fallthru
      _
    %p918 = scmp.le.s32.totalorder 2, %s13
    // Predicated region
    $region53: #{transformer_forward.15} parent=5 // pred_check
      %p919 = pneg %p918
    $region54: #{transformer_forward.15} parent=5 // pred_check_branch
      %921 = sbr.rel (%p919) target = $region56
    $region55: #{transformer_forward.15} parent=5 // pred_region
      %s922 = ssub.s32 %s13, 2
      // Predicated region
      $region57: #{transformer_forward.15} parent=55 // pred_check
        %p923 = pneg %p194
      $region58: #{transformer_forward.15} parent=55 // pred_check_branch
        %925 = sbr.rel (%p923) target = $region60
      $region59: #{transformer_forward.15} parent=55 // pred_region
        %p926 = scmp.lt.s32.totalorder %s19, 1
        %s927 = scalar_select %p926, %s19, 1
        %s928 = smul.addr %s927, 8
        %s929 = scalar_lea.vmem %s7, %s928
      $region60: #{transformer_forward.15} parent=55 // pred_fallthru
        _
    $region56: #{transformer_forward.15} parent=5 // pred_fallthru
      _
  $region6: #{transformer_forward.15} parent=0 // loop_footer
    %s17 = sadd.s32 1, %s13
  $region7: #{transformer_forward.15} parent=0 // loop_footer_branch
    %12 = sbr.rel target = $region3
  $region8: #{transformer_forward.15} parent=0 // loop_exit
    _

// kernel: transformer_forward.21
$region0: #{transformer_forward.21}
  #allocation0 [shape = 'u32[]', space=smem, size = 0x4, offset = 0x4, fixed_abs, tag = 'smem constant byte address 0x4 - core index']
  #allocation1 [shape = 'u32[144,128]{1,0:T(1,128)}', space=vmem, size = 0x12000, scoped, tag = 'internal scratch']
  #allocation2 [shape = 'f32[16,128]{1,0:T(8,128)}', space=vmem, size = 0x2000, scoped, tag = 'scratch operand']
  %s0 = inlined_call_operand.vmem [shape: f32[16,32], index: 0, kind: input, shape index: {}]
  %s1 = inlined_call_operand.vmem [shape: bf16[32,128], index: 1, kind: input, shape index: {}]
  %s2 = inlined_call_operand.vmem [shape: f32[1,128], index: 2, kind: input, shape index: {}]
  %s3 = inlined_call_operand.vmem [shape: f32[16,128], index: 3, kind: output, shape index: {}]
  %s4 = sld [smem:[#allocation0]]
  $region30: #{transformer_forward.21} parent=0
    _
  %s6 = ssub.s32 1, %s4
  %s7 = scalar_select 0, %s6, %s4
  // Predicated region
  $region2: #{transformer_forward.21} parent=0 // pred_check
    _
  $region3: #{transformer_forward.21} parent=0 // pred_check_branch
    %9 = sbr.rel (0) target = $region5
  $region4: #{transformer_forward.21} parent=0 // pred_region
    _
  $region5: #{transformer_forward.21} parent=0 // pred_fallthru
    _
  // Predicated region
  $region6: #{transformer_forward.21} parent=0 // pred_check
    _
  $region7: #{transformer_forward.21} parent=0 // pred_check_branch
    %11 = sbr.rel (0) target = $region9
  $region8: #{transformer_forward.21} parent=0 // pred_region
    _
  $region9: #{transformer_forward.21} parent=0 // pred_fallthru
    _
  // Predicated region
  $region10: #{transformer_forward.21} parent=0 // pred_check
    _
  $region11: #{transformer_forward.21} parent=0 // pred_check_branch
    %13 = sbr.rel (0) target = $region13
  $region12: #{transformer_forward.21} parent=0 // pred_region
    _
  $region13: #{transformer_forward.21} parent=0 // pred_fallthru
    _
  %p15 = scmp.eq.s32.totalorder 0, 0
  // Predicated region
  $region14: #{transformer_forward.21} parent=0 // pred_check
    %p16 = pneg %p15
  $region15: #{transformer_forward.21} parent=0 // pred_check_branch
    %18 = sbr.rel (%p16) target = $region17
  $region16: #{transformer_forward.21} parent=0 // pred_region
    %19 = vst [vmem:[#allocation2] sm:$0xff] 0.0
    %20 = vst [vmem:[#allocation2 + $0x8] sm:$0xff] 0.0
  $region17: #{transformer_forward.21} parent=0 // pred_fallthru
    _
  %v21 = vld [vmem:[#allocation2] sm:$0xff]
  %v22 = vld [vmem:[#allocation2 + $0x8] sm:$0xff]
  %v23 = vld [vmem:[%s0] sm:$0xff]
  %v24 = vld [vmem:[%s0 + $0x8] sm:$0xff]
  %v25 = vpack.c.bf16 %v24, %v23
  %v26 = vld [vmem:[%s1] sm:$0xf]
  %v27 = vld [vmem:[%s1 + $0x4] sm:$0xf]
  %v28 = vld [vmem:[%s1 + $0x8] sm:$0xf]
  %v29 = vld [vmem:[%s1 + $0xc] sm:$0xf]
  %v34 = vunpack.c.l.b16 %v26
  %v35 = vunpack.c.l.b16 %v27
  %v36 = vunpack.c.l.b16 %v28
  %v37 = vunpack.c.l.b16 %v29
  %v38 = vpack.c.b16 %v35, %v34
  %v39 = vpack.c.b16 %v37, %v36
  %vm42 = vcmask 261120
  %v44 = vsel %vm42, %v25, 0
  %46 = vmatprep.subr.bf16.mxu0 0
  %47 = vmatpush1.bf16.msra.mxu0 %v38
  %48 = vmatprep.subr.bf16.mxu0 0
  %49 = vmatpush1.bf16.msra.mxu0 %v39
  %50 = vmatprep.subr.bf16.mxu0 0
  %51 = vmatpush1.bf16.msra.mxu0 0
  %52 = vmatprep.subr.bf16.mxu0 0
  %53 = vmatpush1.bf16.msra.mxu0 0
  %54 = vmatprep.subr.bf16.mxu0 0
  %55 = vmatpush1.bf16.msra.mxu0 0
  %56 = vmatprep.subr.bf16.mxu0 0
  %57 = vmatpush1.bf16.msra.mxu0 0
  %58 = vmatprep.subr.bf16.mxu0 0
  %59 = vmatpush1.bf16.msra.mxu0 0
  %60 = vmatprep.subr.bf16.mxu0 0
  %61 = vmatpush1.bf16.msra.mxu0 0
  %62 = vmatprep.subr.bf16.mxu0 0
  %63 = vmatpush1.bf16.msra.mxu0 0
  %64 = vmatprep.subr.bf16.mxu0 0
  %65 = vmatpush1.bf16.msra.mxu0 0
  %66 = vmatprep.subr.bf16.mxu0 0
  %67 = vmatpush1.bf16.msra.mxu0 0
  %68 = vmatprep.subr.bf16.mxu0 0
  %69 = vmatpush1.bf16.msra.mxu0 0
  %70 = vmatprep.subr.bf16.mxu0 0
  %71 = vmatpush1.bf16.msra.mxu0 0
  %72 = vmatprep.subr.bf16.mxu0 0
  %73 = vmatpush1.bf16.msra.mxu0 0
  %74 = vmatprep.subr.bf16.mxu0 0
  %75 = vmatpush1.bf16.msra.mxu0 0
  %76 = vmatprep.subr.bf16.mxu0 0
  %77 = vmatpush1.bf16.msra.mxu0 0
  %78 = vmatprep.mubr.bf16.mxu0 0
  %79 = vmatmul.mubr.bf16.gmra.mrb[0].mxu0 %v44
  %v80 = vpop.f32.mrb[0].mxu0
  %v81 = vadd.f32 0.0, %v80
  %v82 = vpop.f32.mrb[0].mxu0
  %v83 = vpop.f32.mrb[0].mxu0
  %v84 = vadd.f32 0.0, %v83
  %v85 = vpop.f32.mrb[0].mxu0
  %86 = vdwg.mxu0
  %v87 = vadd.f32 %v21, %v81
  %v88 = vadd.f32 %v22, %v84
  %89 = vst [vmem:[#allocation2] sm:$0xff] %v87
  %90 = vst [vmem:[#allocation2 + $0x8] sm:$0xff] %v88
  // Predicated region
  $region18: #{transformer_forward.21} parent=0 // pred_check
    %p91 = pneg %p15
  $region19: #{transformer_forward.21} parent=0 // pred_check_branch
    %93 = sbr.rel (%p91) target = $region21
  $region20: #{transformer_forward.21} parent=0 // pred_region
    %v94 = vld [vmem:[#allocation2] sm:$0xff]
    %v95 = vld [vmem:[#allocation2 + $0x8] sm:$0xff]
    %v96 = vld [vmem:[%s2] sm:$0x1]
    %v98 = vlaneseq
    %v99 = vshrl.u32 %v98, 7
    %v100 = vsub.s32 0, %v99
    %v101 = vrot.slane %v96, %v100
    %v103 = vadd.f32 %v94, %v101
    %v104 = vadd.f32 %v95, %v101
    %105 = vmax.xlane.f32.xlu0 %v103
    %v106 = vpop.xlane.xlu0 %105
    %107 = vmax.xlane.f32.xlu0 %v104
    %v108 = vpop.xlane.xlu0 %107
    %v109 = vsub.f32 %v103, %v106
    %v110 = vsub.f32 %v104, %v108
    %v111 = vmul.f32 %v109, 1.442695
    %v112 = vpow.pop %v111
    %v113 = vmul.f32 %v110, 1.442695
    %v114 = vpow.pop %v113
    %115 = vadd.xlane.f32.xlu0 %v112
    %v116 = vpop.xlane.xlu0 %115
    %117 = vadd.xlane.f32.xlu0 %v114
    %v118 = vpop.xlane.xlu0 %117
    %v119 = vlog2.pop %v116
    %v120 = vmul.f32 %v119, 0.6931472
    %v121 = vlog2.pop %v118
    %v122 = vmul.f32 %v121, 0.6931472
    %v123 = vsub.f32 %v109, %v120
    %v124 = vsub.f32 %v110, %v122
    %125 = vst [vmem:[%s3] sm:$0xff] %v123
    %126 = vst [vmem:[%s3 + $0x8] sm:$0xff] %v124
  $region21: #{transformer_forward.21} parent=0 // pred_fallthru
    _
  // Predicated region
  $region22: #{transformer_forward.21} parent=0 // pred_check
    _
  $region23: #{transformer_forward.21} parent=0 // pred_check_branch
    %128 = sbr.rel (0) target = $region25
  $region24: #{transformer_forward.21} parent=0 // pred_region
    _
  $region25: #{transformer_forward.21} parent=0 // pred_fallthru
    _
  // Predicated region
  $region26: #{transformer_forward.21} parent=0 // pred_check
    _
  $region27: #{transformer_forward.21} parent=0 // pred_check_branch
    %130 = sbr.rel (0) target = $region29
  $region28: #{transformer_forward.21} parent=0 // pred_region
    _
  $region29: #{transformer_forward.21} parent=0 // pred_fallthru
    _

</llo_original>
